<compile_context>
chip_gen: v7x
topology: tpu7x:2x2x1
jax: 0.10.0
libtpu: 0.0.40
codegen_flags: <defaults>
</compile_context>

<pallas_src>
import math
from functools import partial

import jax
import jax.numpy as jnp
from jax.experimental import pallas as pl
from jax.experimental.pallas import tpu as pltpu

LN_EPS = 1e-5


def _layer_norm(x, w, b):
    mu = jnp.mean(x, axis=-1, keepdims=True)
    var = jnp.mean(jnp.square(x - mu), axis=-1, keepdims=True)
    return (x - mu) * jax.lax.rsqrt(var + LN_EPS) * w + b


def _kan_kernel(num_heads, head_dim, scaling,
                x_ref, ln1w_ref, ln1b_ref,
                wqkv_ref, bqkv_ref, wo_ref, bo_ref,
                ln2w_ref, ln2b_ref, w1_ref, b1_ref, w2_ref, b2_ref,
                thr_ref, out_ref):
    f32, bf16 = jnp.float32, jnp.bfloat16
    Bt, L, D = x_ref.shape
    xb = x_ref[...].reshape(Bt * L, D)                             # (Bt*L, D) f32

    # ---- LayerNorm 1 ----
    xn1 = _layer_norm(xb, ln1w_ref[...], ln1b_ref[...])

    # ---- Fused QKV projection (nm signal already folded into biases) ----
    qkv = jnp.dot(xn1.astype(bf16), wqkv_ref[...],
                  preferred_element_type=f32) + bqkv_ref[...]       # (Bt*L, 3D)
    q, k, v = qkv[:, :D], qkv[:, D:2 * D], qkv[:, 2 * D:]

    def split_heads(t):                                             # -> (Bt*H, L, hd)
        t = t.reshape(Bt, L, num_heads, head_dim)
        return jnp.transpose(t, (0, 2, 1, 3)).reshape(Bt * num_heads, L, head_dim)

    qh = split_heads(q).astype(bf16)
    kh = split_heads(k).astype(bf16)
    vh = split_heads(v).astype(bf16)

    # ---- Batched per-head attention ----
    s = jnp.einsum('gld,gmd->glm', qh, kh,
                   preferred_element_type=f32) * scaling            # (Bt*H, L, L)
    s = s - jnp.max(s, axis=-1, keepdims=True)
    p = jnp.exp(s)
    p = p * pl.reciprocal(jnp.sum(p, axis=-1, keepdims=True), approx=True)
    o = jnp.einsum('glm,gmd->gld', p.astype(bf16), vh,
                   preferred_element_type=f32)                      # (Bt*H, L, hd)
    o = jnp.transpose(o.reshape(Bt, num_heads, L, head_dim),
                      (0, 2, 1, 3)).reshape(Bt * L, D)
    attn = jnp.dot(o.astype(bf16), wo_ref[...],
                   preferred_element_type=f32) + bo_ref[...]
    # attention / projection dropout: identity in eval mode

    x2 = xb + attn

    # ---- LayerNorm 2 + MLP ----
    xn2 = _layer_norm(x2, ln2w_ref[...], ln2b_ref[...])
    h1 = jnp.dot(xn2.astype(bf16), w1_ref[...],
                 preferred_element_type=f32) + b1_ref[...]
    h1 = jax.nn.gelu(h1, approximate=True)                          # tanh-GELU
    mlp = jnp.dot(h1.astype(bf16), w2_ref[...],
                  preferred_element_type=f32) + b2_ref[...]
    x3 = x2 + mlp

    # ---- Ternary activation (forward of TernaryActivationFunction) ----
    thr = thr_ref[0]
    y = jnp.where(x3 > thr, 1.0, jnp.where(x3 < -thr, -1.0, 0.0))
    out_ref[...] = y.reshape(Bt, L, D).astype(out_ref.dtype)


def _pick_batch_tile(B, L, D, hidden, num_heads, budget_bytes=8 * 1024 * 1024):
    # Rough f32 working set per batch element (activations + per-head scores).
    per_b = 4 * L * (8 * D + 2 * hidden) + 4 * num_heads * L * L * 2
    bt = max(1, min(B, budget_bytes // max(per_b, 1)))
    while B % bt:            # keep it a divisor of B (no remainder handling needed)
        bt -= 1
    return bt


def kan_layer_forward(x, params, *, num_heads):
    B, L, D = x.shape
    head_dim = D // num_heads
    scaling = head_dim ** -0.5
    hidden = params["w1"].shape[1]
    f32, bf16 = jnp.float32, jnp.bfloat16

    # Glue: neuromod projection (3 -> D on a single vector) and threshold scalar.
    nm_t = jnp.stack([params["dopamine"], params["noradrenaline"],
                      params["serotonin"]], axis=-1)                 # (1, 3)
    nm_signal = nm_t @ params["w_nm"] + params["b_nm"]               # (1, D)

    # Fold nm_signal into effective Q/K biases and fuse Q|K|V into one matmul.
    bq_eff = nm_signal @ params["wq"] + params["bq"]
    bk_eff = nm_signal @ params["wk"] + params["bk"]
    wqkv = jnp.concatenate([params["wq"], params["wk"], params["wv"]],
                           axis=1).astype(bf16)                      # (D, 3D)
    bqkv = jnp.concatenate([bq_eff, bk_eff, params["bv"]], axis=1).astype(f32)

    wo, bo = params["wo"].astype(bf16), params["bo"].astype(f32)
    w1, b1 = params["w1"].astype(bf16), params["b1"].astype(f32)
    w2, b2 = params["w2"].astype(bf16), params["b2"].astype(f32)

    thr = (params["base_theta"]
           + params["k_dop"] * params["dopamine"]
           - params["k_nor"] * params["noradrenaline"]
           + params["k_sero"] * params["serotonin"]).astype(f32)     # (1,)
    # TODO(synk): update_neuromod_state mutates module buffers (stateful side
    # effect); it does not affect the returned tensor and is omitted here.

    bt = _pick_batch_tile(B, L, D, hidden, num_heads)
    grid = (B // bt,)

    def full(arr):
        return pl.BlockSpec(arr.shape, lambda b, _n=arr.ndim: (0,) * _n)

    weight_bytes = sum(int(a.size) * a.dtype.itemsize
                       for a in (wqkv, bqkv, wo, bo, w1, b1, w2, b2,
                                 params["ln1_w"], params["ln1_b"],
                                 params["ln2_w"], params["ln2_b"]))
    flops = int(2 * B * L * D * (3 * D + D + 2 * hidden)
                + 4 * B * num_heads * L * L * head_dim)
    transcendentals = int(B * num_heads * L * (L + 1) + B * L * (hidden + 2))
    bytes_accessed = int(2 * B * L * D * 4 + weight_bytes)

    # VMEM budget: resident (double-buffered) bf16 weights + per-step activations.
    # 32 MiB matches the v6e/v7x default and raises v5e's 16 MiB default.
    # NOTE(v7x): weight BlockSpecs could additionally use pipeline_mode=pl.Buffered(1)
    # to skip double-buffering of invariant blocks if VMEM gets tight at large D.
    act_bytes = 4 * bt * L * (8 * D + 2 * hidden) + 8 * bt * num_heads * L * L
    vmem_limit = int(min(64 * 1024 * 1024,
                         max(32 * 1024 * 1024, 2 * weight_bytes + 3 * act_bytes)))

    out = pl.pallas_call(
        partial(_kan_kernel, num_heads, head_dim, scaling),
        out_shape=jax.ShapeDtypeStruct((B, L, D), f32),
        grid=grid,
        in_specs=[
            pl.BlockSpec((bt, L, D), lambda b: (b, 0, 0)),           # x batch tile
            full(params["ln1_w"]), full(params["ln1_b"]),
            full(wqkv), full(bqkv), full(wo), full(bo),
            full(params["ln2_w"]), full(params["ln2_b"]),
            full(w1), full(b1), full(w2), full(b2),
            pl.BlockSpec(memory_space=pltpu.MemorySpace.SMEM),       # threshold scalar
        ],
        out_specs=pl.BlockSpec((bt, L, D), lambda b: (b, 0, 0)),
        compiler_params=pltpu.CompilerParams(
            dimension_semantics=("parallel",),     # batch is independent -> megacore
            vmem_limit_bytes=vmem_limit),
        cost_estimate=pl.CostEstimate(flops=flops,
                                      transcendentals=transcendentals,
                                      bytes_accessed=bytes_accessed),
    )(x, params["ln1_w"], params["ln1_b"],
      wqkv, bqkv, wo, bo,
      params["ln2_w"], params["ln2_b"],
      w1, b1, w2, b2,
      thr)
    return out


def init_params(key, dim, num_heads=8, mlp_ratio=4,
                base_theta=0.5, k_dop=0.2, k_nor=0.15, k_sero=0.1):
    hidden = int(dim * mlp_ratio)
    keys = iter(jax.random.split(key, 16))

    def linear(fan_in, fan_out):
        bound = 1.0 / math.sqrt(fan_in)
        w = jax.random.uniform(next(keys), (fan_in, fan_out),
                               minval=-bound, maxval=bound, dtype=jnp.float32)
        b = jax.random.uniform(next(keys), (1, fan_out),
                               minval=-bound, maxval=bound, dtype=jnp.float32)
        return w, b

    wq, bq = linear(dim, dim)
    wk, bk = linear(dim, dim)
    wv, bv = linear(dim, dim)
    wo, bo = linear(dim, dim)
    w_nm, b_nm = linear(3, dim)
    w1, b1 = linear(dim, hidden)
    w2, b2 = linear(hidden, dim)

    return dict(
        ln1_w=jnp.ones((1, dim), jnp.float32), ln1_b=jnp.zeros((1, dim), jnp.float32),
        ln2_w=jnp.ones((1, dim), jnp.float32), ln2_b=jnp.zeros((1, dim), jnp.float32),
        wq=wq, bq=bq, wk=wk, bk=bk, wv=wv, bv=bv, wo=wo, bo=bo,
        w_nm=w_nm, b_nm=b_nm, w1=w1, b1=b1, w2=w2, b2=b2,
        dopamine=jnp.zeros((1,), jnp.float32),
        noradrenaline=jnp.zeros((1,), jnp.float32),
        serotonin=jnp.zeros((1,), jnp.float32),
        base_theta=base_theta, k_dop=k_dop, k_nor=k_nor, k_sero=k_sero,
    )


def kan_layer_reference(x, params, *, num_heads):
    """Pure f32 reference matching the PyTorch module's forward (eval mode)."""
    B, L, D = x.shape
    hd = D // num_heads

    def ln(v, w, b):
        mu = v.mean(-1, keepdims=True)
        var = ((v - mu) ** 2).mean(-1, keepdims=True)
        return (v - mu) / jnp.sqrt(var + LN_EPS) * w + b

    nm_t = jnp.stack([params["dopamine"], params["noradrenaline"],
                      params["serotonin"]], -1)
    nm_sig = nm_t @ params["w_nm"] + params["b_nm"]                  # (1, D)
    xn1 = ln(x, params["ln1_w"], params["ln1_b"])
    xqk = xn1 + nm_sig
    q = xqk @ params["wq"] + params["bq"]
    k = xqk @ params["wk"] + params["bk"]
    v = xn1 @ params["wv"] + params["bv"]
    q = q.reshape(B, L, num_heads, hd).transpose(0, 2, 1, 3)
    k = k.reshape(B, L, num_heads, hd).transpose(0, 2, 1, 3)
    v = v.reshape(B, L, num_heads, hd).transpose(0, 2, 1, 3)
    attn = jax.nn.softmax(jnp.einsum("bhid,bhjd->bhij", q, k) * hd ** -0.5, -1)
    o = jnp.einsum("bhij,bhjd->bhid", attn, v).transpose(0, 2, 1, 3).reshape(B, L, D)
    o = o @ params["wo"] + params["bo"]
    x2 = x + o
    xn2 = ln(x2, params["ln2_w"], params["ln2_b"])
    h = xn2 @ params["w1"] + params["b1"]
    h = 0.5 * h * (1.0 + jax.lax.erf(h * (1.0 / math.sqrt(2.0))))    # exact GELU
    x3 = x2 + (h @ params["w2"] + params["b2"])
    thr = (params["base_theta"] + params["k_dop"] * params["dopamine"]
           - params["k_nor"] * params["noradrenaline"]
           + params["k_sero"] * params["serotonin"])
    return jnp.where(x3 > thr, 1.0, jnp.where(x3 < -thr, -1.0, 0.0))


if __name__ == "__main__":
    # Lane-dense small demo: D multiple of 128, L multiple of 8.
    B, L, D, H = 2, 8, 128, 8
    key = jax.random.PRNGKey(0)
    pkey, xkey = jax.random.split(key)
    params = init_params(pkey, D, num_heads=H)
    x = jax.random.normal(xkey, (B, L, D), dtype=jnp.float32)

    out = jax.block_until_ready(kan_layer_forward(x, params, num_heads=H))
    ref = jax.block_until_ready(kan_layer_reference(x, params, num_heads=H))

    assert out.shape == (B, L, D) and out.dtype == jnp.float32
    assert bool(jnp.all((out == 0.0) | (jnp.abs(out) == 1.0))), "non-ternary output"
    # bf16 MXU inputs, approx reciprocal and tanh-GELU may flip elements landing
    # within ~1e-2 of the ternary threshold; allow a small mismatch fraction.
    mismatch = float(jnp.mean((out != ref).astype(jnp.float32)))
    assert mismatch < 0.02, f"ternary output mismatch fraction = {mismatch}"
    print("KERNEL_OK")
</pallas_src>

<mosaic_0001>
module attributes {stable_mosaic.version = 11 : i64} {
  func.func @_kan_kernel(%arg0: i32, %arg1: memref<2x8x128xf32, #tpu.memory_space<vmem>>, %arg2: memref<1x128xf32, #tpu.memory_space<vmem>>, %arg3: memref<1x128xf32, #tpu.memory_space<vmem>>, %arg4: memref<128x384xbf16, #tpu.memory_space<vmem>>, %arg5: memref<1x384xf32, #tpu.memory_space<vmem>>, %arg6: memref<128x128xbf16, #tpu.memory_space<vmem>>, %arg7: memref<1x128xf32, #tpu.memory_space<vmem>>, %arg8: memref<1x128xf32, #tpu.memory_space<vmem>>, %arg9: memref<1x128xf32, #tpu.memory_space<vmem>>, %arg10: memref<128x512xbf16, #tpu.memory_space<vmem>>, %arg11: memref<1x512xf32, #tpu.memory_space<vmem>>, %arg12: memref<512x128xbf16, #tpu.memory_space<vmem>>, %arg13: memref<1x128xf32, #tpu.memory_space<vmem>>, %arg14: memref<1xf32, #tpu.memory_space<smem>>, %arg15: memref<2x8x128xf32, #tpu.memory_space<vmem>>) attributes {dimension_semantics = [#tpu.dimension_semantics<parallel>], iteration_bounds = array<i64: 1>, scalar_prefetch = 0 : i64, scratch_operands = 0 : i64, tpu.core_type = #tpu.core_type<tc>, window_params = [{transform_indices = @transform_0, window_bounds = array<i64: 2, 8, 128>}, {pipeline_mode = #tpu.pipeline_mode<synchronous>, transform_indices = @transform_1, window_bounds = array<i64: 1, 128>}, {pipeline_mode = #tpu.pipeline_mode<synchronous>, transform_indices = @transform_2, window_bounds = array<i64: 1, 128>}, {pipeline_mode = #tpu.pipeline_mode<synchronous>, transform_indices = @transform_3, window_bounds = array<i64: 128, 384>}, {pipeline_mode = #tpu.pipeline_mode<synchronous>, transform_indices = @transform_4, window_bounds = array<i64: 1, 384>}, {pipeline_mode = #tpu.pipeline_mode<synchronous>, transform_indices = @transform_5, window_bounds = array<i64: 128, 128>}, {pipeline_mode = #tpu.pipeline_mode<synchronous>, transform_indices = @transform_6, window_bounds = array<i64: 1, 128>}, {pipeline_mode = #tpu.pipeline_mode<synchronous>, transform_indices = @transform_7, window_bounds = array<i64: 1, 128>}, {pipeline_mode = #tpu.pipeline_mode<synchronous>, transform_indices = @transform_8, window_bounds = array<i64: 1, 128>}, {pipeline_mode = #tpu.pipeline_mode<synchronous>, transform_indices = @transform_9, window_bounds = array<i64: 128, 512>}, {pipeline_mode = #tpu.pipeline_mode<synchronous>, transform_indices = @transform_10, window_bounds = array<i64: 1, 512>}, {pipeline_mode = #tpu.pipeline_mode<synchronous>, transform_indices = @transform_11, window_bounds = array<i64: 512, 128>}, {pipeline_mode = #tpu.pipeline_mode<synchronous>, transform_indices = @transform_12, window_bounds = array<i64: 1, 128>}, {transform_indices = @transform_13, window_bounds = array<i64: 1>}, {transform_indices = @transform_14, window_bounds = array<i64: 2, 8, 128>}]} {
    %c0 = arith.constant 0 : index
    %c0_0 = arith.constant 0 : index
    %c0_1 = arith.constant 0 : index
    %0 = vector.load %arg1[%c0, %c0_0, %c0_1] : memref<2x8x128xf32, #tpu.memory_space<vmem>>, vector<2x8x128xf32>
    %1 = vector.shape_cast %0 : vector<2x8x128xf32> to vector<16x128xf32>
    %c0_2 = arith.constant 0 : index
    %c0_3 = arith.constant 0 : index
    %2 = vector.load %arg2[%c0_2, %c0_3] : memref<1x128xf32, #tpu.memory_space<vmem>>, vector<1x128xf32>
    %c0_4 = arith.constant 0 : index
    %c0_5 = arith.constant 0 : index
    %3 = vector.load %arg3[%c0_4, %c0_5] : memref<1x128xf32, #tpu.memory_space<vmem>>, vector<1x128xf32>
    %cst = arith.constant dense<0.000000e+00> : vector<16xf32>
    %4 = vector.multi_reduction <add>, %1, %cst [1] : vector<16x128xf32> to vector<16xf32>
    %5 = vector.shape_cast %4 : vector<16xf32> to vector<16x1xf32>
    %cst_6 = arith.constant 1.280000e+02 : f32
    %6 = vector.broadcast %cst_6 : f32 to vector<16x1xf32>
    %7 = arith.divf %5, %6 : vector<16x1xf32>
    %8 = vector.broadcast %7 : vector<16x1xf32> to vector<16x128xf32>
    %9 = arith.subf %1, %8 : vector<16x128xf32>
    %10 = arith.mulf %9, %9 : vector<16x128xf32>
    %cst_7 = arith.constant dense<0.000000e+00> : vector<16xf32>
    %11 = vector.multi_reduction <add>, %10, %cst_7 [1] : vector<16x128xf32> to vector<16xf32>
    %12 = vector.shape_cast %11 : vector<16xf32> to vector<16x1xf32>
    %cst_8 = arith.constant 1.280000e+02 : f32
    %13 = vector.broadcast %cst_8 : f32 to vector<16x1xf32>
    %14 = arith.divf %12, %13 : vector<16x1xf32>
    %15 = vector.broadcast %7 : vector<16x1xf32> to vector<16x128xf32>
    %16 = arith.subf %1, %15 : vector<16x128xf32>
    %cst_9 = arith.constant 9.99999974E-6 : f32
    %17 = vector.broadcast %cst_9 : f32 to vector<16x1xf32>
    %18 = arith.addf %14, %17 : vector<16x1xf32>
    %19 = math.rsqrt %18 : vector<16x1xf32>
    %20 = vector.broadcast %19 : vector<16x1xf32> to vector<16x128xf32>
    %21 = arith.mulf %16, %20 : vector<16x128xf32>
    %22 = vector.broadcast %2 : vector<1x128xf32> to vector<16x128xf32>
    %23 = arith.mulf %21, %22 : vector<16x128xf32>
    %24 = vector.broadcast %3 : vector<1x128xf32> to vector<16x128xf32>
    %25 = arith.addf %23, %24 : vector<16x128xf32>
    %26 = arith.truncf %25 : vector<16x128xf32> to vector<16x128xbf16>
    %c0_10 = arith.constant 0 : index
    %c0_11 = arith.constant 0 : index
    %27 = vector.load %arg4[%c0_10, %c0_11] : memref<128x384xbf16, #tpu.memory_space<vmem>>, vector<128x384xbf16>
    %cst_12 = arith.constant dense<0.000000e+00> : vector<16x384xf32>
    %28 = tpu.matmul %26, %27, %cst_12 {dimension_numbers = #tpu.dot_dimension_numbers<[1], [0], [0], [1], [0, 0, 1, 1], [], []>} : vector<16x128xbf16>, vector<128x384xbf16>, vector<16x384xf32> -> vector<16x384xf32>
    %c0_13 = arith.constant 0 : index
    %c0_14 = arith.constant 0 : index
    %29 = vector.load %arg5[%c0_13, %c0_14] : memref<1x384xf32, #tpu.memory_space<vmem>>, vector<1x384xf32>
    %30 = vector.broadcast %29 : vector<1x384xf32> to vector<16x384xf32>
    %31 = arith.addf %28, %30 : vector<16x384xf32>
    %32 = vector.extract_strided_slice %31 {offsets = [0, 0], sizes = [16, 128], strides = [1, 1]} : vector<16x384xf32> to vector<16x128xf32>
    %33 = vector.extract_strided_slice %31 {offsets = [0, 128], sizes = [16, 128], strides = [1, 1]} : vector<16x384xf32> to vector<16x128xf32>
    %34 = vector.extract_strided_slice %31 {offsets = [0, 256], sizes = [16, 128], strides = [1, 1]} : vector<16x384xf32> to vector<16x128xf32>
    %35 = vector.shape_cast %32 : vector<16x128xf32> to vector<2x8x8x16xf32>
    %36 = tpu.transpose %35, [0, 2, 1, 3] : vector<2x8x8x16xf32> -> vector<2x8x8x16xf32>
    %37 = vector.shape_cast %36 : vector<2x8x8x16xf32> to vector<16x8x16xf32>
    %38 = arith.truncf %37 : vector<16x8x16xf32> to vector<16x8x16xbf16>
    %39 = vector.shape_cast %33 : vector<16x128xf32> to vector<2x8x8x16xf32>
    %40 = tpu.transpose %39, [0, 2, 1, 3] : vector<2x8x8x16xf32> -> vector<2x8x8x16xf32>
    %41 = vector.shape_cast %40 : vector<2x8x8x16xf32> to vector<16x8x16xf32>
    %42 = arith.truncf %41 : vector<16x8x16xf32> to vector<16x8x16xbf16>
    %43 = vector.shape_cast %34 : vector<16x128xf32> to vector<2x8x8x16xf32>
    %44 = tpu.transpose %43, [0, 2, 1, 3] : vector<2x8x8x16xf32> -> vector<2x8x8x16xf32>
    %45 = vector.shape_cast %44 : vector<2x8x8x16xf32> to vector<16x8x16xf32>
    %46 = arith.truncf %45 : vector<16x8x16xf32> to vector<16x8x16xbf16>
    "tpu.trace_start"() <{level = 10 : i32, message = "gld,gmd->glm"}> : () -> ()
    %cst_15 = arith.constant dense<0.000000e+00> : vector<16x8x8xf32>
    %47 = tpu.matmul %38, %42, %cst_15 {dimension_numbers = #tpu.dot_dimension_numbers<[2], [2], [1], [1], [0, 0, 0, 1, 1, 1], [0], [0]>} : vector<16x8x16xbf16>, vector<16x8x16xbf16>, vector<16x8x8xf32> -> vector<16x8x8xf32>
    "tpu.trace_stop"() : () -> ()
    %cst_16 = arith.constant 2.500000e-01 : f32
    %48 = vector.broadcast %cst_16 : f32 to vector<16x8x8xf32>
    %49 = arith.mulf %47, %48 : vector<16x8x8xf32>
    %cst_17 = arith.constant dense<0xFF800000> : vector<16x8xf32>
    %50 = vector.multi_reduction <maximumf>, %49, %cst_17 [2] : vector<16x8x8xf32> to vector<16x8xf32>
    %51 = vector.shape_cast %50 : vector<16x8xf32> to vector<16x8x1xf32>
    %52 = vector.broadcast %51 : vector<16x8x1xf32> to vector<16x8x8xf32>
    %53 = arith.subf %49, %52 : vector<16x8x8xf32>
    %54 = math.exp %53 : vector<16x8x8xf32>
    %cst_18 = arith.constant dense<0.000000e+00> : vector<16x8xf32>
    %55 = vector.multi_reduction <add>, %54, %cst_18 [2] : vector<16x8x8xf32> to vector<16x8xf32>
    %56 = vector.shape_cast %55 : vector<16x8xf32> to vector<16x8x1xf32>
    %57 = tpu.reciprocal %56 {approx = true} : vector<16x8x1xf32> -> vector<16x8x1xf32>
    %58 = vector.broadcast %57 : vector<16x8x1xf32> to vector<16x8x8xf32>
    %59 = arith.mulf %54, %58 : vector<16x8x8xf32>
    %60 = arith.truncf %59 : vector<16x8x8xf32> to vector<16x8x8xbf16>
    "tpu.trace_start"() <{level = 10 : i32, message = "glm,gmd->gld"}> : () -> ()
    %cst_19 = arith.constant dense<0.000000e+00> : vector<16x8x16xf32>
    %61 = tpu.matmul %60, %46, %cst_19 {dimension_numbers = #tpu.dot_dimension_numbers<[2], [1], [1], [2], [0, 0, 0, 1, 1, 2], [0], [0]>} : vector<16x8x8xbf16>, vector<16x8x16xbf16>, vector<16x8x16xf32> -> vector<16x8x16xf32>
    "tpu.trace_stop"() : () -> ()
    %62 = vector.shape_cast %61 : vector<16x8x16xf32> to vector<2x8x8x16xf32>
    %63 = tpu.transpose %62, [0, 2, 1, 3] : vector<2x8x8x16xf32> -> vector<2x8x8x16xf32>
    %64 = vector.shape_cast %63 : vector<2x8x8x16xf32> to vector<16x128xf32>
    %65 = arith.truncf %64 : vector<16x128xf32> to vector<16x128xbf16>
    %c0_20 = arith.constant 0 : index
    %c0_21 = arith.constant 0 : index
    %66 = vector.load %arg6[%c0_20, %c0_21] : memref<128x128xbf16, #tpu.memory_space<vmem>>, vector<128x128xbf16>
    %cst_22 = arith.constant dense<0.000000e+00> : vector<16x128xf32>
    %67 = tpu.matmul %65, %66, %cst_22 {dimension_numbers = #tpu.dot_dimension_numbers<[1], [0], [0], [1], [0, 0, 1, 1], [], []>} : vector<16x128xbf16>, vector<128x128xbf16>, vector<16x128xf32> -> vector<16x128xf32>
    %c0_23 = arith.constant 0 : index
    %c0_24 = arith.constant 0 : index
    %68 = vector.load %arg7[%c0_23, %c0_24] : memref<1x128xf32, #tpu.memory_space<vmem>>, vector<1x128xf32>
    %69 = vector.broadcast %68 : vector<1x128xf32> to vector<16x128xf32>
    %70 = arith.addf %67, %69 : vector<16x128xf32>
    %71 = arith.addf %1, %70 : vector<16x128xf32>
    %c0_25 = arith.constant 0 : index
    %c0_26 = arith.constant 0 : index
    %72 = vector.load %arg8[%c0_25, %c0_26] : memref<1x128xf32, #tpu.memory_space<vmem>>, vector<1x128xf32>
    %c0_27 = arith.constant 0 : index
    %c0_28 = arith.constant 0 : index
    %73 = vector.load %arg9[%c0_27, %c0_28] : memref<1x128xf32, #tpu.memory_space<vmem>>, vector<1x128xf32>
    %cst_29 = arith.constant dense<0.000000e+00> : vector<16xf32>
    %74 = vector.multi_reduction <add>, %71, %cst_29 [1] : vector<16x128xf32> to vector<16xf32>
    %75 = vector.shape_cast %74 : vector<16xf32> to vector<16x1xf32>
    %cst_30 = arith.constant 1.280000e+02 : f32
    %76 = vector.broadcast %cst_30 : f32 to vector<16x1xf32>
    %77 = arith.divf %75, %76 : vector<16x1xf32>
    %78 = vector.broadcast %77 : vector<16x1xf32> to vector<16x128xf32>
    %79 = arith.subf %71, %78 : vector<16x128xf32>
    %80 = arith.mulf %79, %79 : vector<16x128xf32>
    %cst_31 = arith.constant dense<0.000000e+00> : vector<16xf32>
    %81 = vector.multi_reduction <add>, %80, %cst_31 [1] : vector<16x128xf32> to vector<16xf32>
    %82 = vector.shape_cast %81 : vector<16xf32> to vector<16x1xf32>
    %cst_32 = arith.constant 1.280000e+02 : f32
    %83 = vector.broadcast %cst_32 : f32 to vector<16x1xf32>
    %84 = arith.divf %82, %83 : vector<16x1xf32>
    %85 = vector.broadcast %77 : vector<16x1xf32> to vector<16x128xf32>
    %86 = arith.subf %71, %85 : vector<16x128xf32>
    %cst_33 = arith.constant 9.99999974E-6 : f32
    %87 = vector.broadcast %cst_33 : f32 to vector<16x1xf32>
    %88 = arith.addf %84, %87 : vector<16x1xf32>
    %89 = math.rsqrt %88 : vector<16x1xf32>
    %90 = vector.broadcast %89 : vector<16x1xf32> to vector<16x128xf32>
    %91 = arith.mulf %86, %90 : vector<16x128xf32>
    %92 = vector.broadcast %72 : vector<1x128xf32> to vector<16x128xf32>
    %93 = arith.mulf %91, %92 : vector<16x128xf32>
    %94 = vector.broadcast %73 : vector<1x128xf32> to vector<16x128xf32>
    %95 = arith.addf %93, %94 : vector<16x128xf32>
    %96 = arith.truncf %95 : vector<16x128xf32> to vector<16x128xbf16>
    %c0_34 = arith.constant 0 : index
    %c0_35 = arith.constant 0 : index
    %97 = vector.load %arg10[%c0_34, %c0_35] : memref<128x512xbf16, #tpu.memory_space<vmem>>, vector<128x512xbf16>
    %cst_36 = arith.constant dense<0.000000e+00> : vector<16x512xf32>
    %98 = tpu.matmul %96, %97, %cst_36 {dimension_numbers = #tpu.dot_dimension_numbers<[1], [0], [0], [1], [0, 0, 1, 1], [], []>} : vector<16x128xbf16>, vector<128x512xbf16>, vector<16x512xf32> -> vector<16x512xf32>
    %c0_37 = arith.constant 0 : index
    %c0_38 = arith.constant 0 : index
    %99 = vector.load %arg11[%c0_37, %c0_38] : memref<1x512xf32, #tpu.memory_space<vmem>>, vector<1x512xf32>
    %100 = vector.broadcast %99 : vector<1x512xf32> to vector<16x512xf32>
    %101 = arith.addf %98, %100 : vector<16x512xf32>
    %102 = arith.mulf %101, %101 : vector<16x512xf32>
    %103 = arith.mulf %101, %102 : vector<16x512xf32>
    %cst_39 = arith.constant 4.471500e-02 : f32
    %104 = vector.broadcast %cst_39 : f32 to vector<16x512xf32>
    %105 = arith.mulf %104, %103 : vector<16x512xf32>
    %106 = arith.addf %101, %105 : vector<16x512xf32>
    %cst_40 = arith.constant 0.797884583 : f32
    %107 = vector.broadcast %cst_40 : f32 to vector<16x512xf32>
    %108 = arith.mulf %107, %106 : vector<16x512xf32>
    %109 = math.tanh %108 : vector<16x512xf32>
    %cst_41 = arith.constant 1.000000e+00 : f32
    %110 = vector.broadcast %cst_41 : f32 to vector<16x512xf32>
    %111 = arith.addf %110, %109 : vector<16x512xf32>
    %cst_42 = arith.constant 5.000000e-01 : f32
    %112 = vector.broadcast %cst_42 : f32 to vector<16x512xf32>
    %113 = arith.mulf %112, %111 : vector<16x512xf32>
    %114 = arith.mulf %101, %113 : vector<16x512xf32>
    %115 = arith.truncf %114 : vector<16x512xf32> to vector<16x512xbf16>
    %c0_43 = arith.constant 0 : index
    %c0_44 = arith.constant 0 : index
    %116 = vector.load %arg12[%c0_43, %c0_44] : memref<512x128xbf16, #tpu.memory_space<vmem>>, vector<512x128xbf16>
    %cst_45 = arith.constant dense<0.000000e+00> : vector<16x128xf32>
    %117 = tpu.matmul %115, %116, %cst_45 {dimension_numbers = #tpu.dot_dimension_numbers<[1], [0], [0], [1], [0, 0, 1, 1], [], []>} : vector<16x512xbf16>, vector<512x128xbf16>, vector<16x128xf32> -> vector<16x128xf32>
    %c0_46 = arith.constant 0 : index
    %c0_47 = arith.constant 0 : index
    %118 = vector.load %arg13[%c0_46, %c0_47] : memref<1x128xf32, #tpu.memory_space<vmem>>, vector<1x128xf32>
    %119 = vector.broadcast %118 : vector<1x128xf32> to vector<16x128xf32>
    %120 = arith.addf %117, %119 : vector<16x128xf32>
    %121 = arith.addf %71, %120 : vector<16x128xf32>
    %c0_48 = arith.constant 0 : index
    %122 = memref.load %arg14[%c0_48] : memref<1xf32, #tpu.memory_space<smem>>
    %123 = vector.broadcast %122 : f32 to vector<16x128xf32>
    %124 = arith.cmpf ogt, %121, %123 : vector<16x128xf32>
    %cst_49 = arith.constant 0.000000e+00 : f32
    %125 = arith.subf %cst_49, %122 : f32
    %126 = vector.broadcast %125 : f32 to vector<16x128xf32>
    %127 = arith.cmpf olt, %121, %126 : vector<16x128xf32>
    %cst_50 = arith.constant -1.000000e+00 : f32
    %cst_51 = arith.constant 0.000000e+00 : f32
    %128 = vector.broadcast %cst_50 : f32 to vector<16x128xf32>
    %129 = vector.broadcast %cst_51 : f32 to vector<16x128xf32>
    %130 = arith.select %127, %128, %129 : vector<16x128xi1>, vector<16x128xf32>
    %cst_52 = arith.constant 1.000000e+00 : f32
    %131 = vector.broadcast %cst_52 : f32 to vector<16x128xf32>
    %132 = arith.select %124, %131, %130 : vector<16x128xi1>, vector<16x128xf32>
    %133 = vector.shape_cast %132 : vector<16x128xf32> to vector<2x8x128xf32>
    %c0_53 = arith.constant 0 : index
    %c0_54 = arith.constant 0 : index
    %c0_55 = arith.constant 0 : index
    %134 = vector.load %arg15[%c0_53, %c0_54, %c0_55] : memref<2x8x128xf32, #tpu.memory_space<vmem>>, vector<2x8x128xf32>
    tpu.vector_store %arg15[%c0_53, %c0_54, %c0_55], %133 {strides = array<i32>} : memref<2x8x128xf32, #tpu.memory_space<vmem>>, vector<2x8x128xf32>,
    return
  }
  func.func @transform_0(%arg0: i32) -> (i32, i32, i32) {
    %c0_i32 = arith.constant 0 : i32
    %c0_i32_0 = arith.constant 0 : i32
    %c0_i32_1 = arith.constant 0 : i32
    return %arg0, %c0_i32, %c0_i32_0 : i32, i32, i32
  }
  func.func @transform_1(%arg0: i32) -> (i32, i32) {
    %c0_i32 = arith.constant 0 : i32
    %c0_i32_0 = arith.constant 0 : i32
    %c0_i32_1 = arith.constant 0 : i32
    return %c0_i32, %c0_i32_0 : i32, i32
  }
  func.func @transform_2(%arg0: i32) -> (i32, i32) {
    %c0_i32 = arith.constant 0 : i32
    %c0_i32_0 = arith.constant 0 : i32
    %c0_i32_1 = arith.constant 0 : i32
    return %c0_i32, %c0_i32_0 : i32, i32
  }
  func.func @transform_3(%arg0: i32) -> (i32, i32) {
    %c0_i32 = arith.constant 0 : i32
    %c0_i32_0 = arith.constant 0 : i32
    %c0_i32_1 = arith.constant 0 : i32
    return %c0_i32, %c0_i32_0 : i32, i32
  }
  func.func @transform_4(%arg0: i32) -> (i32, i32) {
    %c0_i32 = arith.constant 0 : i32
    %c0_i32_0 = arith.constant 0 : i32
    %c0_i32_1 = arith.constant 0 : i32
    return %c0_i32, %c0_i32_0 : i32, i32
  }
  func.func @transform_5(%arg0: i32) -> (i32, i32) {
    %c0_i32 = arith.constant 0 : i32
    %c0_i32_0 = arith.constant 0 : i32
    %c0_i32_1 = arith.constant 0 : i32
    return %c0_i32, %c0_i32_0 : i32, i32
  }
  func.func @transform_6(%arg0: i32) -> (i32, i32) {
    %c0_i32 = arith.constant 0 : i32
    %c0_i32_0 = arith.constant 0 : i32
    %c0_i32_1 = arith.constant 0 : i32
    return %c0_i32, %c0_i32_0 : i32, i32
  }
  func.func @transform_7(%arg0: i32) -> (i32, i32) {
    %c0_i32 = arith.constant 0 : i32
    %c0_i32_0 = arith.constant 0 : i32
    %c0_i32_1 = arith.constant 0 : i32
    return %c0_i32, %c0_i32_0 : i32, i32
  }
  func.func @transform_8(%arg0: i32) -> (i32, i32) {
    %c0_i32 = arith.constant 0 : i32
    %c0_i32_0 = arith.constant 0 : i32
    %c0_i32_1 = arith.constant 0 : i32
    return %c0_i32, %c0_i32_0 : i32, i32
  }
  func.func @transform_9(%arg0: i32) -> (i32, i32) {
    %c0_i32 = arith.constant 0 : i32
    %c0_i32_0 = arith.constant 0 : i32
    %c0_i32_1 = arith.constant 0 : i32
    return %c0_i32, %c0_i32_0 : i32, i32
  }
  func.func @transform_10(%arg0: i32) -> (i32, i32) {
    %c0_i32 = arith.constant 0 : i32
    %c0_i32_0 = arith.constant 0 : i32
    %c0_i32_1 = arith.constant 0 : i32
    return %c0_i32, %c0_i32_0 : i32, i32
  }
  func.func @transform_11(%arg0: i32) -> (i32, i32) {
    %c0_i32 = arith.constant 0 : i32
    %c0_i32_0 = arith.constant 0 : i32
    %c0_i32_1 = arith.constant 0 : i32
    return %c0_i32, %c0_i32_0 : i32, i32
  }
  func.func @transform_12(%arg0: i32) -> (i32, i32) {
    %c0_i32 = arith.constant 0 : i32
    %c0_i32_0 = arith.constant 0 : i32
    %c0_i32_1 = arith.constant 0 : i32
    return %c0_i32, %c0_i32_0 : i32, i32
  }
  func.func @transform_13(%arg0: i32) -> i32 {
    %c0_i32 = arith.constant 0 : i32
    %c0_i32_0 = arith.constant 0 : i32
    return %c0_i32 : i32
  }
  func.func @transform_14(%arg0: i32) -> (i32, i32, i32) {
    %c0_i32 = arith.constant 0 : i32
    %c0_i32_0 = arith.constant 0 : i32
    %c0_i32_1 = arith.constant 0 : i32
    return %arg0, %c0_i32, %c0_i32_0 : i32, i32, i32
  }
}

</mosaic_0001>

<llo_original>
// kernel: tpu_custom_call.1
$region0: #{tpu_custom_call.1}
  #allocation0 [shape = 'u32[]', space=smem, size = 0x4, offset = 0x4, fixed_abs, tag = 'smem constant byte address 0x4 - core index']
  #allocation1 [shape = 'u32[144,128]{1,0:T(1,128)}', space=vmem, size = 0x12000, scoped, tag = 'internal scratch']
  #allocation2 [shape = 'f32[1]{0:T(128)S(6)}', space=smem, size = 0x200, scoped, tag = 'scoped memory for tpu_custom_call.1']
  %s0 = inlined_call_operand.hbm [shape: f32[2,8,128], index: 0, kind: input, shape index: {}]
  %s1 = inlined_call_operand.hbm [shape: f32[1,128], index: 1, kind: input, shape index: {}]
  %s2 = inlined_call_operand.vmem [shape: f32[1,128], index: 2, kind: input, shape index: {}]
  %s3 = inlined_call_operand.hbm [shape: bf16[128,384], index: 3, kind: input, shape index: {}]
  %s4 = inlined_call_operand.vmem [shape: f32[1,384], index: 4, kind: input, shape index: {}]
  %s5 = inlined_call_operand.hbm [shape: bf16[128,128], index: 5, kind: input, shape index: {}]
  %s6 = inlined_call_operand.vmem [shape: f32[1,128], index: 6, kind: input, shape index: {}]
  %s7 = inlined_call_operand.vmem [shape: f32[1,128], index: 7, kind: input, shape index: {}]
  %s8 = inlined_call_operand.vmem [shape: f32[1,128], index: 8, kind: input, shape index: {}]
  %s9 = inlined_call_operand.hbm [shape: bf16[128,512], index: 9, kind: input, shape index: {}]
  %s10 = inlined_call_operand.vmem [shape: f32[1,512], index: 10, kind: input, shape index: {}]
  %s11 = inlined_call_operand.hbm [shape: bf16[512,128], index: 11, kind: input, shape index: {}]
  %s12 = inlined_call_operand.vmem [shape: f32[1,128], index: 12, kind: input, shape index: {}]
  %s13 = inlined_call_operand.<no memory space> [shape: f32[1], index: 13, kind: input, shape index: {}]
  %s14 = inlined_call_operand.hbm [shape: f32[2,8,128], index: 14, kind: output, shape index: {}]
  %s15 = sld [smem:[#allocation0]]
  $region90: #{tpu_custom_call.1} parent=0
    _
  %s17 = ssub.s32 1, %s15
  %s18 = scalar_select 0, %s17, %s15
  %19 = sst [smem:[#allocation2]] %s13
  $region1: #{tpu_custom_call.1} parent=0
    #allocation3 [shape = 'u8[8192]{0}', space=vmem, size = 0x2000, scoped, tag = 'input window, operand 0, single buffered']
    #allocation4 [shape = 's32[1]{0}', space=sflag, size = 0x4, scoped, tag = 'scoped memory for tpu_custom_call.1']
    #allocation5 [shape = 's32[1]{0}', space=sflag, size = 0x4, scoped, tag = 'scoped memory for tpu_custom_call.1']
    #allocation6 [shape = 'u8[512]{0}', space=vmem, size = 0x400, scoped, tag = 'input window, operand 1, single buffered']
    #allocation7 [shape = 's32[1]{0}', space=sflag, size = 0x4, scoped, tag = 'scoped memory for tpu_custom_call.1']
    #allocation8 [shape = 'u8[98304]{0}', space=vmem, size = 0x18000, scoped, tag = 'input window, operand 3, single buffered']
    #allocation9 [shape = 'u8[32768]{0}', space=vmem, size = 0x8000, scoped, tag = 'input window, operand 5, single buffered']
    #allocation10 [shape = 's32[1]{0}', space=sflag, size = 0x4, scoped, tag = 'scoped memory for tpu_custom_call.1']
    #allocation11 [shape = 'u8[131072]{0}', space=vmem, size = 0x20000, scoped, tag = 'input window, operand 9, single buffered']
    #allocation12 [shape = 'u8[131072]{0}', space=vmem, size = 0x20000, scoped, tag = 'input window, operand 11, single buffered']
    #allocation13 [shape = 's32[1]{0}', space=sflag, size = 0x4, scoped, tag = 'scoped memory for tpu_custom_call.1']
    #allocation14 [shape = 'u8[8192]{0}', space=vmem, size = 0x2000, scoped, tag = 'output window, operand 0, single buffered']
    %20 = vsyncpa [#allocation4], 0
    %21 = vsyncpa [#allocation7], 0
    %22 = vsyncpa [#allocation10], 0
    %23 = vsyncpa [#allocation13], 0
    %24 = vsyncpa [#allocation5], 0
    // Predicated region
    $region2: #{tpu_custom_call.1} parent=1 // pred_check
      _
    $region3: #{tpu_custom_call.1} parent=1 // pred_check_branch
      %26 = sbr.rel (0) target = $region5
    $region4: #{tpu_custom_call.1} parent=1 // pred_region
      %s28 = ssub.s32 256, 256
      %29 = vsyncadd [#allocation4], %s28
      %s30 = sshll.u32 [#allocation3], 4
      %s31 = int_to_ptr.vmem [resolvable:$true] %s30
      %36 = dma.hbm_to_vmem [thread:$0]  %s0, 256, %s31, [#allocation4], 128, 128, 8
    $region5: #{tpu_custom_call.1} parent=1 // pred_fallthru
      _
    // Predicated region
    $region6: #{tpu_custom_call.1} parent=1 // pred_check
      _
    $region7: #{tpu_custom_call.1} parent=1 // pred_check_branch
      %38 = sbr.rel (0) target = $region9
    $region8: #{tpu_custom_call.1} parent=1 // pred_region
      %s40 = ssub.s32 16, 16
      %41 = vsyncadd [#allocation7], %s40
      %s43 = sshll.u32 [#allocation6], 4
      %s44 = int_to_ptr.vmem [resolvable:$true] %s43
      %46 = dma.hbm_to_vmem [thread:$0]  %s1, 16, %s44, [#allocation7]
    $region9: #{tpu_custom_call.1} parent=1 // pred_fallthru
      _
    // Predicated region
    $region10: #{tpu_custom_call.1} parent=1 // pred_check
      _
    $region11: #{tpu_custom_call.1} parent=1 // pred_check_branch
      %48 = sbr.rel (0) target = $region13
    $region12: #{tpu_custom_call.1} parent=1 // pred_region
      _
    $region13: #{tpu_custom_call.1} parent=1 // pred_fallthru
      _
    // Predicated region
    $region14: #{tpu_custom_call.1} parent=1 // pred_check
      _
    $region15: #{tpu_custom_call.1} parent=1 // pred_check_branch
      %50 = sbr.rel (0) target = $region17
    $region16: #{tpu_custom_call.1} parent=1 // pred_region
      %s52 = ssub.s32 3072, 3072
      %53 = vsyncadd [#allocation7], %s52
      %s54 = sshll.u32 [#allocation8], 4
      %s55 = int_to_ptr.vmem [resolvable:$true] %s54
      %60 = dma.hbm_to_vmem [thread:$0]  %s3, 3072, %s55, [#allocation7], 192, 192, 12
    $region17: #{tpu_custom_call.1} parent=1 // pred_fallthru
      _
    // Predicated region
    $region18: #{tpu_custom_call.1} parent=1 // pred_check
      _
    $region19: #{tpu_custom_call.1} parent=1 // pred_check_branch
      %62 = sbr.rel (0) target = $region21
    $region20: #{tpu_custom_call.1} parent=1 // pred_region
      _
    $region21: #{tpu_custom_call.1} parent=1 // pred_fallthru
      _
    // Predicated region
    $region22: #{tpu_custom_call.1} parent=1 // pred_check
      _
    $region23: #{tpu_custom_call.1} parent=1 // pred_check_branch
      %64 = sbr.rel (0) target = $region25
    $region24: #{tpu_custom_call.1} parent=1 // pred_region
      %s66 = ssub.s32 1024, 1024
      %67 = vsyncadd [#allocation10], %s66
      %s68 = sshll.u32 [#allocation9], 4
      %s69 = int_to_ptr.vmem [resolvable:$true] %s68
      %74 = dma.hbm_to_vmem [thread:$0]  %s5, 1024, %s69, [#allocation10], 64, 64, 4
    $region25: #{tpu_custom_call.1} parent=1 // pred_fallthru
      _
    // Predicated region
    $region26: #{tpu_custom_call.1} parent=1 // pred_check
      _
    $region27: #{tpu_custom_call.1} parent=1 // pred_check_branch
      %76 = sbr.rel (0) target = $region29
    $region28: #{tpu_custom_call.1} parent=1 // pred_region
      _
    $region29: #{tpu_custom_call.1} parent=1 // pred_fallthru
      _
    // Predicated region
    $region30: #{tpu_custom_call.1} parent=1 // pred_check
      _
    $region31: #{tpu_custom_call.1} parent=1 // pred_check_branch
      %78 = sbr.rel (0) target = $region33
    $region32: #{tpu_custom_call.1} parent=1 // pred_region
      _
    $region33: #{tpu_custom_call.1} parent=1 // pred_fallthru
      _
    // Predicated region
    $region34: #{tpu_custom_call.1} parent=1 // pred_check
      _
    $region35: #{tpu_custom_call.1} parent=1 // pred_check_branch
      %80 = sbr.rel (0) target = $region37
    $region36: #{tpu_custom_call.1} parent=1 // pred_region
      _
    $region37: #{tpu_custom_call.1} parent=1 // pred_fallthru
      _
    // Predicated region
    $region38: #{tpu_custom_call.1} parent=1 // pred_check
      _
    $region39: #{tpu_custom_call.1} parent=1 // pred_check_branch
      %82 = sbr.rel (0) target = $region41
    $region40: #{tpu_custom_call.1} parent=1 // pred_region
      %s84 = ssub.s32 4096, 4096
      %85 = vsyncadd [#allocation10], %s84
      %s86 = sshll.u32 [#allocation11], 4
      %s87 = int_to_ptr.vmem [resolvable:$true] %s86
      %92 = dma.hbm_to_vmem [thread:$0]  %s9, 4096, %s87, [#allocation10], 256, 256, 16
    $region41: #{tpu_custom_call.1} parent=1 // pred_fallthru
      _
    // Predicated region
    $region42: #{tpu_custom_call.1} parent=1 // pred_check
      _
    $region43: #{tpu_custom_call.1} parent=1 // pred_check_branch
      %94 = sbr.rel (0) target = $region45
    $region44: #{tpu_custom_call.1} parent=1 // pred_region
      _
    $region45: #{tpu_custom_call.1} parent=1 // pred_fallthru
      _
    // Predicated region
    $region46: #{tpu_custom_call.1} parent=1 // pred_check
      _
    $region47: #{tpu_custom_call.1} parent=1 // pred_check_branch
      %96 = sbr.rel (0) target = $region49
    $region48: #{tpu_custom_call.1} parent=1 // pred_region
      %s98 = ssub.s32 4096, 4096
      %99 = vsyncadd [#allocation13], %s98
      %s100 = sshll.u32 [#allocation12], 4
      %s101 = int_to_ptr.vmem [resolvable:$true] %s100
      %106 = dma.hbm_to_vmem [thread:$0]  %s11, 4096, %s101, [#allocation13], 64, 64, 4
    $region49: #{tpu_custom_call.1} parent=1 // pred_fallthru
      _
    // Predicated region
    $region50: #{tpu_custom_call.1} parent=1 // pred_check
      _
    $region51: #{tpu_custom_call.1} parent=1 // pred_check_branch
      %108 = sbr.rel (0) target = $region53
    $region52: #{tpu_custom_call.1} parent=1 // pred_region
      _
    $region53: #{tpu_custom_call.1} parent=1 // pred_fallthru
      _
    // Predicated region
    $region54: #{tpu_custom_call.1} parent=1 // pred_check
      _
    $region55: #{tpu_custom_call.1} parent=1 // pred_check_branch
      %110 = sbr.rel (0) target = $region57
    $region56: #{tpu_custom_call.1} parent=1 // pred_region
      _
    $region57: #{tpu_custom_call.1} parent=1 // pred_fallthru
      _
    // Predicated region
    $region58: #{tpu_custom_call.1} parent=1 // pred_check
      _
    $region59: #{tpu_custom_call.1} parent=1 // pred_check_branch
      %112 = sbr.rel (0) target = $region61
    $region60: #{tpu_custom_call.1} parent=1 // pred_region
      %113 = dma.done [#allocation4], 256
    $region61: #{tpu_custom_call.1} parent=1 // pred_fallthru
      _
    // Predicated region
    $region62: #{tpu_custom_call.1} parent=1 // pred_check
      _
    $region63: #{tpu_custom_call.1} parent=1 // pred_check_branch
      %115 = sbr.rel (0) target = $region65
    $region64: #{tpu_custom_call.1} parent=1 // pred_region
      %116 = dma.done [#allocation7], 16
    $region65: #{tpu_custom_call.1} parent=1 // pred_fallthru
      _
    // Predicated region
    $region66: #{tpu_custom_call.1} parent=1 // pred_check
      _
    $region67: #{tpu_custom_call.1} parent=1 // pred_check_branch
      %118 = sbr.rel (0) target = $region69
    $region68: #{tpu_custom_call.1} parent=1 // pred_region
      %119 = dma.done [#allocation7], 3072
    $region69: #{tpu_custom_call.1} parent=1 // pred_fallthru
      _
    // Predicated region
    $region70: #{tpu_custom_call.1} parent=1 // pred_check
      _
    $region71: #{tpu_custom_call.1} parent=1 // pred_check_branch
      %121 = sbr.rel (0) target = $region73
    $region72: #{tpu_custom_call.1} parent=1 // pred_region
      %122 = dma.done [#allocation10], 1024
    $region73: #{tpu_custom_call.1} parent=1 // pred_fallthru
      _
    // Predicated region
    $region74: #{tpu_custom_call.1} parent=1 // pred_check
      _
    $region75: #{tpu_custom_call.1} parent=1 // pred_check_branch
      %124 = sbr.rel (0) target = $region77
    $region76: #{tpu_custom_call.1} parent=1 // pred_region
      %125 = dma.done [#allocation10], 4096
    $region77: #{tpu_custom_call.1} parent=1 // pred_fallthru
      _
    // Predicated region
    $region78: #{tpu_custom_call.1} parent=1 // pred_check
      _
    $region79: #{tpu_custom_call.1} parent=1 // pred_check_branch
      %127 = sbr.rel (0) target = $region81
    $region80: #{tpu_custom_call.1} parent=1 // pred_region
      %128 = dma.done [#allocation13], 4096
    $region81: #{tpu_custom_call.1} parent=1 // pred_fallthru
      _
    %v130 = vld [vmem:[#allocation3] sm:$0xff]
    %v131 = vld [vmem:[#allocation3 + $0x8] sm:$0xff]
    %v132 = vld [vmem:[#allocation6] sm:$0x1]
    %v133 = vld [vmem:[%s2] sm:$0x1]
    %134 = vadd.xlane.f32.xlu0 %v130
    %v135 = vpop.xlane.xlu0 %134
    %136 = vadd.xlane.f32.xlu0 %v131
    %v137 = vpop.xlane.xlu0 %136
    %v138 = vrcp.pop 128.0
    %v139 = vmul.f32 %v135, %v138
    %v140 = vmul.f32 %v137, %v138
    %v141 = vsub.f32 %v130, %v139
    %v142 = vsub.f32 %v131, %v140
    %v143 = vmul.f32 %v141, %v141
    %v144 = vmul.f32 %v142, %v142
    %145 = vadd.xlane.f32.xlu0 %v143
    %v146 = vpop.xlane.xlu0 %145
    %147 = vadd.xlane.f32.xlu0 %v144
    %v148 = vpop.xlane.xlu0 %147
    %v149 = vmul.f32 %v146, %v138
    %v150 = vmul.f32 %v148, %v138
    %v151 = vadd.f32 %v149, 1e-05
    %v152 = vadd.f32 %v150, 1e-05
    %v153 = vrsqrt.pop %v151
    %v154 = vrsqrt.pop %v152
    %v155 = vmul.f32 %v141, %v153
    %v156 = vmul.f32 %v142, %v154
    %v158 = vlaneseq
    %v159 = vshrl.u32 %v158, 7
    %v160 = vsub.s32 0, %v159
    %v161 = vrot.slane %v132, %v160
    %v163 = vmul.f32 %v155, %v161
    %v164 = vmul.f32 %v156, %v161
    %v166 = vlaneseq
    %v167 = vshrl.u32 %v166, 7
    %v168 = vsub.s32 0, %v167
    %v169 = vrot.slane %v133, %v168
    %v171 = vadd.f32 %v163, %v169
    %v172 = vadd.f32 %v164, %v169
    %v173 = vpack.c.bf16 %v172, %v171
    %v174 = vld [vmem:[#allocation8] sm:$0xff]
    %v175 = vld [vmem:[#allocation8 + $0x8] sm:$0xf]
    %v176 = vld [vmem:[#allocation8 + $0xc] sm:$0xff]
    %v177 = vld [vmem:[#allocation8 + $0x14] sm:$0xf]
    %v178 = vld [vmem:[#allocation8 + $0x18] sm:$0xff]
    %v179 = vld [vmem:[#allocation8 + $0x20] sm:$0xf]
    %v180 = vld [vmem:[#allocation8 + $0x24] sm:$0xff]
    %v181 = vld [vmem:[#allocation8 + $0x2c] sm:$0xf]
    %v182 = vld [vmem:[#allocation8 + $0x30] sm:$0xff]
    %v183 = vld [vmem:[#allocation8 + $0x38] sm:$0xf]
    %v184 = vld [vmem:[#allocation8 + $0x3c] sm:$0xff]
    %v185 = vld [vmem:[#allocation8 + $0x44] sm:$0xf]
    %v186 = vld [vmem:[#allocation8 + $0x48] sm:$0xff]
    %v187 = vld [vmem:[#allocation8 + $0x50] sm:$0xf]
    %v188 = vld [vmem:[#allocation8 + $0x54] sm:$0xff]
    %v189 = vld [vmem:[#allocation8 + $0x5c] sm:$0xf]
    %v190 = vld [vmem:[#allocation8 + $0x60] sm:$0xff]
    %v191 = vld [vmem:[#allocation8 + $0x68] sm:$0xf]
    %v192 = vld [vmem:[#allocation8 + $0x6c] sm:$0xff]
    %v193 = vld [vmem:[#allocation8 + $0x74] sm:$0xf]
    %v194 = vld [vmem:[#allocation8 + $0x78] sm:$0xff]
    %v195 = vld [vmem:[#allocation8 + $0x80] sm:$0xf]
    %v196 = vld [vmem:[#allocation8 + $0x84] sm:$0xff]
    %v197 = vld [vmem:[#allocation8 + $0x8c] sm:$0xf]
    %v198 = vld [vmem:[#allocation8 + $0x90] sm:$0xff]
    %v199 = vld [vmem:[#allocation8 + $0x98] sm:$0xf]
    %v200 = vld [vmem:[#allocation8 + $0x9c] sm:$0xff]
    %v201 = vld [vmem:[#allocation8 + $0xa4] sm:$0xf]
    %v202 = vld [vmem:[#allocation8 + $0xa8] sm:$0xff]
    %v203 = vld [vmem:[#allocation8 + $0xb0] sm:$0xf]
    %v204 = vld [vmem:[#allocation8 + $0xb4] sm:$0xff]
    %v205 = vld [vmem:[#allocation8 + $0xbc] sm:$0xf]
    %v206 = vld [vmem:[%s4] sm:$0x7]
    %v208 = vlaneseq
    %v209 = vshrl.u32 %v208, 7
    %v210 = vsub.s32 0, %v209
    %v211 = vrot.slane %v206, %v210
    %v212 = vlaneseq
    %v213 = vshrl.u32 %v212, 7
    %v214 = vsub.s32 1, %v213
    %v215 = vrot.slane %v206, %v214
    %v216 = vlaneseq
    %v217 = vshrl.u32 %v216, 7
    %v218 = vsub.s32 2, %v217
    %v219 = vrot.slane %v206, %v218
    %v255 = vunpack.c.l.b16 %v174
    %v256 = vunpack.c.h.b16 %v174
    %v257 = vunpack.c.l.b16 %v175
    %v258 = vunpack.c.l.b16 %v176
    %v259 = vunpack.c.h.b16 %v176
    %v260 = vunpack.c.l.b16 %v177
    %v261 = vunpack.c.l.b16 %v178
    %v262 = vunpack.c.h.b16 %v178
    %v263 = vunpack.c.l.b16 %v179
    %v264 = vunpack.c.l.b16 %v180
    %v265 = vunpack.c.h.b16 %v180
    %v266 = vunpack.c.l.b16 %v181
    %v267 = vunpack.c.l.b16 %v182
    %v268 = vunpack.c.h.b16 %v182
    %v269 = vunpack.c.l.b16 %v183
    %v270 = vunpack.c.l.b16 %v184
    %v271 = vunpack.c.h.b16 %v184
    %v272 = vunpack.c.l.b16 %v185
    %v273 = vunpack.c.l.b16 %v186
    %v274 = vunpack.c.h.b16 %v186
    %v275 = vunpack.c.l.b16 %v187
    %v276 = vunpack.c.l.b16 %v188
    %v277 = vunpack.c.h.b16 %v188
    %v278 = vunpack.c.l.b16 %v189
    %v279 = vunpack.c.l.b16 %v190
    %v280 = vunpack.c.h.b16 %v190
    %v281 = vunpack.c.l.b16 %v191
    %v282 = vunpack.c.l.b16 %v192
    %v283 = vunpack.c.h.b16 %v192
    %v284 = vunpack.c.l.b16 %v193
    %v285 = vunpack.c.l.b16 %v194
    %v286 = vunpack.c.h.b16 %v194
    %v287 = vunpack.c.l.b16 %v195
    %v288 = vunpack.c.l.b16 %v196
    %v289 = vunpack.c.h.b16 %v196
    %v290 = vunpack.c.l.b16 %v197
    %v291 = vunpack.c.l.b16 %v198
    %v292 = vunpack.c.h.b16 %v198
    %v293 = vunpack.c.l.b16 %v199
    %v294 = vunpack.c.l.b16 %v200
    %v295 = vunpack.c.h.b16 %v200
    %v296 = vunpack.c.l.b16 %v201
    %v297 = vunpack.c.l.b16 %v202
    %v298 = vunpack.c.h.b16 %v202
    %v299 = vunpack.c.l.b16 %v203
    %v300 = vunpack.c.l.b16 %v204
    %v301 = vunpack.c.h.b16 %v204
    %v302 = vunpack.c.l.b16 %v205
    %v303 = vpack.c.b16 %v258, %v255
    %v304 = vpack.c.b16 %v259, %v256
    %v305 = vpack.c.b16 %v260, %v257
    %v306 = vpack.c.b16 %v264, %v261
    %v307 = vpack.c.b16 %v265, %v262
    %v308 = vpack.c.b16 %v266, %v263
    %v309 = vpack.c.b16 %v270, %v267
    %v310 = vpack.c.b16 %v271, %v268
    %v311 = vpack.c.b16 %v272, %v269
    %v312 = vpack.c.b16 %v276, %v273
    %v313 = vpack.c.b16 %v277, %v274
    %v314 = vpack.c.b16 %v278, %v275
    %v315 = vpack.c.b16 %v282, %v279
    %v316 = vpack.c.b16 %v283, %v280
    %v317 = vpack.c.b16 %v284, %v281
    %v318 = vpack.c.b16 %v288, %v285
    %v319 = vpack.c.b16 %v289, %v286
    %v320 = vpack.c.b16 %v290, %v287
    %v321 = vpack.c.b16 %v294, %v291
    %v322 = vpack.c.b16 %v295, %v292
    %v323 = vpack.c.b16 %v296, %v293
    %v324 = vpack.c.b16 %v300, %v297
    %v325 = vpack.c.b16 %v301, %v298
    %v326 = vpack.c.b16 %v302, %v299
    %351 = vmatprep.subr.bf16.mxu0 %v304
    %352 = vmatpush1.bf16.msra.mxu0 %v303
    %353 = vmatprep.subr.bf16.mxu0 %v307
    %354 = vmatpush1.bf16.msra.mxu0 %v306
    %355 = vmatprep.subr.bf16.mxu0 %v310
    %356 = vmatpush1.bf16.msra.mxu0 %v309
    %357 = vmatprep.subr.bf16.mxu0 %v313
    %358 = vmatpush1.bf16.msra.mxu0 %v312
    %359 = vmatprep.subr.bf16.mxu0 %v316
    %360 = vmatpush1.bf16.msra.mxu0 %v315
    %361 = vmatprep.subr.bf16.mxu0 %v319
    %362 = vmatpush1.bf16.msra.mxu0 %v318
    %363 = vmatprep.subr.bf16.mxu0 %v322
    %364 = vmatpush1.bf16.msra.mxu0 %v321
    %365 = vmatprep.subr.bf16.mxu0 %v325
    %366 = vmatpush1.bf16.msra.mxu0 %v324
    %367 = vmatprep.subr.bf16.mxu0 0
    %368 = vmatpush1.bf16.msra.mxu0 0
    %369 = vmatprep.subr.bf16.mxu0 0
    %370 = vmatpush1.bf16.msra.mxu0 0
    %371 = vmatprep.subr.bf16.mxu0 0
    %372 = vmatpush1.bf16.msra.mxu0 0
    %373 = vmatprep.subr.bf16.mxu0 0
    %374 = vmatpush1.bf16.msra.mxu0 0
    %375 = vmatprep.subr.bf16.mxu0 0
    %376 = vmatpush1.bf16.msra.mxu0 0
    %377 = vmatprep.subr.bf16.mxu0 0
    %378 = vmatpush1.bf16.msra.mxu0 0
    %379 = vmatprep.subr.bf16.mxu0 0
    %380 = vmatpush1.bf16.msra.mxu0 0
    %381 = vmatprep.subr.bf16.mxu0 0
    %382 = vmatpush1.bf16.msra.mxu0 0
    %383 = vmatprep.mubr.bf16.mxu0 0
    %384 = vmatmul.mubr.bf16.gmra.mrb[0].mxu0 %v173
    %v385 = vpop.f32.mrb[0].mxu0
    %v386 = vadd.f32 %v211, %v385
    %v387 = vpop.f32.mrb[0].mxu0
    %v388 = vadd.f32 %v215, %v387
    %v389 = vpop.f32.mrb[0].mxu0
    %v390 = vadd.f32 %v211, %v389
    %v391 = vpop.f32.mrb[0].mxu0
    %v392 = vadd.f32 %v215, %v391
    %393 = vdwg.mxu0
    %394 = vmatprep.subr.bf16.mxu0 0
    %395 = vmatpush1.bf16.msra.mxu0 %v305
    %396 = vmatprep.subr.bf16.mxu0 0
    %397 = vmatpush1.bf16.msra.mxu0 %v308
    %398 = vmatprep.subr.bf16.mxu0 0
    %399 = vmatpush1.bf16.msra.mxu0 %v311
    %400 = vmatprep.subr.bf16.mxu0 0
    %401 = vmatpush1.bf16.msra.mxu0 %v314
    %402 = vmatprep.subr.bf16.mxu0 0
    %403 = vmatpush1.bf16.msra.mxu0 %v317
    %404 = vmatprep.subr.bf16.mxu0 0
    %405 = vmatpush1.bf16.msra.mxu0 %v320
    %406 = vmatprep.subr.bf16.mxu0 0
    %407 = vmatpush1.bf16.msra.mxu0 %v323
    %408 = vmatprep.subr.bf16.mxu0 0
    %409 = vmatpush1.bf16.msra.mxu0 %v326
    %410 = vmatprep.subr.bf16.mxu0 0
    %411 = vmatpush1.bf16.msra.mxu0 0
    %412 = vmatprep.subr.bf16.mxu0 0
    %413 = vmatpush1.bf16.msra.mxu0 0
    %414 = vmatprep.subr.bf16.mxu0 0
    %415 = vmatpush1.bf16.msra.mxu0 0
    %416 = vmatprep.subr.bf16.mxu0 0
    %417 = vmatpush1.bf16.msra.mxu0 0
    %418 = vmatprep.subr.bf16.mxu0 0
    %419 = vmatpush1.bf16.msra.mxu0 0
    %420 = vmatprep.subr.bf16.mxu0 0
    %421 = vmatpush1.bf16.msra.mxu0 0
    %422 = vmatprep.subr.bf16.mxu0 0
    %423 = vmatpush1.bf16.msra.mxu0 0
    %424 = vmatprep.subr.bf16.mxu0 0
    %425 = vmatpush1.bf16.msra.mxu0 0
    %426 = vmatprep.mubr.bf16.mxu0 0
    %427 = vmatmul.mubr.bf16.gmra.mrb[0].mxu0 %v173
    %v428 = vpop.f32.mrb[0].mxu0
    %v429 = vadd.f32 %v219, %v428
    %v430 = vpop.f32.mrb[0].mxu0
    %v431 = vpop.f32.mrb[0].mxu0
    %v432 = vadd.f32 %v219, %v431
    %v433 = vpop.f32.mrb[0].mxu0
    %434 = vdwg.mxu0
    %437 = vrot.lane.b32.xlu0 %v386, 112
    %v438 = vpop.permute.xlu0 %437
    %439 = vrot.lane.b32.xlu0 %v390, 112
    %v440 = vpop.permute.xlu0 %439
    %443 = vrot.lane.b32.xlu0 %v386, 96
    %v444 = vpop.permute.xlu0 %443
    %445 = vrot.lane.b32.xlu0 %v390, 96
    %v446 = vpop.permute.xlu0 %445
    %449 = vrot.lane.b32.xlu0 %v386, 80
    %v450 = vpop.permute.xlu0 %449
    %451 = vrot.lane.b32.xlu0 %v390, 80
    %v452 = vpop.permute.xlu0 %451
    %455 = vrot.lane.b32.xlu0 %v386, 64
    %v456 = vpop.permute.xlu0 %455
    %457 = vrot.lane.b32.xlu0 %v390, 64
    %v458 = vpop.permute.xlu0 %457
    %461 = vrot.lane.b32.xlu0 %v386, 48
    %v462 = vpop.permute.xlu0 %461
    %463 = vrot.lane.b32.xlu0 %v390, 48
    %v464 = vpop.permute.xlu0 %463
    %467 = vrot.lane.b32.xlu0 %v386, 32
    %v468 = vpop.permute.xlu0 %467
    %469 = vrot.lane.b32.xlu0 %v390, 32
    %v470 = vpop.permute.xlu0 %469
    %473 = vrot.lane.b32.xlu0 %v386, 16
    %v474 = vpop.permute.xlu0 %473
    %475 = vrot.lane.b32.xlu0 %v390, 16
    %v476 = vpop.permute.xlu0 %475
    %v479 = vcombine.low %v386, %v444
    %v480 = vcombine.high %v386, %v444
    %v482 = vunpack.c.l.s4 1983009808
    %v483 = vunpack.c.0.s8 %v482
    %v484 = vlaneseq
    %v485 = vshrl.u32 %v484, 7
    %v486 = vsub.s32 %v483, %v485
    %v487 = vrot.slane %v479, %v486
    %v489 = vunpack.c.l.s4 1983009808
    %v490 = vunpack.c.0.s8 %v489
    %v491 = vlaneseq
    %v492 = vshrl.u32 %v491, 7
    %v493 = vsub.s32 %v490, %v492
    %v494 = vrot.slane %v480, %v493
    %v495 = vcombine.low %v438, %v450
    %v496 = vcombine.high %v438, %v450
    %v498 = vunpack.c.l.s4 1983009808
    %v499 = vunpack.c.0.s8 %v498
    %v500 = vlaneseq
    %v501 = vshrl.u32 %v500, 7
    %v502 = vsub.s32 %v499, %v501
    %v503 = vrot.slane %v495, %v502
    %v505 = vunpack.c.l.s4 1983009808
    %v506 = vunpack.c.0.s8 %v505
    %v507 = vlaneseq
    %v508 = vshrl.u32 %v507, 7
    %v509 = vsub.s32 %v506, %v508
    %v510 = vrot.slane %v496, %v509
    %v511 = vcombine.low %v456, %v468
    %v512 = vcombine.high %v456, %v468
    %v514 = vunpack.c.l.s4 1983009808
    %v515 = vunpack.c.0.s8 %v514
    %v516 = vlaneseq
    %v517 = vshrl.u32 %v516, 7
    %v518 = vsub.s32 %v515, %v517
    %v519 = vrot.slane %v511, %v518
    %v521 = vunpack.c.l.s4 1983009808
    %v522 = vunpack.c.0.s8 %v521
    %v523 = vlaneseq
    %v524 = vshrl.u32 %v523, 7
    %v525 = vsub.s32 %v522, %v524
    %v526 = vrot.slane %v512, %v525
    %v527 = vcombine.low %v462, %v474
    %v528 = vcombine.high %v462, %v474
    %v530 = vunpack.c.l.s4 1983009808
    %v531 = vunpack.c.0.s8 %v530
    %v532 = vlaneseq
    %v533 = vshrl.u32 %v532, 7
    %v534 = vsub.s32 %v531, %v533
    %v535 = vrot.slane %v527, %v534
    %v537 = vunpack.c.l.s4 1983009808
    %v538 = vunpack.c.0.s8 %v537
    %v539 = vlaneseq
    %v540 = vshrl.u32 %v539, 7
    %v541 = vsub.s32 %v538, %v540
    %v542 = vrot.slane %v528, %v541
    %v543 = vcombine.low %v487, %v503
    %v544 = vcombine.high %v487, %v503
    %v546 = vunpack.c.l.s4 1934713408
    %v547 = vunpack.c.0.s8 %v546
    %v548 = vlaneseq
    %v549 = vshrl.u32 %v548, 7
    %v550 = vsub.s32 %v547, %v549
    %v551 = vrot.slane %v543, %v550
    %v553 = vunpack.c.l.s4 1934713408
    %v554 = vunpack.c.0.s8 %v553
    %v555 = vlaneseq
    %v556 = vshrl.u32 %v555, 7
    %v557 = vsub.s32 %v554, %v556
    %v558 = vrot.slane %v544, %v557
    %v559 = vcombine.low %v494, %v510
    %v560 = vcombine.high %v494, %v510
    %v562 = vunpack.c.l.s4 1934713408
    %v563 = vunpack.c.0.s8 %v562
    %v564 = vlaneseq
    %v565 = vshrl.u32 %v564, 7
    %v566 = vsub.s32 %v563, %v565
    %v567 = vrot.slane %v559, %v566
    %v569 = vunpack.c.l.s4 1934713408
    %v570 = vunpack.c.0.s8 %v569
    %v571 = vlaneseq
    %v572 = vshrl.u32 %v571, 7
    %v573 = vsub.s32 %v570, %v572
    %v574 = vrot.slane %v560, %v573
    %v575 = vcombine.low %v519, %v535
    %v576 = vcombine.high %v519, %v535
    %v578 = vunpack.c.l.s4 1934713408
    %v579 = vunpack.c.0.s8 %v578
    %v580 = vlaneseq
    %v581 = vshrl.u32 %v580, 7
    %v582 = vsub.s32 %v579, %v581
    %v583 = vrot.slane %v575, %v582
    %v585 = vunpack.c.l.s4 1934713408
    %v586 = vunpack.c.0.s8 %v585
    %v587 = vlaneseq
    %v588 = vshrl.u32 %v587, 7
    %v589 = vsub.s32 %v586, %v588
    %v590 = vrot.slane %v576, %v589
    %v591 = vcombine.low %v526, %v542
    %v592 = vcombine.high %v526, %v542
    %v594 = vunpack.c.l.s4 1934713408
    %v595 = vunpack.c.0.s8 %v594
    %v596 = vlaneseq
    %v597 = vshrl.u32 %v596, 7
    %v598 = vsub.s32 %v595, %v597
    %v599 = vrot.slane %v591, %v598
    %v601 = vunpack.c.l.s4 1934713408
    %v602 = vunpack.c.0.s8 %v601
    %v603 = vlaneseq
    %v604 = vshrl.u32 %v603, 7
    %v605 = vsub.s32 %v602, %v604
    %v606 = vrot.slane %v592, %v605
    %v607 = vcombine.low %v551, %v583
    %v608 = vcombine.high %v551, %v583
    %v609 = vcombine.low %v558, %v590
    %v610 = vcombine.high %v558, %v590
    %v611 = vcombine.low %v567, %v599
    %v612 = vcombine.high %v567, %v599
    %v613 = vcombine.low %v574, %v606
    %v614 = vcombine.high %v574, %v606
    %v615 = vcombine.low %v390, %v446
    %v616 = vcombine.high %v390, %v446
    %v618 = vunpack.c.l.s4 1983009808
    %v619 = vunpack.c.0.s8 %v618
    %v620 = vlaneseq
    %v621 = vshrl.u32 %v620, 7
    %v622 = vsub.s32 %v619, %v621
    %v623 = vrot.slane %v615, %v622
    %v625 = vunpack.c.l.s4 1983009808
    %v626 = vunpack.c.0.s8 %v625
    %v627 = vlaneseq
    %v628 = vshrl.u32 %v627, 7
    %v629 = vsub.s32 %v626, %v628
    %v630 = vrot.slane %v616, %v629
    %v631 = vcombine.low %v440, %v452
    %v632 = vcombine.high %v440, %v452
    %v634 = vunpack.c.l.s4 1983009808
    %v635 = vunpack.c.0.s8 %v634
    %v636 = vlaneseq
    %v637 = vshrl.u32 %v636, 7
    %v638 = vsub.s32 %v635, %v637
    %v639 = vrot.slane %v631, %v638
    %v641 = vunpack.c.l.s4 1983009808
    %v642 = vunpack.c.0.s8 %v641
    %v643 = vlaneseq
    %v644 = vshrl.u32 %v643, 7
    %v645 = vsub.s32 %v642, %v644
    %v646 = vrot.slane %v632, %v645
    %v647 = vcombine.low %v458, %v470
    %v648 = vcombine.high %v458, %v470
    %v650 = vunpack.c.l.s4 1983009808
    %v651 = vunpack.c.0.s8 %v650
    %v652 = vlaneseq
    %v653 = vshrl.u32 %v652, 7
    %v654 = vsub.s32 %v651, %v653
    %v655 = vrot.slane %v647, %v654
    %v657 = vunpack.c.l.s4 1983009808
    %v658 = vunpack.c.0.s8 %v657
    %v659 = vlaneseq
    %v660 = vshrl.u32 %v659, 7
    %v661 = vsub.s32 %v658, %v660
    %v662 = vrot.slane %v648, %v661
    %v663 = vcombine.low %v464, %v476
    %v664 = vcombine.high %v464, %v476
    %v666 = vunpack.c.l.s4 1983009808
    %v667 = vunpack.c.0.s8 %v666
    %v668 = vlaneseq
    %v669 = vshrl.u32 %v668, 7
    %v670 = vsub.s32 %v667, %v669
    %v671 = vrot.slane %v663, %v670
    %v673 = vunpack.c.l.s4 1983009808
    %v674 = vunpack.c.0.s8 %v673
    %v675 = vlaneseq
    %v676 = vshrl.u32 %v675, 7
    %v677 = vsub.s32 %v674, %v676
    %v678 = vrot.slane %v664, %v677
    %v679 = vcombine.low %v623, %v639
    %v680 = vcombine.high %v623, %v639
    %v682 = vunpack.c.l.s4 1934713408
    %v683 = vunpack.c.0.s8 %v682
    %v684 = vlaneseq
    %v685 = vshrl.u32 %v684, 7
    %v686 = vsub.s32 %v683, %v685
    %v687 = vrot.slane %v679, %v686
    %v689 = vunpack.c.l.s4 1934713408
    %v690 = vunpack.c.0.s8 %v689
    %v691 = vlaneseq
    %v692 = vshrl.u32 %v691, 7
    %v693 = vsub.s32 %v690, %v692
    %v694 = vrot.slane %v680, %v693
    %v695 = vcombine.low %v630, %v646
    %v696 = vcombine.high %v630, %v646
    %v698 = vunpack.c.l.s4 1934713408
    %v699 = vunpack.c.0.s8 %v698
    %v700 = vlaneseq
    %v701 = vshrl.u32 %v700, 7
    %v702 = vsub.s32 %v699, %v701
    %v703 = vrot.slane %v695, %v702
    %v705 = vunpack.c.l.s4 1934713408
    %v706 = vunpack.c.0.s8 %v705
    %v707 = vlaneseq
    %v708 = vshrl.u32 %v707, 7
    %v709 = vsub.s32 %v706, %v708
    %v710 = vrot.slane %v696, %v709
    %v711 = vcombine.low %v655, %v671
    %v712 = vcombine.high %v655, %v671
    %v714 = vunpack.c.l.s4 1934713408
    %v715 = vunpack.c.0.s8 %v714
    %v716 = vlaneseq
    %v717 = vshrl.u32 %v716, 7
    %v718 = vsub.s32 %v715, %v717
    %v719 = vrot.slane %v711, %v718
    %v721 = vunpack.c.l.s4 1934713408
    %v722 = vunpack.c.0.s8 %v721
    %v723 = vlaneseq
    %v724 = vshrl.u32 %v723, 7
    %v725 = vsub.s32 %v722, %v724
    %v726 = vrot.slane %v712, %v725
    %v727 = vcombine.low %v662, %v678
    %v728 = vcombine.high %v662, %v678
    %v730 = vunpack.c.l.s4 1934713408
    %v731 = vunpack.c.0.s8 %v730
    %v732 = vlaneseq
    %v733 = vshrl.u32 %v732, 7
    %v734 = vsub.s32 %v731, %v733
    %v735 = vrot.slane %v727, %v734
    %v737 = vunpack.c.l.s4 1934713408
    %v738 = vunpack.c.0.s8 %v737
    %v739 = vlaneseq
    %v740 = vshrl.u32 %v739, 7
    %v741 = vsub.s32 %v738, %v740
    %v742 = vrot.slane %v728, %v741
    %v743 = vcombine.low %v687, %v719
    %v744 = vcombine.high %v687, %v719
    %v745 = vcombine.low %v694, %v726
    %v746 = vcombine.high %v694, %v726
    %v747 = vcombine.low %v703, %v735
    %v748 = vcombine.high %v703, %v735
    %v749 = vcombine.low %v710, %v742
    %v750 = vcombine.high %v710, %v742
    %v751 = vcombine.low %v607, %v609
    %v752 = vcombine.high %v607, %v609
    %v754 = vunpack.c.l.s4 1983009808
    %v755 = vunpack.c.0.s8 %v754
    %v756 = vlaneseq
    %v757 = vshrl.u32 %v756, 7
    %v758 = vsub.s32 %v755, %v757
    %v759 = vrot.slane %v751, %v758
    %v761 = vunpack.c.l.s4 1983009808
    %v762 = vunpack.c.0.s8 %v761
    %v763 = vlaneseq
    %v764 = vshrl.u32 %v763, 7
    %v765 = vsub.s32 %v762, %v764
    %v766 = vrot.slane %v752, %v765
    %v767 = vcombine.low %v608, %v610
    %v768 = vcombine.high %v608, %v610
    %v770 = vunpack.c.l.s4 1983009808
    %v771 = vunpack.c.0.s8 %v770
    %v772 = vlaneseq
    %v773 = vshrl.u32 %v772, 7
    %v774 = vsub.s32 %v771, %v773
    %v775 = vrot.slane %v767, %v774
    %v777 = vunpack.c.l.s4 1983009808
    %v778 = vunpack.c.0.s8 %v777
    %v779 = vlaneseq
    %v780 = vshrl.u32 %v779, 7
    %v781 = vsub.s32 %v778, %v780
    %v782 = vrot.slane %v768, %v781
    %v783 = vcombine.low %v611, %v613
    %v784 = vcombine.high %v611, %v613
    %v786 = vunpack.c.l.s4 1983009808
    %v787 = vunpack.c.0.s8 %v786
    %v788 = vlaneseq
    %v789 = vshrl.u32 %v788, 7
    %v790 = vsub.s32 %v787, %v789
    %v791 = vrot.slane %v783, %v790
    %v793 = vunpack.c.l.s4 1983009808
    %v794 = vunpack.c.0.s8 %v793
    %v795 = vlaneseq
    %v796 = vshrl.u32 %v795, 7
    %v797 = vsub.s32 %v794, %v796
    %v798 = vrot.slane %v784, %v797
    %v799 = vcombine.low %v612, %v614
    %v800 = vcombine.high %v612, %v614
    %v802 = vunpack.c.l.s4 1983009808
    %v803 = vunpack.c.0.s8 %v802
    %v804 = vlaneseq
    %v805 = vshrl.u32 %v804, 7
    %v806 = vsub.s32 %v803, %v805
    %v807 = vrot.slane %v799, %v806
    %v809 = vunpack.c.l.s4 1983009808
    %v810 = vunpack.c.0.s8 %v809
    %v811 = vlaneseq
    %v812 = vshrl.u32 %v811, 7
    %v813 = vsub.s32 %v810, %v812
    %v814 = vrot.slane %v800, %v813
    %v815 = vcombine.low %v759, %v775
    %v816 = vcombine.high %v759, %v775
    %v818 = vunpack.c.l.s4 1934713408
    %v819 = vunpack.c.0.s8 %v818
    %v820 = vlaneseq
    %v821 = vshrl.u32 %v820, 7
    %v822 = vsub.s32 %v819, %v821
    %v823 = vrot.slane %v815, %v822
    %v825 = vunpack.c.l.s4 1934713408
    %v826 = vunpack.c.0.s8 %v825
    %v827 = vlaneseq
    %v828 = vshrl.u32 %v827, 7
    %v829 = vsub.s32 %v826, %v828
    %v830 = vrot.slane %v816, %v829
    %v831 = vcombine.low %v766, %v782
    %v832 = vcombine.high %v766, %v782
    %v834 = vunpack.c.l.s4 1934713408
    %v835 = vunpack.c.0.s8 %v834
    %v836 = vlaneseq
    %v837 = vshrl.u32 %v836, 7
    %v838 = vsub.s32 %v835, %v837
    %v839 = vrot.slane %v831, %v838
    %v841 = vunpack.c.l.s4 1934713408
    %v842 = vunpack.c.0.s8 %v841
    %v843 = vlaneseq
    %v844 = vshrl.u32 %v843, 7
    %v845 = vsub.s32 %v842, %v844
    %v846 = vrot.slane %v832, %v845
    %v847 = vcombine.low %v791, %v807
    %v848 = vcombine.high %v791, %v807
    %v850 = vunpack.c.l.s4 1934713408
    %v851 = vunpack.c.0.s8 %v850
    %v852 = vlaneseq
    %v853 = vshrl.u32 %v852, 7
    %v854 = vsub.s32 %v851, %v853
    %v855 = vrot.slane %v847, %v854
    %v857 = vunpack.c.l.s4 1934713408
    %v858 = vunpack.c.0.s8 %v857
    %v859 = vlaneseq
    %v860 = vshrl.u32 %v859, 7
    %v861 = vsub.s32 %v858, %v860
    %v862 = vrot.slane %v848, %v861
    %v863 = vcombine.low %v798, %v814
    %v864 = vcombine.high %v798, %v814
    %v866 = vunpack.c.l.s4 1934713408
    %v867 = vunpack.c.0.s8 %v866
    %v868 = vlaneseq
    %v869 = vshrl.u32 %v868, 7
    %v870 = vsub.s32 %v867, %v869
    %v871 = vrot.slane %v863, %v870
    %v873 = vunpack.c.l.s4 1934713408
    %v874 = vunpack.c.0.s8 %v873
    %v875 = vlaneseq
    %v876 = vshrl.u32 %v875, 7
    %v877 = vsub.s32 %v874, %v876
    %v878 = vrot.slane %v864, %v877
    %v879 = vcombine.low %v823, %v855
    %v880 = vcombine.high %v823, %v855
    %v881 = vcombine.low %v830, %v862
    %v882 = vcombine.high %v830, %v862
    %v883 = vcombine.low %v839, %v871
    %v884 = vcombine.high %v839, %v871
    %v885 = vcombine.low %v846, %v878
    %v886 = vcombine.high %v846, %v878
    %v887 = vcombine.low %v743, %v745
    %v888 = vcombine.high %v743, %v745
    %v890 = vunpack.c.l.s4 1983009808
    %v891 = vunpack.c.0.s8 %v890
    %v892 = vlaneseq
    %v893 = vshrl.u32 %v892, 7
    %v894 = vsub.s32 %v891, %v893
    %v895 = vrot.slane %v887, %v894
    %v897 = vunpack.c.l.s4 1983009808
    %v898 = vunpack.c.0.s8 %v897
    %v899 = vlaneseq
    %v900 = vshrl.u32 %v899, 7
    %v901 = vsub.s32 %v898, %v900
    %v902 = vrot.slane %v888, %v901
    %v903 = vcombine.low %v744, %v746
    %v904 = vcombine.high %v744, %v746
    %v906 = vunpack.c.l.s4 1983009808
    %v907 = vunpack.c.0.s8 %v906
    %v908 = vlaneseq
    %v909 = vshrl.u32 %v908, 7
    %v910 = vsub.s32 %v907, %v909
    %v911 = vrot.slane %v903, %v910
    %v913 = vunpack.c.l.s4 1983009808
    %v914 = vunpack.c.0.s8 %v913
    %v915 = vlaneseq
    %v916 = vshrl.u32 %v915, 7
    %v917 = vsub.s32 %v914, %v916
    %v918 = vrot.slane %v904, %v917
    %v919 = vcombine.low %v747, %v749
    %v920 = vcombine.high %v747, %v749
    %v922 = vunpack.c.l.s4 1983009808
    %v923 = vunpack.c.0.s8 %v922
    %v924 = vlaneseq
    %v925 = vshrl.u32 %v924, 7
    %v926 = vsub.s32 %v923, %v925
    %v927 = vrot.slane %v919, %v926
    %v929 = vunpack.c.l.s4 1983009808
    %v930 = vunpack.c.0.s8 %v929
    %v931 = vlaneseq
    %v932 = vshrl.u32 %v931, 7
    %v933 = vsub.s32 %v930, %v932
    %v934 = vrot.slane %v920, %v933
    %v935 = vcombine.low %v748, %v750
    %v936 = vcombine.high %v748, %v750
    %v938 = vunpack.c.l.s4 1983009808
    %v939 = vunpack.c.0.s8 %v938
    %v940 = vlaneseq
    %v941 = vshrl.u32 %v940, 7
    %v942 = vsub.s32 %v939, %v941
    %v943 = vrot.slane %v935, %v942
    %v945 = vunpack.c.l.s4 1983009808
    %v946 = vunpack.c.0.s8 %v945
    %v947 = vlaneseq
    %v948 = vshrl.u32 %v947, 7
    %v949 = vsub.s32 %v946, %v948
    %v950 = vrot.slane %v936, %v949
    %v951 = vcombine.low %v895, %v911
    %v952 = vcombine.high %v895, %v911
    %v954 = vunpack.c.l.s4 1934713408
    %v955 = vunpack.c.0.s8 %v954
    %v956 = vlaneseq
    %v957 = vshrl.u32 %v956, 7
    %v958 = vsub.s32 %v955, %v957
    %v959 = vrot.slane %v951, %v958
    %v961 = vunpack.c.l.s4 1934713408
    %v962 = vunpack.c.0.s8 %v961
    %v963 = vlaneseq
    %v964 = vshrl.u32 %v963, 7
    %v965 = vsub.s32 %v962, %v964
    %v966 = vrot.slane %v952, %v965
    %v967 = vcombine.low %v902, %v918
    %v968 = vcombine.high %v902, %v918
    %v970 = vunpack.c.l.s4 1934713408
    %v971 = vunpack.c.0.s8 %v970
    %v972 = vlaneseq
    %v973 = vshrl.u32 %v972, 7
    %v974 = vsub.s32 %v971, %v973
    %v975 = vrot.slane %v967, %v974
    %v977 = vunpack.c.l.s4 1934713408
    %v978 = vunpack.c.0.s8 %v977
    %v979 = vlaneseq
    %v980 = vshrl.u32 %v979, 7
    %v981 = vsub.s32 %v978, %v980
    %v982 = vrot.slane %v968, %v981
    %v983 = vcombine.low %v927, %v943
    %v984 = vcombine.high %v927, %v943
    %v986 = vunpack.c.l.s4 1934713408
    %v987 = vunpack.c.0.s8 %v986
    %v988 = vlaneseq
    %v989 = vshrl.u32 %v988, 7
    %v990 = vsub.s32 %v987, %v989
    %v991 = vrot.slane %v983, %v990
    %v993 = vunpack.c.l.s4 1934713408
    %v994 = vunpack.c.0.s8 %v993
    %v995 = vlaneseq
    %v996 = vshrl.u32 %v995, 7
    %v997 = vsub.s32 %v994, %v996
    %v998 = vrot.slane %v984, %v997
    %v999 = vcombine.low %v934, %v950
    %v1000 = vcombine.high %v934, %v950
    %v1002 = vunpack.c.l.s4 1934713408
    %v1003 = vunpack.c.0.s8 %v1002
    %v1004 = vlaneseq
    %v1005 = vshrl.u32 %v1004, 7
    %v1006 = vsub.s32 %v1003, %v1005
    %v1007 = vrot.slane %v999, %v1006
    %v1009 = vunpack.c.l.s4 1934713408
    %v1010 = vunpack.c.0.s8 %v1009
    %v1011 = vlaneseq
    %v1012 = vshrl.u32 %v1011, 7
    %v1013 = vsub.s32 %v1010, %v1012
    %v1014 = vrot.slane %v1000, %v1013
    %v1015 = vcombine.low %v959, %v991
    %v1016 = vcombine.high %v959, %v991
    %v1017 = vcombine.low %v966, %v998
    %v1018 = vcombine.high %v966, %v998
    %v1019 = vcombine.low %v975, %v1007
    %v1020 = vcombine.high %v975, %v1007
    %v1021 = vcombine.low %v982, %v1014
    %v1022 = vcombine.high %v982, %v1014
    %v1023 = vpack.c.bf16 %v879, %v879
    %v1024 = vpack.c.bf16 %v880, %v880
    %v1025 = vpack.c.bf16 %v881, %v881
    %v1026 = vpack.c.bf16 %v882, %v882
    %v1027 = vpack.c.bf16 %v883, %v883
    %v1028 = vpack.c.bf16 %v884, %v884
    %v1029 = vpack.c.bf16 %v885, %v885
    %v1030 = vpack.c.bf16 %v886, %v886
    %v1031 = vpack.c.bf16 %v1015, %v1015
    %v1032 = vpack.c.bf16 %v1016, %v1016
    %v1033 = vpack.c.bf16 %v1017, %v1017
    %v1034 = vpack.c.bf16 %v1018, %v1018
    %v1035 = vpack.c.bf16 %v1019, %v1019
    %v1036 = vpack.c.bf16 %v1020, %v1020
    %v1037 = vpack.c.bf16 %v1021, %v1021
    %v1038 = vpack.c.bf16 %v1022, %v1022
    %1041 = vrot.lane.b32.xlu0 %v388, 112
    %v1042 = vpop.permute.xlu0 %1041
    %1043 = vrot.lane.b32.xlu0 %v392, 112
    %v1044 = vpop.permute.xlu0 %1043
    %1047 = vrot.lane.b32.xlu0 %v388, 96
    %v1048 = vpop.permute.xlu0 %1047
    %1049 = vrot.lane.b32.xlu0 %v392, 96
    %v1050 = vpop.permute.xlu0 %1049
    %1053 = vrot.lane.b32.xlu0 %v388, 80
    %v1054 = vpop.permute.xlu0 %1053
    %1055 = vrot.lane.b32.xlu0 %v392, 80
    %v1056 = vpop.permute.xlu0 %1055
    %1059 = vrot.lane.b32.xlu0 %v388, 64
    %v1060 = vpop.permute.xlu0 %1059
    %1061 = vrot.lane.b32.xlu0 %v392, 64
    %v1062 = vpop.permute.xlu0 %1061
    %1065 = vrot.lane.b32.xlu0 %v388, 48
    %v1066 = vpop.permute.xlu0 %1065
    %1067 = vrot.lane.b32.xlu0 %v392, 48
    %v1068 = vpop.permute.xlu0 %1067
    %1071 = vrot.lane.b32.xlu0 %v388, 32
    %v1072 = vpop.permute.xlu0 %1071
    %1073 = vrot.lane.b32.xlu0 %v392, 32
    %v1074 = vpop.permute.xlu0 %1073
    %1077 = vrot.lane.b32.xlu0 %v388, 16
    %v1078 = vpop.permute.xlu0 %1077
    %1079 = vrot.lane.b32.xlu0 %v392, 16
    %v1080 = vpop.permute.xlu0 %1079
    %v1083 = vcombine.low %v388, %v1048
    %v1084 = vcombine.high %v388, %v1048
    %v1086 = vunpack.c.l.s4 1983009808
    %v1087 = vunpack.c.0.s8 %v1086
    %v1088 = vlaneseq
    %v1089 = vshrl.u32 %v1088, 7
    %v1090 = vsub.s32 %v1087, %v1089
    %v1091 = vrot.slane %v1083, %v1090
    %v1093 = vunpack.c.l.s4 1983009808
    %v1094 = vunpack.c.0.s8 %v1093
    %v1095 = vlaneseq
    %v1096 = vshrl.u32 %v1095, 7
    %v1097 = vsub.s32 %v1094, %v1096
    %v1098 = vrot.slane %v1084, %v1097
    %v1099 = vcombine.low %v1042, %v1054
    %v1100 = vcombine.high %v1042, %v1054
    %v1102 = vunpack.c.l.s4 1983009808
    %v1103 = vunpack.c.0.s8 %v1102
    %v1104 = vlaneseq
    %v1105 = vshrl.u32 %v1104, 7
    %v1106 = vsub.s32 %v1103, %v1105
    %v1107 = vrot.slane %v1099, %v1106
    %v1109 = vunpack.c.l.s4 1983009808
    %v1110 = vunpack.c.0.s8 %v1109
    %v1111 = vlaneseq
    %v1112 = vshrl.u32 %v1111, 7
    %v1113 = vsub.s32 %v1110, %v1112
    %v1114 = vrot.slane %v1100, %v1113
    %v1115 = vcombine.low %v1060, %v1072
    %v1116 = vcombine.high %v1060, %v1072
    %v1118 = vunpack.c.l.s4 1983009808
    %v1119 = vunpack.c.0.s8 %v1118
    %v1120 = vlaneseq
    %v1121 = vshrl.u32 %v1120, 7
    %v1122 = vsub.s32 %v1119, %v1121
    %v1123 = vrot.slane %v1115, %v1122
    %v1125 = vunpack.c.l.s4 1983009808
    %v1126 = vunpack.c.0.s8 %v1125
    %v1127 = vlaneseq
    %v1128 = vshrl.u32 %v1127, 7
    %v1129 = vsub.s32 %v1126, %v1128
    %v1130 = vrot.slane %v1116, %v1129
    %v1131 = vcombine.low %v1066, %v1078
    %v1132 = vcombine.high %v1066, %v1078
    %v1134 = vunpack.c.l.s4 1983009808
    %v1135 = vunpack.c.0.s8 %v1134
    %v1136 = vlaneseq
    %v1137 = vshrl.u32 %v1136, 7
    %v1138 = vsub.s32 %v1135, %v1137
    %v1139 = vrot.slane %v1131, %v1138
    %v1141 = vunpack.c.l.s4 1983009808
    %v1142 = vunpack.c.0.s8 %v1141
    %v1143 = vlaneseq
    %v1144 = vshrl.u32 %v1143, 7
    %v1145 = vsub.s32 %v1142, %v1144
    %v1146 = vrot.slane %v1132, %v1145
    %v1147 = vcombine.low %v1091, %v1107
    %v1148 = vcombine.high %v1091, %v1107
    %v1150 = vunpack.c.l.s4 1934713408
    %v1151 = vunpack.c.0.s8 %v1150
    %v1152 = vlaneseq
    %v1153 = vshrl.u32 %v1152, 7
    %v1154 = vsub.s32 %v1151, %v1153
    %v1155 = vrot.slane %v1147, %v1154
    %v1157 = vunpack.c.l.s4 1934713408
    %v1158 = vunpack.c.0.s8 %v1157
    %v1159 = vlaneseq
    %v1160 = vshrl.u32 %v1159, 7
    %v1161 = vsub.s32 %v1158, %v1160
    %v1162 = vrot.slane %v1148, %v1161
    %v1163 = vcombine.low %v1098, %v1114
    %v1164 = vcombine.high %v1098, %v1114
    %v1166 = vunpack.c.l.s4 1934713408
    %v1167 = vunpack.c.0.s8 %v1166
    %v1168 = vlaneseq
    %v1169 = vshrl.u32 %v1168, 7
    %v1170 = vsub.s32 %v1167, %v1169
    %v1171 = vrot.slane %v1163, %v1170
    %v1173 = vunpack.c.l.s4 1934713408
    %v1174 = vunpack.c.0.s8 %v1173
    %v1175 = vlaneseq
    %v1176 = vshrl.u32 %v1175, 7
    %v1177 = vsub.s32 %v1174, %v1176
    %v1178 = vrot.slane %v1164, %v1177
    %v1179 = vcombine.low %v1123, %v1139
    %v1180 = vcombine.high %v1123, %v1139
    %v1182 = vunpack.c.l.s4 1934713408
    %v1183 = vunpack.c.0.s8 %v1182
    %v1184 = vlaneseq
    %v1185 = vshrl.u32 %v1184, 7
    %v1186 = vsub.s32 %v1183, %v1185
    %v1187 = vrot.slane %v1179, %v1186
    %v1189 = vunpack.c.l.s4 1934713408
    %v1190 = vunpack.c.0.s8 %v1189
    %v1191 = vlaneseq
    %v1192 = vshrl.u32 %v1191, 7
    %v1193 = vsub.s32 %v1190, %v1192
    %v1194 = vrot.slane %v1180, %v1193
    %v1195 = vcombine.low %v1130, %v1146
    %v1196 = vcombine.high %v1130, %v1146
    %v1198 = vunpack.c.l.s4 1934713408
    %v1199 = vunpack.c.0.s8 %v1198
    %v1200 = vlaneseq
    %v1201 = vshrl.u32 %v1200, 7
    %v1202 = vsub.s32 %v1199, %v1201
    %v1203 = vrot.slane %v1195, %v1202
    %v1205 = vunpack.c.l.s4 1934713408
    %v1206 = vunpack.c.0.s8 %v1205
    %v1207 = vlaneseq
    %v1208 = vshrl.u32 %v1207, 7
    %v1209 = vsub.s32 %v1206, %v1208
    %v1210 = vrot.slane %v1196, %v1209
    %v1211 = vcombine.low %v1155, %v1187
    %v1212 = vcombine.high %v1155, %v1187
    %v1213 = vcombine.low %v1162, %v1194
    %v1214 = vcombine.high %v1162, %v1194
    %v1215 = vcombine.low %v1171, %v1203
    %v1216 = vcombine.high %v1171, %v1203
    %v1217 = vcombine.low %v1178, %v1210
    %v1218 = vcombine.high %v1178, %v1210
    %v1219 = vcombine.low %v392, %v1050
    %v1220 = vcombine.high %v392, %v1050
    %v1222 = vunpack.c.l.s4 1983009808
    %v1223 = vunpack.c.0.s8 %v1222
    %v1224 = vlaneseq
    %v1225 = vshrl.u32 %v1224, 7
    %v1226 = vsub.s32 %v1223, %v1225
    %v1227 = vrot.slane %v1219, %v1226
    %v1229 = vunpack.c.l.s4 1983009808
    %v1230 = vunpack.c.0.s8 %v1229
    %v1231 = vlaneseq
    %v1232 = vshrl.u32 %v1231, 7
    %v1233 = vsub.s32 %v1230, %v1232
    %v1234 = vrot.slane %v1220, %v1233
    %v1235 = vcombine.low %v1044, %v1056
    %v1236 = vcombine.high %v1044, %v1056
    %v1238 = vunpack.c.l.s4 1983009808
    %v1239 = vunpack.c.0.s8 %v1238
    %v1240 = vlaneseq
    %v1241 = vshrl.u32 %v1240, 7
    %v1242 = vsub.s32 %v1239, %v1241
    %v1243 = vrot.slane %v1235, %v1242
    %v1245 = vunpack.c.l.s4 1983009808
    %v1246 = vunpack.c.0.s8 %v1245
    %v1247 = vlaneseq
    %v1248 = vshrl.u32 %v1247, 7
    %v1249 = vsub.s32 %v1246, %v1248
    %v1250 = vrot.slane %v1236, %v1249
    %v1251 = vcombine.low %v1062, %v1074
    %v1252 = vcombine.high %v1062, %v1074
    %v1254 = vunpack.c.l.s4 1983009808
    %v1255 = vunpack.c.0.s8 %v1254
    %v1256 = vlaneseq
    %v1257 = vshrl.u32 %v1256, 7
    %v1258 = vsub.s32 %v1255, %v1257
    %v1259 = vrot.slane %v1251, %v1258
    %v1261 = vunpack.c.l.s4 1983009808
    %v1262 = vunpack.c.0.s8 %v1261
    %v1263 = vlaneseq
    %v1264 = vshrl.u32 %v1263, 7
    %v1265 = vsub.s32 %v1262, %v1264
    %v1266 = vrot.slane %v1252, %v1265
    %v1267 = vcombine.low %v1068, %v1080
    %v1268 = vcombine.high %v1068, %v1080
    %v1270 = vunpack.c.l.s4 1983009808
    %v1271 = vunpack.c.0.s8 %v1270
    %v1272 = vlaneseq
    %v1273 = vshrl.u32 %v1272, 7
    %v1274 = vsub.s32 %v1271, %v1273
    %v1275 = vrot.slane %v1267, %v1274
    %v1277 = vunpack.c.l.s4 1983009808
    %v1278 = vunpack.c.0.s8 %v1277
    %v1279 = vlaneseq
    %v1280 = vshrl.u32 %v1279, 7
    %v1281 = vsub.s32 %v1278, %v1280
    %v1282 = vrot.slane %v1268, %v1281
    %v1283 = vcombine.low %v1227, %v1243
    %v1284 = vcombine.high %v1227, %v1243
    %v1286 = vunpack.c.l.s4 1934713408
    %v1287 = vunpack.c.0.s8 %v1286
    %v1288 = vlaneseq
    %v1289 = vshrl.u32 %v1288, 7
    %v1290 = vsub.s32 %v1287, %v1289
    %v1291 = vrot.slane %v1283, %v1290
    %v1293 = vunpack.c.l.s4 1934713408
    %v1294 = vunpack.c.0.s8 %v1293
    %v1295 = vlaneseq
    %v1296 = vshrl.u32 %v1295, 7
    %v1297 = vsub.s32 %v1294, %v1296
    %v1298 = vrot.slane %v1284, %v1297
    %v1299 = vcombine.low %v1234, %v1250
    %v1300 = vcombine.high %v1234, %v1250
    %v1302 = vunpack.c.l.s4 1934713408
    %v1303 = vunpack.c.0.s8 %v1302
    %v1304 = vlaneseq
    %v1305 = vshrl.u32 %v1304, 7
    %v1306 = vsub.s32 %v1303, %v1305
    %v1307 = vrot.slane %v1299, %v1306
    %v1309 = vunpack.c.l.s4 1934713408
    %v1310 = vunpack.c.0.s8 %v1309
    %v1311 = vlaneseq
    %v1312 = vshrl.u32 %v1311, 7
    %v1313 = vsub.s32 %v1310, %v1312
    %v1314 = vrot.slane %v1300, %v1313
    %v1315 = vcombine.low %v1259, %v1275
    %v1316 = vcombine.high %v1259, %v1275
    %v1318 = vunpack.c.l.s4 1934713408
    %v1319 = vunpack.c.0.s8 %v1318
    %v1320 = vlaneseq
    %v1321 = vshrl.u32 %v1320, 7
    %v1322 = vsub.s32 %v1319, %v1321
    %v1323 = vrot.slane %v1315, %v1322
    %v1325 = vunpack.c.l.s4 1934713408
    %v1326 = vunpack.c.0.s8 %v1325
    %v1327 = vlaneseq
    %v1328 = vshrl.u32 %v1327, 7
    %v1329 = vsub.s32 %v1326, %v1328
    %v1330 = vrot.slane %v1316, %v1329
    %v1331 = vcombine.low %v1266, %v1282
    %v1332 = vcombine.high %v1266, %v1282
    %v1334 = vunpack.c.l.s4 1934713408
    %v1335 = vunpack.c.0.s8 %v1334
    %v1336 = vlaneseq
    %v1337 = vshrl.u32 %v1336, 7
    %v1338 = vsub.s32 %v1335, %v1337
    %v1339 = vrot.slane %v1331, %v1338
    %v1341 = vunpack.c.l.s4 1934713408
    %v1342 = vunpack.c.0.s8 %v1341
    %v1343 = vlaneseq
    %v1344 = vshrl.u32 %v1343, 7
    %v1345 = vsub.s32 %v1342, %v1344
    %v1346 = vrot.slane %v1332, %v1345
    %v1347 = vcombine.low %v1291, %v1323
    %v1348 = vcombine.high %v1291, %v1323
    %v1349 = vcombine.low %v1298, %v1330
    %v1350 = vcombine.high %v1298, %v1330
    %v1351 = vcombine.low %v1307, %v1339
    %v1352 = vcombine.high %v1307, %v1339
    %v1353 = vcombine.low %v1314, %v1346
    %v1354 = vcombine.high %v1314, %v1346
    %v1355 = vcombine.low %v1211, %v1213
    %v1356 = vcombine.high %v1211, %v1213
    %v1358 = vunpack.c.l.s4 1983009808
    %v1359 = vunpack.c.0.s8 %v1358
    %v1360 = vlaneseq
    %v1361 = vshrl.u32 %v1360, 7
    %v1362 = vsub.s32 %v1359, %v1361
    %v1363 = vrot.slane %v1355, %v1362
    %v1365 = vunpack.c.l.s4 1983009808
    %v1366 = vunpack.c.0.s8 %v1365
    %v1367 = vlaneseq
    %v1368 = vshrl.u32 %v1367, 7
    %v1369 = vsub.s32 %v1366, %v1368
    %v1370 = vrot.slane %v1356, %v1369
    %v1371 = vcombine.low %v1212, %v1214
    %v1372 = vcombine.high %v1212, %v1214
    %v1374 = vunpack.c.l.s4 1983009808
    %v1375 = vunpack.c.0.s8 %v1374
    %v1376 = vlaneseq
    %v1377 = vshrl.u32 %v1376, 7
    %v1378 = vsub.s32 %v1375, %v1377
    %v1379 = vrot.slane %v1371, %v1378
    %v1381 = vunpack.c.l.s4 1983009808
    %v1382 = vunpack.c.0.s8 %v1381
    %v1383 = vlaneseq
    %v1384 = vshrl.u32 %v1383, 7
    %v1385 = vsub.s32 %v1382, %v1384
    %v1386 = vrot.slane %v1372, %v1385
    %v1387 = vcombine.low %v1215, %v1217
    %v1388 = vcombine.high %v1215, %v1217
    %v1390 = vunpack.c.l.s4 1983009808
    %v1391 = vunpack.c.0.s8 %v1390
    %v1392 = vlaneseq
    %v1393 = vshrl.u32 %v1392, 7
    %v1394 = vsub.s32 %v1391, %v1393
    %v1395 = vrot.slane %v1387, %v1394
    %v1397 = vunpack.c.l.s4 1983009808
    %v1398 = vunpack.c.0.s8 %v1397
    %v1399 = vlaneseq
    %v1400 = vshrl.u32 %v1399, 7
    %v1401 = vsub.s32 %v1398, %v1400
    %v1402 = vrot.slane %v1388, %v1401
    %v1403 = vcombine.low %v1216, %v1218
    %v1404 = vcombine.high %v1216, %v1218
    %v1406 = vunpack.c.l.s4 1983009808
    %v1407 = vunpack.c.0.s8 %v1406
    %v1408 = vlaneseq
    %v1409 = vshrl.u32 %v1408, 7
    %v1410 = vsub.s32 %v1407, %v1409
    %v1411 = vrot.slane %v1403, %v1410
    %v1413 = vunpack.c.l.s4 1983009808
    %v1414 = vunpack.c.0.s8 %v1413
    %v1415 = vlaneseq
    %v1416 = vshrl.u32 %v1415, 7
    %v1417 = vsub.s32 %v1414, %v1416
    %v1418 = vrot.slane %v1404, %v1417
    %v1419 = vcombine.low %v1363, %v1379
    %v1420 = vcombine.high %v1363, %v1379
    %v1422 = vunpack.c.l.s4 1934713408
    %v1423 = vunpack.c.0.s8 %v1422
    %v1424 = vlaneseq
    %v1425 = vshrl.u32 %v1424, 7
    %v1426 = vsub.s32 %v1423, %v1425
    %v1427 = vrot.slane %v1419, %v1426
    %v1429 = vunpack.c.l.s4 1934713408
    %v1430 = vunpack.c.0.s8 %v1429
    %v1431 = vlaneseq
    %v1432 = vshrl.u32 %v1431, 7
    %v1433 = vsub.s32 %v1430, %v1432
    %v1434 = vrot.slane %v1420, %v1433
    %v1435 = vcombine.low %v1370, %v1386
    %v1436 = vcombine.high %v1370, %v1386
    %v1438 = vunpack.c.l.s4 1934713408
    %v1439 = vunpack.c.0.s8 %v1438
    %v1440 = vlaneseq
    %v1441 = vshrl.u32 %v1440, 7
    %v1442 = vsub.s32 %v1439, %v1441
    %v1443 = vrot.slane %v1435, %v1442
    %v1445 = vunpack.c.l.s4 1934713408
    %v1446 = vunpack.c.0.s8 %v1445
    %v1447 = vlaneseq
    %v1448 = vshrl.u32 %v1447, 7
    %v1449 = vsub.s32 %v1446, %v1448
    %v1450 = vrot.slane %v1436, %v1449
    %v1451 = vcombine.low %v1395, %v1411
    %v1452 = vcombine.high %v1395, %v1411
    %v1454 = vunpack.c.l.s4 1934713408
    %v1455 = vunpack.c.0.s8 %v1454
    %v1456 = vlaneseq
    %v1457 = vshrl.u32 %v1456, 7
    %v1458 = vsub.s32 %v1455, %v1457
    %v1459 = vrot.slane %v1451, %v1458
    %v1461 = vunpack.c.l.s4 1934713408
    %v1462 = vunpack.c.0.s8 %v1461
    %v1463 = vlaneseq
    %v1464 = vshrl.u32 %v1463, 7
    %v1465 = vsub.s32 %v1462, %v1464
    %v1466 = vrot.slane %v1452, %v1465
    %v1467 = vcombine.low %v1402, %v1418
    %v1468 = vcombine.high %v1402, %v1418
    %v1470 = vunpack.c.l.s4 1934713408
    %v1471 = vunpack.c.0.s8 %v1470
    %v1472 = vlaneseq
    %v1473 = vshrl.u32 %v1472, 7
    %v1474 = vsub.s32 %v1471, %v1473
    %v1475 = vrot.slane %v1467, %v1474
    %v1477 = vunpack.c.l.s4 1934713408
    %v1478 = vunpack.c.0.s8 %v1477
    %v1479 = vlaneseq
    %v1480 = vshrl.u32 %v1479, 7
    %v1481 = vsub.s32 %v1478, %v1480
    %v1482 = vrot.slane %v1468, %v1481
    %v1483 = vcombine.low %v1427, %v1459
    %v1484 = vcombine.high %v1427, %v1459
    %v1485 = vcombine.low %v1434, %v1466
    %v1486 = vcombine.high %v1434, %v1466
    %v1487 = vcombine.low %v1443, %v1475
    %v1488 = vcombine.high %v1443, %v1475
    %v1489 = vcombine.low %v1450, %v1482
    %v1490 = vcombine.high %v1450, %v1482
    %v1491 = vcombine.low %v1347, %v1349
    %v1492 = vcombine.high %v1347, %v1349
    %v1494 = vunpack.c.l.s4 1983009808
    %v1495 = vunpack.c.0.s8 %v1494
    %v1496 = vlaneseq
    %v1497 = vshrl.u32 %v1496, 7
    %v1498 = vsub.s32 %v1495, %v1497
    %v1499 = vrot.slane %v1491, %v1498
    %v1501 = vunpack.c.l.s4 1983009808
    %v1502 = vunpack.c.0.s8 %v1501
    %v1503 = vlaneseq
    %v1504 = vshrl.u32 %v1503, 7
    %v1505 = vsub.s32 %v1502, %v1504
    %v1506 = vrot.slane %v1492, %v1505
    %v1507 = vcombine.low %v1348, %v1350
    %v1508 = vcombine.high %v1348, %v1350
    %v1510 = vunpack.c.l.s4 1983009808
    %v1511 = vunpack.c.0.s8 %v1510
    %v1512 = vlaneseq
    %v1513 = vshrl.u32 %v1512, 7
    %v1514 = vsub.s32 %v1511, %v1513
    %v1515 = vrot.slane %v1507, %v1514
    %v1517 = vunpack.c.l.s4 1983009808
    %v1518 = vunpack.c.0.s8 %v1517
    %v1519 = vlaneseq
    %v1520 = vshrl.u32 %v1519, 7
    %v1521 = vsub.s32 %v1518, %v1520
    %v1522 = vrot.slane %v1508, %v1521
    %v1523 = vcombine.low %v1351, %v1353
    %v1524 = vcombine.high %v1351, %v1353
    %v1526 = vunpack.c.l.s4 1983009808
    %v1527 = vunpack.c.0.s8 %v1526
    %v1528 = vlaneseq
    %v1529 = vshrl.u32 %v1528, 7
    %v1530 = vsub.s32 %v1527, %v1529
    %v1531 = vrot.slane %v1523, %v1530
    %v1533 = vunpack.c.l.s4 1983009808
    %v1534 = vunpack.c.0.s8 %v1533
    %v1535 = vlaneseq
    %v1536 = vshrl.u32 %v1535, 7
    %v1537 = vsub.s32 %v1534, %v1536
    %v1538 = vrot.slane %v1524, %v1537
    %v1539 = vcombine.low %v1352, %v1354
    %v1540 = vcombine.high %v1352, %v1354
    %v1542 = vunpack.c.l.s4 1983009808
    %v1543 = vunpack.c.0.s8 %v1542
    %v1544 = vlaneseq
    %v1545 = vshrl.u32 %v1544, 7
    %v1546 = vsub.s32 %v1543, %v1545
    %v1547 = vrot.slane %v1539, %v1546
    %v1549 = vunpack.c.l.s4 1983009808
    %v1550 = vunpack.c.0.s8 %v1549
    %v1551 = vlaneseq
    %v1552 = vshrl.u32 %v1551, 7
    %v1553 = vsub.s32 %v1550, %v1552
    %v1554 = vrot.slane %v1540, %v1553
    %v1555 = vcombine.low %v1499, %v1515
    %v1556 = vcombine.high %v1499, %v1515
    %v1558 = vunpack.c.l.s4 1934713408
    %v1559 = vunpack.c.0.s8 %v1558
    %v1560 = vlaneseq
    %v1561 = vshrl.u32 %v1560, 7
    %v1562 = vsub.s32 %v1559, %v1561
    %v1563 = vrot.slane %v1555, %v1562
    %v1565 = vunpack.c.l.s4 1934713408
    %v1566 = vunpack.c.0.s8 %v1565
    %v1567 = vlaneseq
    %v1568 = vshrl.u32 %v1567, 7
    %v1569 = vsub.s32 %v1566, %v1568
    %v1570 = vrot.slane %v1556, %v1569
    %v1571 = vcombine.low %v1506, %v1522
    %v1572 = vcombine.high %v1506, %v1522
    %v1574 = vunpack.c.l.s4 1934713408
    %v1575 = vunpack.c.0.s8 %v1574
    %v1576 = vlaneseq
    %v1577 = vshrl.u32 %v1576, 7
    %v1578 = vsub.s32 %v1575, %v1577
    %v1579 = vrot.slane %v1571, %v1578
    %v1581 = vunpack.c.l.s4 1934713408
    %v1582 = vunpack.c.0.s8 %v1581
    %v1583 = vlaneseq
    %v1584 = vshrl.u32 %v1583, 7
    %v1585 = vsub.s32 %v1582, %v1584
    %v1586 = vrot.slane %v1572, %v1585
    %v1587 = vcombine.low %v1531, %v1547
    %v1588 = vcombine.high %v1531, %v1547
    %v1590 = vunpack.c.l.s4 1934713408
    %v1591 = vunpack.c.0.s8 %v1590
    %v1592 = vlaneseq
    %v1593 = vshrl.u32 %v1592, 7
    %v1594 = vsub.s32 %v1591, %v1593
    %v1595 = vrot.slane %v1587, %v1594
    %v1597 = vunpack.c.l.s4 1934713408
    %v1598 = vunpack.c.0.s8 %v1597
    %v1599 = vlaneseq
    %v1600 = vshrl.u32 %v1599, 7
    %v1601 = vsub.s32 %v1598, %v1600
    %v1602 = vrot.slane %v1588, %v1601
    %v1603 = vcombine.low %v1538, %v1554
    %v1604 = vcombine.high %v1538, %v1554
    %v1606 = vunpack.c.l.s4 1934713408
    %v1607 = vunpack.c.0.s8 %v1606
    %v1608 = vlaneseq
    %v1609 = vshrl.u32 %v1608, 7
    %v1610 = vsub.s32 %v1607, %v1609
    %v1611 = vrot.slane %v1603, %v1610
    %v1613 = vunpack.c.l.s4 1934713408
    %v1614 = vunpack.c.0.s8 %v1613
    %v1615 = vlaneseq
    %v1616 = vshrl.u32 %v1615, 7
    %v1617 = vsub.s32 %v1614, %v1616
    %v1618 = vrot.slane %v1604, %v1617
    %v1619 = vcombine.low %v1563, %v1595
    %v1620 = vcombine.high %v1563, %v1595
    %v1621 = vcombine.low %v1570, %v1602
    %v1622 = vcombine.high %v1570, %v1602
    %v1623 = vcombine.low %v1579, %v1611
    %v1624 = vcombine.high %v1579, %v1611
    %v1625 = vcombine.low %v1586, %v1618
    %v1626 = vcombine.high %v1586, %v1618
    %v1627 = vpack.c.bf16 %v1483, %v1483
    %v1628 = vpack.c.bf16 %v1484, %v1484
    %v1629 = vpack.c.bf16 %v1485, %v1485
    %v1630 = vpack.c.bf16 %v1486, %v1486
    %v1631 = vpack.c.bf16 %v1487, %v1487
    %v1632 = vpack.c.bf16 %v1488, %v1488
    %v1633 = vpack.c.bf16 %v1489, %v1489
    %v1634 = vpack.c.bf16 %v1490, %v1490
    %v1635 = vpack.c.bf16 %v1619, %v1619
    %v1636 = vpack.c.bf16 %v1620, %v1620
    %v1637 = vpack.c.bf16 %v1621, %v1621
    %v1638 = vpack.c.bf16 %v1622, %v1622
    %v1639 = vpack.c.bf16 %v1623, %v1623
    %v1640 = vpack.c.bf16 %v1624, %v1624
    %v1641 = vpack.c.bf16 %v1625, %v1625
    %v1642 = vpack.c.bf16 %v1626, %v1626
    %1645 = vrot.lane.b32.xlu0 %v429, 112
    %v1646 = vpop.permute.xlu0 %1645
    %1647 = vrot.lane.b32.xlu0 %v432, 112
    %v1648 = vpop.permute.xlu0 %1647
    %1651 = vrot.lane.b32.xlu0 %v429, 96
    %v1652 = vpop.permute.xlu0 %1651
    %1653 = vrot.lane.b32.xlu0 %v432, 96
    %v1654 = vpop.permute.xlu0 %1653
    %1657 = vrot.lane.b32.xlu0 %v429, 80
    %v1658 = vpop.permute.xlu0 %1657
    %1659 = vrot.lane.b32.xlu0 %v432, 80
    %v1660 = vpop.permute.xlu0 %1659
    %1663 = vrot.lane.b32.xlu0 %v429, 64
    %v1664 = vpop.permute.xlu0 %1663
    %1665 = vrot.lane.b32.xlu0 %v432, 64
    %v1666 = vpop.permute.xlu0 %1665
    %1669 = vrot.lane.b32.xlu0 %v429, 48
    %v1670 = vpop.permute.xlu0 %1669
    %1671 = vrot.lane.b32.xlu0 %v432, 48
    %v1672 = vpop.permute.xlu0 %1671
    %1675 = vrot.lane.b32.xlu0 %v429, 32
    %v1676 = vpop.permute.xlu0 %1675
    %1677 = vrot.lane.b32.xlu0 %v432, 32
    %v1678 = vpop.permute.xlu0 %1677
    %1681 = vrot.lane.b32.xlu0 %v429, 16
    %v1682 = vpop.permute.xlu0 %1681
    %1683 = vrot.lane.b32.xlu0 %v432, 16
    %v1684 = vpop.permute.xlu0 %1683
    %v1687 = vcombine.low %v429, %v1652
    %v1688 = vcombine.high %v429, %v1652
    %v1690 = vunpack.c.l.s4 1983009808
    %v1691 = vunpack.c.0.s8 %v1690
    %v1692 = vlaneseq
    %v1693 = vshrl.u32 %v1692, 7
    %v1694 = vsub.s32 %v1691, %v1693
    %v1695 = vrot.slane %v1687, %v1694
    %v1697 = vunpack.c.l.s4 1983009808
    %v1698 = vunpack.c.0.s8 %v1697
    %v1699 = vlaneseq
    %v1700 = vshrl.u32 %v1699, 7
    %v1701 = vsub.s32 %v1698, %v1700
    %v1702 = vrot.slane %v1688, %v1701
    %v1703 = vcombine.low %v1646, %v1658
    %v1704 = vcombine.high %v1646, %v1658
    %v1706 = vunpack.c.l.s4 1983009808
    %v1707 = vunpack.c.0.s8 %v1706
    %v1708 = vlaneseq
    %v1709 = vshrl.u32 %v1708, 7
    %v1710 = vsub.s32 %v1707, %v1709
    %v1711 = vrot.slane %v1703, %v1710
    %v1713 = vunpack.c.l.s4 1983009808
    %v1714 = vunpack.c.0.s8 %v1713
    %v1715 = vlaneseq
    %v1716 = vshrl.u32 %v1715, 7
    %v1717 = vsub.s32 %v1714, %v1716
    %v1718 = vrot.slane %v1704, %v1717
    %v1719 = vcombine.low %v1664, %v1676
    %v1720 = vcombine.high %v1664, %v1676
    %v1722 = vunpack.c.l.s4 1983009808
    %v1723 = vunpack.c.0.s8 %v1722
    %v1724 = vlaneseq
    %v1725 = vshrl.u32 %v1724, 7
    %v1726 = vsub.s32 %v1723, %v1725
    %v1727 = vrot.slane %v1719, %v1726
    %v1729 = vunpack.c.l.s4 1983009808
    %v1730 = vunpack.c.0.s8 %v1729
    %v1731 = vlaneseq
    %v1732 = vshrl.u32 %v1731, 7
    %v1733 = vsub.s32 %v1730, %v1732
    %v1734 = vrot.slane %v1720, %v1733
    %v1735 = vcombine.low %v1670, %v1682
    %v1736 = vcombine.high %v1670, %v1682
    %v1738 = vunpack.c.l.s4 1983009808
    %v1739 = vunpack.c.0.s8 %v1738
    %v1740 = vlaneseq
    %v1741 = vshrl.u32 %v1740, 7
    %v1742 = vsub.s32 %v1739, %v1741
    %v1743 = vrot.slane %v1735, %v1742
    %v1745 = vunpack.c.l.s4 1983009808
    %v1746 = vunpack.c.0.s8 %v1745
    %v1747 = vlaneseq
    %v1748 = vshrl.u32 %v1747, 7
    %v1749 = vsub.s32 %v1746, %v1748
    %v1750 = vrot.slane %v1736, %v1749
    %v1751 = vcombine.low %v1695, %v1711
    %v1752 = vcombine.high %v1695, %v1711
    %v1754 = vunpack.c.l.s4 1934713408
    %v1755 = vunpack.c.0.s8 %v1754
    %v1756 = vlaneseq
    %v1757 = vshrl.u32 %v1756, 7
    %v1758 = vsub.s32 %v1755, %v1757
    %v1759 = vrot.slane %v1751, %v1758
    %v1761 = vunpack.c.l.s4 1934713408
    %v1762 = vunpack.c.0.s8 %v1761
    %v1763 = vlaneseq
    %v1764 = vshrl.u32 %v1763, 7
    %v1765 = vsub.s32 %v1762, %v1764
    %v1766 = vrot.slane %v1752, %v1765
    %v1767 = vcombine.low %v1702, %v1718
    %v1768 = vcombine.high %v1702, %v1718
    %v1770 = vunpack.c.l.s4 1934713408
    %v1771 = vunpack.c.0.s8 %v1770
    %v1772 = vlaneseq
    %v1773 = vshrl.u32 %v1772, 7
    %v1774 = vsub.s32 %v1771, %v1773
    %v1775 = vrot.slane %v1767, %v1774
    %v1777 = vunpack.c.l.s4 1934713408
    %v1778 = vunpack.c.0.s8 %v1777
    %v1779 = vlaneseq
    %v1780 = vshrl.u32 %v1779, 7
    %v1781 = vsub.s32 %v1778, %v1780
    %v1782 = vrot.slane %v1768, %v1781
    %v1783 = vcombine.low %v1727, %v1743
    %v1784 = vcombine.high %v1727, %v1743
    %v1786 = vunpack.c.l.s4 1934713408
    %v1787 = vunpack.c.0.s8 %v1786
    %v1788 = vlaneseq
    %v1789 = vshrl.u32 %v1788, 7
    %v1790 = vsub.s32 %v1787, %v1789
    %v1791 = vrot.slane %v1783, %v1790
    %v1793 = vunpack.c.l.s4 1934713408
    %v1794 = vunpack.c.0.s8 %v1793
    %v1795 = vlaneseq
    %v1796 = vshrl.u32 %v1795, 7
    %v1797 = vsub.s32 %v1794, %v1796
    %v1798 = vrot.slane %v1784, %v1797
    %v1799 = vcombine.low %v1734, %v1750
    %v1800 = vcombine.high %v1734, %v1750
    %v1802 = vunpack.c.l.s4 1934713408
    %v1803 = vunpack.c.0.s8 %v1802
    %v1804 = vlaneseq
    %v1805 = vshrl.u32 %v1804, 7
    %v1806 = vsub.s32 %v1803, %v1805
    %v1807 = vrot.slane %v1799, %v1806
    %v1809 = vunpack.c.l.s4 1934713408
    %v1810 = vunpack.c.0.s8 %v1809
    %v1811 = vlaneseq
    %v1812 = vshrl.u32 %v1811, 7
    %v1813 = vsub.s32 %v1810, %v1812
    %v1814 = vrot.slane %v1800, %v1813
    %v1815 = vcombine.low %v1759, %v1791
    %v1816 = vcombine.high %v1759, %v1791
    %v1817 = vcombine.low %v1766, %v1798
    %v1818 = vcombine.high %v1766, %v1798
    %v1819 = vcombine.low %v1775, %v1807
    %v1820 = vcombine.high %v1775, %v1807
    %v1821 = vcombine.low %v1782, %v1814
    %v1822 = vcombine.high %v1782, %v1814
    %v1823 = vcombine.low %v432, %v1654
    %v1824 = vcombine.high %v432, %v1654
    %v1826 = vunpack.c.l.s4 1983009808
    %v1827 = vunpack.c.0.s8 %v1826
    %v1828 = vlaneseq
    %v1829 = vshrl.u32 %v1828, 7
    %v1830 = vsub.s32 %v1827, %v1829
    %v1831 = vrot.slane %v1823, %v1830
    %v1833 = vunpack.c.l.s4 1983009808
    %v1834 = vunpack.c.0.s8 %v1833
    %v1835 = vlaneseq
    %v1836 = vshrl.u32 %v1835, 7
    %v1837 = vsub.s32 %v1834, %v1836
    %v1838 = vrot.slane %v1824, %v1837
    %v1839 = vcombine.low %v1648, %v1660
    %v1840 = vcombine.high %v1648, %v1660
    %v1842 = vunpack.c.l.s4 1983009808
    %v1843 = vunpack.c.0.s8 %v1842
    %v1844 = vlaneseq
    %v1845 = vshrl.u32 %v1844, 7
    %v1846 = vsub.s32 %v1843, %v1845
    %v1847 = vrot.slane %v1839, %v1846
    %v1849 = vunpack.c.l.s4 1983009808
    %v1850 = vunpack.c.0.s8 %v1849
    %v1851 = vlaneseq
    %v1852 = vshrl.u32 %v1851, 7
    %v1853 = vsub.s32 %v1850, %v1852
    %v1854 = vrot.slane %v1840, %v1853
    %v1855 = vcombine.low %v1666, %v1678
    %v1856 = vcombine.high %v1666, %v1678
    %v1858 = vunpack.c.l.s4 1983009808
    %v1859 = vunpack.c.0.s8 %v1858
    %v1860 = vlaneseq
    %v1861 = vshrl.u32 %v1860, 7
    %v1862 = vsub.s32 %v1859, %v1861
    %v1863 = vrot.slane %v1855, %v1862
    %v1865 = vunpack.c.l.s4 1983009808
    %v1866 = vunpack.c.0.s8 %v1865
    %v1867 = vlaneseq
    %v1868 = vshrl.u32 %v1867, 7
    %v1869 = vsub.s32 %v1866, %v1868
    %v1870 = vrot.slane %v1856, %v1869
    %v1871 = vcombine.low %v1672, %v1684
    %v1872 = vcombine.high %v1672, %v1684
    %v1874 = vunpack.c.l.s4 1983009808
    %v1875 = vunpack.c.0.s8 %v1874
    %v1876 = vlaneseq
    %v1877 = vshrl.u32 %v1876, 7
    %v1878 = vsub.s32 %v1875, %v1877
    %v1879 = vrot.slane %v1871, %v1878
    %v1881 = vunpack.c.l.s4 1983009808
    %v1882 = vunpack.c.0.s8 %v1881
    %v1883 = vlaneseq
    %v1884 = vshrl.u32 %v1883, 7
    %v1885 = vsub.s32 %v1882, %v1884
    %v1886 = vrot.slane %v1872, %v1885
    %v1887 = vcombine.low %v1831, %v1847
    %v1888 = vcombine.high %v1831, %v1847
    %v1890 = vunpack.c.l.s4 1934713408
    %v1891 = vunpack.c.0.s8 %v1890
    %v1892 = vlaneseq
    %v1893 = vshrl.u32 %v1892, 7
    %v1894 = vsub.s32 %v1891, %v1893
    %v1895 = vrot.slane %v1887, %v1894
    %v1897 = vunpack.c.l.s4 1934713408
    %v1898 = vunpack.c.0.s8 %v1897
    %v1899 = vlaneseq
    %v1900 = vshrl.u32 %v1899, 7
    %v1901 = vsub.s32 %v1898, %v1900
    %v1902 = vrot.slane %v1888, %v1901
    %v1903 = vcombine.low %v1838, %v1854
    %v1904 = vcombine.high %v1838, %v1854
    %v1906 = vunpack.c.l.s4 1934713408
    %v1907 = vunpack.c.0.s8 %v1906
    %v1908 = vlaneseq
    %v1909 = vshrl.u32 %v1908, 7
    %v1910 = vsub.s32 %v1907, %v1909
    %v1911 = vrot.slane %v1903, %v1910
    %v1913 = vunpack.c.l.s4 1934713408
    %v1914 = vunpack.c.0.s8 %v1913
    %v1915 = vlaneseq
    %v1916 = vshrl.u32 %v1915, 7
    %v1917 = vsub.s32 %v1914, %v1916
    %v1918 = vrot.slane %v1904, %v1917
    %v1919 = vcombine.low %v1863, %v1879
    %v1920 = vcombine.high %v1863, %v1879
    %v1922 = vunpack.c.l.s4 1934713408
    %v1923 = vunpack.c.0.s8 %v1922
    %v1924 = vlaneseq
    %v1925 = vshrl.u32 %v1924, 7
    %v1926 = vsub.s32 %v1923, %v1925
    %v1927 = vrot.slane %v1919, %v1926
    %v1929 = vunpack.c.l.s4 1934713408
    %v1930 = vunpack.c.0.s8 %v1929
    %v1931 = vlaneseq
    %v1932 = vshrl.u32 %v1931, 7
    %v1933 = vsub.s32 %v1930, %v1932
    %v1934 = vrot.slane %v1920, %v1933
    %v1935 = vcombine.low %v1870, %v1886
    %v1936 = vcombine.high %v1870, %v1886
    %v1938 = vunpack.c.l.s4 1934713408
    %v1939 = vunpack.c.0.s8 %v1938
    %v1940 = vlaneseq
    %v1941 = vshrl.u32 %v1940, 7
    %v1942 = vsub.s32 %v1939, %v1941
    %v1943 = vrot.slane %v1935, %v1942
    %v1945 = vunpack.c.l.s4 1934713408
    %v1946 = vunpack.c.0.s8 %v1945
    %v1947 = vlaneseq
    %v1948 = vshrl.u32 %v1947, 7
    %v1949 = vsub.s32 %v1946, %v1948
    %v1950 = vrot.slane %v1936, %v1949
    %v1951 = vcombine.low %v1895, %v1927
    %v1952 = vcombine.high %v1895, %v1927
    %v1953 = vcombine.low %v1902, %v1934
    %v1954 = vcombine.high %v1902, %v1934
    %v1955 = vcombine.low %v1911, %v1943
    %v1956 = vcombine.high %v1911, %v1943
    %v1957 = vcombine.low %v1918, %v1950
    %v1958 = vcombine.high %v1918, %v1950
    %v1959 = vcombine.low %v1815, %v1817
    %v1960 = vcombine.high %v1815, %v1817
    %v1962 = vunpack.c.l.s4 1983009808
    %v1963 = vunpack.c.0.s8 %v1962
    %v1964 = vlaneseq
    %v1965 = vshrl.u32 %v1964, 7
    %v1966 = vsub.s32 %v1963, %v1965
    %v1967 = vrot.slane %v1959, %v1966
    %v1969 = vunpack.c.l.s4 1983009808
    %v1970 = vunpack.c.0.s8 %v1969
    %v1971 = vlaneseq
    %v1972 = vshrl.u32 %v1971, 7
    %v1973 = vsub.s32 %v1970, %v1972
    %v1974 = vrot.slane %v1960, %v1973
    %v1975 = vcombine.low %v1816, %v1818
    %v1976 = vcombine.high %v1816, %v1818
    %v1978 = vunpack.c.l.s4 1983009808
    %v1979 = vunpack.c.0.s8 %v1978
    %v1980 = vlaneseq
    %v1981 = vshrl.u32 %v1980, 7
    %v1982 = vsub.s32 %v1979, %v1981
    %v1983 = vrot.slane %v1975, %v1982
    %v1985 = vunpack.c.l.s4 1983009808
    %v1986 = vunpack.c.0.s8 %v1985
    %v1987 = vlaneseq
    %v1988 = vshrl.u32 %v1987, 7
    %v1989 = vsub.s32 %v1986, %v1988
    %v1990 = vrot.slane %v1976, %v1989
    %v1991 = vcombine.low %v1819, %v1821
    %v1992 = vcombine.high %v1819, %v1821
    %v1994 = vunpack.c.l.s4 1983009808
    %v1995 = vunpack.c.0.s8 %v1994
    %v1996 = vlaneseq
    %v1997 = vshrl.u32 %v1996, 7
    %v1998 = vsub.s32 %v1995, %v1997
    %v1999 = vrot.slane %v1991, %v1998
    %v2001 = vunpack.c.l.s4 1983009808
    %v2002 = vunpack.c.0.s8 %v2001
    %v2003 = vlaneseq
    %v2004 = vshrl.u32 %v2003, 7
    %v2005 = vsub.s32 %v2002, %v2004
    %v2006 = vrot.slane %v1992, %v2005
    %v2007 = vcombine.low %v1820, %v1822
    %v2008 = vcombine.high %v1820, %v1822
    %v2010 = vunpack.c.l.s4 1983009808
    %v2011 = vunpack.c.0.s8 %v2010
    %v2012 = vlaneseq
    %v2013 = vshrl.u32 %v2012, 7
    %v2014 = vsub.s32 %v2011, %v2013
    %v2015 = vrot.slane %v2007, %v2014
    %v2017 = vunpack.c.l.s4 1983009808
    %v2018 = vunpack.c.0.s8 %v2017
    %v2019 = vlaneseq
    %v2020 = vshrl.u32 %v2019, 7
    %v2021 = vsub.s32 %v2018, %v2020
    %v2022 = vrot.slane %v2008, %v2021
    %v2023 = vcombine.low %v1967, %v1983
    %v2024 = vcombine.high %v1967, %v1983
    %v2026 = vunpack.c.l.s4 1934713408
    %v2027 = vunpack.c.0.s8 %v2026
    %v2028 = vlaneseq
    %v2029 = vshrl.u32 %v2028, 7
    %v2030 = vsub.s32 %v2027, %v2029
    %v2031 = vrot.slane %v2023, %v2030
    %v2033 = vunpack.c.l.s4 1934713408
    %v2034 = vunpack.c.0.s8 %v2033
    %v2035 = vlaneseq
    %v2036 = vshrl.u32 %v2035, 7
    %v2037 = vsub.s32 %v2034, %v2036
    %v2038 = vrot.slane %v2024, %v2037
    %v2039 = vcombine.low %v1974, %v1990
    %v2040 = vcombine.high %v1974, %v1990
    %v2042 = vunpack.c.l.s4 1934713408
    %v2043 = vunpack.c.0.s8 %v2042
    %v2044 = vlaneseq
    %v2045 = vshrl.u32 %v2044, 7
    %v2046 = vsub.s32 %v2043, %v2045
    %v2047 = vrot.slane %v2039, %v2046
    %v2049 = vunpack.c.l.s4 1934713408
    %v2050 = vunpack.c.0.s8 %v2049
    %v2051 = vlaneseq
    %v2052 = vshrl.u32 %v2051, 7
    %v2053 = vsub.s32 %v2050, %v2052
    %v2054 = vrot.slane %v2040, %v2053
    %v2055 = vcombine.low %v1999, %v2015
    %v2056 = vcombine.high %v1999, %v2015
    %v2058 = vunpack.c.l.s4 1934713408
    %v2059 = vunpack.c.0.s8 %v2058
    %v2060 = vlaneseq
    %v2061 = vshrl.u32 %v2060, 7
    %v2062 = vsub.s32 %v2059, %v2061
    %v2063 = vrot.slane %v2055, %v2062
    %v2065 = vunpack.c.l.s4 1934713408
    %v2066 = vunpack.c.0.s8 %v2065
    %v2067 = vlaneseq
    %v2068 = vshrl.u32 %v2067, 7
    %v2069 = vsub.s32 %v2066, %v2068
    %v2070 = vrot.slane %v2056, %v2069
    %v2071 = vcombine.low %v2006, %v2022
    %v2072 = vcombine.high %v2006, %v2022
    %v2074 = vunpack.c.l.s4 1934713408
    %v2075 = vunpack.c.0.s8 %v2074
    %v2076 = vlaneseq
    %v2077 = vshrl.u32 %v2076, 7
    %v2078 = vsub.s32 %v2075, %v2077
    %v2079 = vrot.slane %v2071, %v2078
    %v2081 = vunpack.c.l.s4 1934713408
    %v2082 = vunpack.c.0.s8 %v2081
    %v2083 = vlaneseq
    %v2084 = vshrl.u32 %v2083, 7
    %v2085 = vsub.s32 %v2082, %v2084
    %v2086 = vrot.slane %v2072, %v2085
    %v2087 = vcombine.low %v2031, %v2063
    %v2088 = vcombine.high %v2031, %v2063
    %v2089 = vcombine.low %v2038, %v2070
    %v2090 = vcombine.high %v2038, %v2070
    %v2091 = vcombine.low %v2047, %v2079
    %v2092 = vcombine.high %v2047, %v2079
    %v2093 = vcombine.low %v2054, %v2086
    %v2094 = vcombine.high %v2054, %v2086
    %v2095 = vcombine.low %v1951, %v1953
    %v2096 = vcombine.high %v1951, %v1953
    %v2098 = vunpack.c.l.s4 1983009808
    %v2099 = vunpack.c.0.s8 %v2098
    %v2100 = vlaneseq
    %v2101 = vshrl.u32 %v2100, 7
    %v2102 = vsub.s32 %v2099, %v2101
    %v2103 = vrot.slane %v2095, %v2102
    %v2105 = vunpack.c.l.s4 1983009808
    %v2106 = vunpack.c.0.s8 %v2105
    %v2107 = vlaneseq
    %v2108 = vshrl.u32 %v2107, 7
    %v2109 = vsub.s32 %v2106, %v2108
    %v2110 = vrot.slane %v2096, %v2109
    %v2111 = vcombine.low %v1952, %v1954
    %v2112 = vcombine.high %v1952, %v1954
    %v2114 = vunpack.c.l.s4 1983009808
    %v2115 = vunpack.c.0.s8 %v2114
    %v2116 = vlaneseq
    %v2117 = vshrl.u32 %v2116, 7
    %v2118 = vsub.s32 %v2115, %v2117
    %v2119 = vrot.slane %v2111, %v2118
    %v2121 = vunpack.c.l.s4 1983009808
    %v2122 = vunpack.c.0.s8 %v2121
    %v2123 = vlaneseq
    %v2124 = vshrl.u32 %v2123, 7
    %v2125 = vsub.s32 %v2122, %v2124
    %v2126 = vrot.slane %v2112, %v2125
    %v2127 = vcombine.low %v1955, %v1957
    %v2128 = vcombine.high %v1955, %v1957
    %v2130 = vunpack.c.l.s4 1983009808
    %v2131 = vunpack.c.0.s8 %v2130
    %v2132 = vlaneseq
    %v2133 = vshrl.u32 %v2132, 7
    %v2134 = vsub.s32 %v2131, %v2133
    %v2135 = vrot.slane %v2127, %v2134
    %v2137 = vunpack.c.l.s4 1983009808
    %v2138 = vunpack.c.0.s8 %v2137
    %v2139 = vlaneseq
    %v2140 = vshrl.u32 %v2139, 7
    %v2141 = vsub.s32 %v2138, %v2140
    %v2142 = vrot.slane %v2128, %v2141
    %v2143 = vcombine.low %v1956, %v1958
    %v2144 = vcombine.high %v1956, %v1958
    %v2146 = vunpack.c.l.s4 1983009808
    %v2147 = vunpack.c.0.s8 %v2146
    %v2148 = vlaneseq
    %v2149 = vshrl.u32 %v2148, 7
    %v2150 = vsub.s32 %v2147, %v2149
    %v2151 = vrot.slane %v2143, %v2150
    %v2153 = vunpack.c.l.s4 1983009808
    %v2154 = vunpack.c.0.s8 %v2153
    %v2155 = vlaneseq
    %v2156 = vshrl.u32 %v2155, 7
    %v2157 = vsub.s32 %v2154, %v2156
    %v2158 = vrot.slane %v2144, %v2157
    %v2159 = vcombine.low %v2103, %v2119
    %v2160 = vcombine.high %v2103, %v2119
    %v2162 = vunpack.c.l.s4 1934713408
    %v2163 = vunpack.c.0.s8 %v2162
    %v2164 = vlaneseq
    %v2165 = vshrl.u32 %v2164, 7
    %v2166 = vsub.s32 %v2163, %v2165
    %v2167 = vrot.slane %v2159, %v2166
    %v2169 = vunpack.c.l.s4 1934713408
    %v2170 = vunpack.c.0.s8 %v2169
    %v2171 = vlaneseq
    %v2172 = vshrl.u32 %v2171, 7
    %v2173 = vsub.s32 %v2170, %v2172
    %v2174 = vrot.slane %v2160, %v2173
    %v2175 = vcombine.low %v2110, %v2126
    %v2176 = vcombine.high %v2110, %v2126
    %v2178 = vunpack.c.l.s4 1934713408
    %v2179 = vunpack.c.0.s8 %v2178
    %v2180 = vlaneseq
    %v2181 = vshrl.u32 %v2180, 7
    %v2182 = vsub.s32 %v2179, %v2181
    %v2183 = vrot.slane %v2175, %v2182
    %v2185 = vunpack.c.l.s4 1934713408
    %v2186 = vunpack.c.0.s8 %v2185
    %v2187 = vlaneseq
    %v2188 = vshrl.u32 %v2187, 7
    %v2189 = vsub.s32 %v2186, %v2188
    %v2190 = vrot.slane %v2176, %v2189
    %v2191 = vcombine.low %v2135, %v2151
    %v2192 = vcombine.high %v2135, %v2151
    %v2194 = vunpack.c.l.s4 1934713408
    %v2195 = vunpack.c.0.s8 %v2194
    %v2196 = vlaneseq
    %v2197 = vshrl.u32 %v2196, 7
    %v2198 = vsub.s32 %v2195, %v2197
    %v2199 = vrot.slane %v2191, %v2198
    %v2201 = vunpack.c.l.s4 1934713408
    %v2202 = vunpack.c.0.s8 %v2201
    %v2203 = vlaneseq
    %v2204 = vshrl.u32 %v2203, 7
    %v2205 = vsub.s32 %v2202, %v2204
    %v2206 = vrot.slane %v2192, %v2205
    %v2207 = vcombine.low %v2142, %v2158
    %v2208 = vcombine.high %v2142, %v2158
    %v2210 = vunpack.c.l.s4 1934713408
    %v2211 = vunpack.c.0.s8 %v2210
    %v2212 = vlaneseq
    %v2213 = vshrl.u32 %v2212, 7
    %v2214 = vsub.s32 %v2211, %v2213
    %v2215 = vrot.slane %v2207, %v2214
    %v2217 = vunpack.c.l.s4 1934713408
    %v2218 = vunpack.c.0.s8 %v2217
    %v2219 = vlaneseq
    %v2220 = vshrl.u32 %v2219, 7
    %v2221 = vsub.s32 %v2218, %v2220
    %v2222 = vrot.slane %v2208, %v2221
    %v2223 = vcombine.low %v2167, %v2199
    %v2224 = vcombine.high %v2167, %v2199
    %v2225 = vcombine.low %v2174, %v2206
    %v2226 = vcombine.high %v2174, %v2206
    %v2227 = vcombine.low %v2183, %v2215
    %v2228 = vcombine.high %v2183, %v2215
    %v2229 = vcombine.low %v2190, %v2222
    %v2230 = vcombine.high %v2190, %v2222
    %v2231 = vpack.c.bf16 %v2087, %v2087
    %v2232 = vpack.c.bf16 %v2088, %v2088
    %v2233 = vpack.c.bf16 %v2089, %v2089
    %v2234 = vpack.c.bf16 %v2090, %v2090
    %v2235 = vpack.c.bf16 %v2091, %v2091
    %v2236 = vpack.c.bf16 %v2092, %v2092
    %v2237 = vpack.c.bf16 %v2093, %v2093
    %v2238 = vpack.c.bf16 %v2094, %v2094
    %v2239 = vpack.c.bf16 %v2223, %v2223
    %v2240 = vpack.c.bf16 %v2224, %v2224
    %v2241 = vpack.c.bf16 %v2225, %v2225
    %v2242 = vpack.c.bf16 %v2226, %v2226
    %v2243 = vpack.c.bf16 %v2227, %v2227
    %v2244 = vpack.c.bf16 %v2228, %v2228
    %v2245 = vpack.c.bf16 %v2229, %v2229
    %v2246 = vpack.c.bf16 %v2230, %v2230
    %vm2247 = vcmask 130048
    %v2249 = vsel %vm2247, %v1023, 0
    %v2252 = vsel %vm2247, %v1627, 0
    %2254 = vmatprep.subr.bf16.mxu0 0
    %2255 = vmatpush1.bf16.xpose.msra.mxu0 %v2252
    %2256 = vmatprep.subr.bf16.mxu0 0
    %2257 = vmatpush1.bf16.xpose.msra.mxu0 0
    %2258 = vmatprep.subr.bf16.mxu0 0
    %2259 = vmatpush1.bf16.xpose.msra.mxu0 0
    %2260 = vmatprep.subr.bf16.mxu0 0
    %2261 = vmatpush1.bf16.xpose.msra.mxu0 0
    %2262 = vmatprep.subr.bf16.mxu0 0
    %2263 = vmatpush1.bf16.xpose.msra.mxu0 0
    %2264 = vmatprep.subr.bf16.mxu0 0
    %2265 = vmatpush1.bf16.xpose.msra.mxu0 0
    %2266 = vmatprep.subr.bf16.mxu0 0
    %2267 = vmatpush1.bf16.xpose.msra.mxu0 0
    %2268 = vmatprep.subr.bf16.mxu0 0
    %2269 = vmatpush1.bf16.xpose.msra.mxu0 0
    %2270 = vmatprep.subr.bf16.mxu0 0
    %2271 = vmatpush1.bf16.xpose.msra.mxu0 0
    %2272 = vmatprep.subr.bf16.mxu0 0
    %2273 = vmatpush1.bf16.xpose.msra.mxu0 0
    %2274 = vmatprep.subr.bf16.mxu0 0
    %2275 = vmatpush1.bf16.xpose.msra.mxu0 0
    %2276 = vmatprep.subr.bf16.mxu0 0
    %2277 = vmatpush1.bf16.xpose.msra.mxu0 0
    %2278 = vmatprep.subr.bf16.mxu0 0
    %2279 = vmatpush1.bf16.xpose.msra.mxu0 0
    %2280 = vmatprep.subr.bf16.mxu0 0
    %2281 = vmatpush1.bf16.xpose.msra.mxu0 0
    %2282 = vmatprep.subr.bf16.mxu0 0
    %2283 = vmatpush1.bf16.xpose.msra.mxu0 0
    %2284 = vmatprep.subr.bf16.mxu0 0
    %2285 = vmatpush1.bf16.xpose.msra.mxu0 0
    %2286 = vmatprep.mubr.bf16.mxu0 0
    %2287 = vmatmul.mubr.bf16.gmra.mrb[0].mxu0 %v2249
    %v2288 = vpop.f32.mrb[0].mxu0
    %v2289 = vadd.f32 0.0, %v2288
    %v2290 = vpop.f32.mrb[0].mxu0
    %v2291 = vpop.f32.mrb[0].mxu0
    %v2292 = vpop.f32.mrb[0].mxu0
    %2293 = vdwg.mxu0
    %v2295 = vsel %vm2247, %v1024, 0
    %v2298 = vsel %vm2247, %v1628, 0
    %2300 = vmatprep.subr.bf16.mxu0 0
    %2301 = vmatpush1.bf16.xpose.msra.mxu0 %v2298
    %2302 = vmatprep.subr.bf16.mxu0 0
    %2303 = vmatpush1.bf16.xpose.msra.mxu0 0
    %2304 = vmatprep.subr.bf16.mxu0 0
    %2305 = vmatpush1.bf16.xpose.msra.mxu0 0
    %2306 = vmatprep.subr.bf16.mxu0 0
    %2307 = vmatpush1.bf16.xpose.msra.mxu0 0
    %2308 = vmatprep.subr.bf16.mxu0 0
    %2309 = vmatpush1.bf16.xpose.msra.mxu0 0
    %2310 = vmatprep.subr.bf16.mxu0 0
    %2311 = vmatpush1.bf16.xpose.msra.mxu0 0
    %2312 = vmatprep.subr.bf16.mxu0 0
    %2313 = vmatpush1.bf16.xpose.msra.mxu0 0
    %2314 = vmatprep.subr.bf16.mxu0 0
    %2315 = vmatpush1.bf16.xpose.msra.mxu0 0
    %2316 = vmatprep.subr.bf16.mxu0 0
    %2317 = vmatpush1.bf16.xpose.msra.mxu0 0
    %2318 = vmatprep.subr.bf16.mxu0 0
    %2319 = vmatpush1.bf16.xpose.msra.mxu0 0
    %2320 = vmatprep.subr.bf16.mxu0 0
    %2321 = vmatpush1.bf16.xpose.msra.mxu0 0
    %2322 = vmatprep.subr.bf16.mxu0 0
    %2323 = vmatpush1.bf16.xpose.msra.mxu0 0
    %2324 = vmatprep.subr.bf16.mxu0 0
    %2325 = vmatpush1.bf16.xpose.msra.mxu0 0
    %2326 = vmatprep.subr.bf16.mxu0 0
    %2327 = vmatpush1.bf16.xpose.msra.mxu0 0
    %2328 = vmatprep.subr.bf16.mxu0 0
    %2329 = vmatpush1.bf16.xpose.msra.mxu0 0
    %2330 = vmatprep.subr.bf16.mxu0 0
    %2331 = vmatpush1.bf16.xpose.msra.mxu0 0
    %2332 = vmatprep.mubr.bf16.mxu0 0
    %2333 = vmatmul.mubr.bf16.gmra.mrb[0].mxu0 %v2295
    %v2334 = vpop.f32.mrb[0].mxu0
    %v2335 = vadd.f32 0.0, %v2334
    %v2336 = vpop.f32.mrb[0].mxu0
    %v2337 = vpop.f32.mrb[0].mxu0
    %v2338 = vpop.f32.mrb[0].mxu0
    %2339 = vdwg.mxu0
    %v2341 = vsel %vm2247, %v1025, 0
    %v2344 = vsel %vm2247, %v1629, 0
    %2346 = vmatprep.subr.bf16.mxu0 0
    %2347 = vmatpush1.bf16.xpose.msra.mxu0 %v2344
    %2348 = vmatprep.subr.bf16.mxu0 0
    %2349 = vmatpush1.bf16.xpose.msra.mxu0 0
    %2350 = vmatprep.subr.bf16.mxu0 0
    %2351 = vmatpush1.bf16.xpose.msra.mxu0 0
    %2352 = vmatprep.subr.bf16.mxu0 0
    %2353 = vmatpush1.bf16.xpose.msra.mxu0 0
    %2354 = vmatprep.subr.bf16.mxu0 0
    %2355 = vmatpush1.bf16.xpose.msra.mxu0 0
    %2356 = vmatprep.subr.bf16.mxu0 0
    %2357 = vmatpush1.bf16.xpose.msra.mxu0 0
    %2358 = vmatprep.subr.bf16.mxu0 0
    %2359 = vmatpush1.bf16.xpose.msra.mxu0 0
    %2360 = vmatprep.subr.bf16.mxu0 0
    %2361 = vmatpush1.bf16.xpose.msra.mxu0 0
    %2362 = vmatprep.subr.bf16.mxu0 0
    %2363 = vmatpush1.bf16.xpose.msra.mxu0 0
    %2364 = vmatprep.subr.bf16.mxu0 0
    %2365 = vmatpush1.bf16.xpose.msra.mxu0 0
    %2366 = vmatprep.subr.bf16.mxu0 0
    %2367 = vmatpush1.bf16.xpose.msra.mxu0 0
    %2368 = vmatprep.subr.bf16.mxu0 0
    %2369 = vmatpush1.bf16.xpose.msra.mxu0 0
    %2370 = vmatprep.subr.bf16.mxu0 0
    %2371 = vmatpush1.bf16.xpose.msra.mxu0 0
    %2372 = vmatprep.subr.bf16.mxu0 0
    %2373 = vmatpush1.bf16.xpose.msra.mxu0 0
    %2374 = vmatprep.subr.bf16.mxu0 0
    %2375 = vmatpush1.bf16.xpose.msra.mxu0 0
    %2376 = vmatprep.subr.bf16.mxu0 0
    %2377 = vmatpush1.bf16.xpose.msra.mxu0 0
    %2378 = vmatprep.mubr.bf16.mxu0 0
    %2379 = vmatmul.mubr.bf16.gmra.mrb[0].mxu0 %v2341
    %v2380 = vpop.f32.mrb[0].mxu0
    %v2381 = vadd.f32 0.0, %v2380
    %v2382 = vpop.f32.mrb[0].mxu0
    %v2383 = vpop.f32.mrb[0].mxu0
    %v2384 = vpop.f32.mrb[0].mxu0
    %2385 = vdwg.mxu0
    %v2387 = vsel %vm2247, %v1026, 0
    %v2390 = vsel %vm2247, %v1630, 0
    %2392 = vmatprep.subr.bf16.mxu0 0
    %2393 = vmatpush1.bf16.xpose.msra.mxu0 %v2390
    %2394 = vmatprep.subr.bf16.mxu0 0
    %2395 = vmatpush1.bf16.xpose.msra.mxu0 0
    %2396 = vmatprep.subr.bf16.mxu0 0
    %2397 = vmatpush1.bf16.xpose.msra.mxu0 0
    %2398 = vmatprep.subr.bf16.mxu0 0
    %2399 = vmatpush1.bf16.xpose.msra.mxu0 0
    %2400 = vmatprep.subr.bf16.mxu0 0
    %2401 = vmatpush1.bf16.xpose.msra.mxu0 0
    %2402 = vmatprep.subr.bf16.mxu0 0
    %2403 = vmatpush1.bf16.xpose.msra.mxu0 0
    %2404 = vmatprep.subr.bf16.mxu0 0
    %2405 = vmatpush1.bf16.xpose.msra.mxu0 0
    %2406 = vmatprep.subr.bf16.mxu0 0
    %2407 = vmatpush1.bf16.xpose.msra.mxu0 0
    %2408 = vmatprep.subr.bf16.mxu0 0
    %2409 = vmatpush1.bf16.xpose.msra.mxu0 0
    %2410 = vmatprep.subr.bf16.mxu0 0
    %2411 = vmatpush1.bf16.xpose.msra.mxu0 0
    %2412 = vmatprep.subr.bf16.mxu0 0
    %2413 = vmatpush1.bf16.xpose.msra.mxu0 0
    %2414 = vmatprep.subr.bf16.mxu0 0
    %2415 = vmatpush1.bf16.xpose.msra.mxu0 0
    %2416 = vmatprep.subr.bf16.mxu0 0
    %2417 = vmatpush1.bf16.xpose.msra.mxu0 0
    %2418 = vmatprep.subr.bf16.mxu0 0
    %2419 = vmatpush1.bf16.xpose.msra.mxu0 0
    %2420 = vmatprep.subr.bf16.mxu0 0
    %2421 = vmatpush1.bf16.xpose.msra.mxu0 0
    %2422 = vmatprep.subr.bf16.mxu0 0
    %2423 = vmatpush1.bf16.xpose.msra.mxu0 0
    %2424 = vmatprep.mubr.bf16.mxu0 0
    %2425 = vmatmul.mubr.bf16.gmra.mrb[0].mxu0 %v2387
    %v2426 = vpop.f32.mrb[0].mxu0
    %v2427 = vadd.f32 0.0, %v2426
    %v2428 = vpop.f32.mrb[0].mxu0
    %v2429 = vpop.f32.mrb[0].mxu0
    %v2430 = vpop.f32.mrb[0].mxu0
    %2431 = vdwg.mxu0
    %v2433 = vsel %vm2247, %v1027, 0
    %v2436 = vsel %vm2247, %v1631, 0
    %2438 = vmatprep.subr.bf16.mxu0 0
    %2439 = vmatpush1.bf16.xpose.msra.mxu0 %v2436
    %2440 = vmatprep.subr.bf16.mxu0 0
    %2441 = vmatpush1.bf16.xpose.msra.mxu0 0
    %2442 = vmatprep.subr.bf16.mxu0 0
    %2443 = vmatpush1.bf16.xpose.msra.mxu0 0
    %2444 = vmatprep.subr.bf16.mxu0 0
    %2445 = vmatpush1.bf16.xpose.msra.mxu0 0
    %2446 = vmatprep.subr.bf16.mxu0 0
    %2447 = vmatpush1.bf16.xpose.msra.mxu0 0
    %2448 = vmatprep.subr.bf16.mxu0 0
    %2449 = vmatpush1.bf16.xpose.msra.mxu0 0
    %2450 = vmatprep.subr.bf16.mxu0 0
    %2451 = vmatpush1.bf16.xpose.msra.mxu0 0
    %2452 = vmatprep.subr.bf16.mxu0 0
    %2453 = vmatpush1.bf16.xpose.msra.mxu0 0
    %2454 = vmatprep.subr.bf16.mxu0 0
    %2455 = vmatpush1.bf16.xpose.msra.mxu0 0
    %2456 = vmatprep.subr.bf16.mxu0 0
    %2457 = vmatpush1.bf16.xpose.msra.mxu0 0
    %2458 = vmatprep.subr.bf16.mxu0 0
    %2459 = vmatpush1.bf16.xpose.msra.mxu0 0
    %2460 = vmatprep.subr.bf16.mxu0 0
    %2461 = vmatpush1.bf16.xpose.msra.mxu0 0
    %2462 = vmatprep.subr.bf16.mxu0 0
    %2463 = vmatpush1.bf16.xpose.msra.mxu0 0
    %2464 = vmatprep.subr.bf16.mxu0 0
    %2465 = vmatpush1.bf16.xpose.msra.mxu0 0
    %2466 = vmatprep.subr.bf16.mxu0 0
    %2467 = vmatpush1.bf16.xpose.msra.mxu0 0
    %2468 = vmatprep.subr.bf16.mxu0 0
    %2469 = vmatpush1.bf16.xpose.msra.mxu0 0
    %2470 = vmatprep.mubr.bf16.mxu0 0
    %2471 = vmatmul.mubr.bf16.gmra.mrb[0].mxu0 %v2433
    %v2472 = vpop.f32.mrb[0].mxu0
    %v2473 = vadd.f32 0.0, %v2472
    %v2474 = vpop.f32.mrb[0].mxu0
    %v2475 = vpop.f32.mrb[0].mxu0
    %v2476 = vpop.f32.mrb[0].mxu0
    %2477 = vdwg.mxu0
    %v2479 = vsel %vm2247, %v1028, 0
    %v2482 = vsel %vm2247, %v1632, 0
    %2484 = vmatprep.subr.bf16.mxu0 0
    %2485 = vmatpush1.bf16.xpose.msra.mxu0 %v2482
    %2486 = vmatprep.subr.bf16.mxu0 0
    %2487 = vmatpush1.bf16.xpose.msra.mxu0 0
    %2488 = vmatprep.subr.bf16.mxu0 0
    %2489 = vmatpush1.bf16.xpose.msra.mxu0 0
    %2490 = vmatprep.subr.bf16.mxu0 0
    %2491 = vmatpush1.bf16.xpose.msra.mxu0 0
    %2492 = vmatprep.subr.bf16.mxu0 0
    %2493 = vmatpush1.bf16.xpose.msra.mxu0 0
    %2494 = vmatprep.subr.bf16.mxu0 0
    %2495 = vmatpush1.bf16.xpose.msra.mxu0 0
    %2496 = vmatprep.subr.bf16.mxu0 0
    %2497 = vmatpush1.bf16.xpose.msra.mxu0 0
    %2498 = vmatprep.subr.bf16.mxu0 0
    %2499 = vmatpush1.bf16.xpose.msra.mxu0 0
    %2500 = vmatprep.subr.bf16.mxu0 0
    %2501 = vmatpush1.bf16.xpose.msra.mxu0 0
    %2502 = vmatprep.subr.bf16.mxu0 0
    %2503 = vmatpush1.bf16.xpose.msra.mxu0 0
    %2504 = vmatprep.subr.bf16.mxu0 0
    %2505 = vmatpush1.bf16.xpose.msra.mxu0 0
    %2506 = vmatprep.subr.bf16.mxu0 0
    %2507 = vmatpush1.bf16.xpose.msra.mxu0 0
    %2508 = vmatprep.subr.bf16.mxu0 0
    %2509 = vmatpush1.bf16.xpose.msra.mxu0 0
    %2510 = vmatprep.subr.bf16.mxu0 0
    %2511 = vmatpush1.bf16.xpose.msra.mxu0 0
    %2512 = vmatprep.subr.bf16.mxu0 0
    %2513 = vmatpush1.bf16.xpose.msra.mxu0 0
    %2514 = vmatprep.subr.bf16.mxu0 0
    %2515 = vmatpush1.bf16.xpose.msra.mxu0 0
    %2516 = vmatprep.mubr.bf16.mxu0 0
    %2517 = vmatmul.mubr.bf16.gmra.mrb[0].mxu0 %v2479
    %v2518 = vpop.f32.mrb[0].mxu0
    %v2519 = vadd.f32 0.0, %v2518
    %v2520 = vpop.f32.mrb[0].mxu0
    %v2521 = vpop.f32.mrb[0].mxu0
    %v2522 = vpop.f32.mrb[0].mxu0
    %2523 = vdwg.mxu0
    %v2525 = vsel %vm2247, %v1029, 0
    %v2528 = vsel %vm2247, %v1633, 0
    %2530 = vmatprep.subr.bf16.mxu0 0
    %2531 = vmatpush1.bf16.xpose.msra.mxu0 %v2528
    %2532 = vmatprep.subr.bf16.mxu0 0
    %2533 = vmatpush1.bf16.xpose.msra.mxu0 0
    %2534 = vmatprep.subr.bf16.mxu0 0
    %2535 = vmatpush1.bf16.xpose.msra.mxu0 0
    %2536 = vmatprep.subr.bf16.mxu0 0
    %2537 = vmatpush1.bf16.xpose.msra.mxu0 0
    %2538 = vmatprep.subr.bf16.mxu0 0
    %2539 = vmatpush1.bf16.xpose.msra.mxu0 0
    %2540 = vmatprep.subr.bf16.mxu0 0
    %2541 = vmatpush1.bf16.xpose.msra.mxu0 0
    %2542 = vmatprep.subr.bf16.mxu0 0
    %2543 = vmatpush1.bf16.xpose.msra.mxu0 0
    %2544 = vmatprep.subr.bf16.mxu0 0
    %2545 = vmatpush1.bf16.xpose.msra.mxu0 0
    %2546 = vmatprep.subr.bf16.mxu0 0
    %2547 = vmatpush1.bf16.xpose.msra.mxu0 0
    %2548 = vmatprep.subr.bf16.mxu0 0
    %2549 = vmatpush1.bf16.xpose.msra.mxu0 0
    %2550 = vmatprep.subr.bf16.mxu0 0
    %2551 = vmatpush1.bf16.xpose.msra.mxu0 0
    %2552 = vmatprep.subr.bf16.mxu0 0
    %2553 = vmatpush1.bf16.xpose.msra.mxu0 0
    %2554 = vmatprep.subr.bf16.mxu0 0
    %2555 = vmatpush1.bf16.xpose.msra.mxu0 0
    %2556 = vmatprep.subr.bf16.mxu0 0
    %2557 = vmatpush1.bf16.xpose.msra.mxu0 0
    %2558 = vmatprep.subr.bf16.mxu0 0
    %2559 = vmatpush1.bf16.xpose.msra.mxu0 0
    %2560 = vmatprep.subr.bf16.mxu0 0
    %2561 = vmatpush1.bf16.xpose.msra.mxu0 0
    %2562 = vmatprep.mubr.bf16.mxu0 0
    %2563 = vmatmul.mubr.bf16.gmra.mrb[0].mxu0 %v2525
    %v2564 = vpop.f32.mrb[0].mxu0
    %v2565 = vadd.f32 0.0, %v2564
    %v2566 = vpop.f32.mrb[0].mxu0
    %v2567 = vpop.f32.mrb[0].mxu0
    %v2568 = vpop.f32.mrb[0].mxu0
    %2569 = vdwg.mxu0
    %v2571 = vsel %vm2247, %v1030, 0
    %v2574 = vsel %vm2247, %v1634, 0
    %2576 = vmatprep.subr.bf16.mxu0 0
    %2577 = vmatpush1.bf16.xpose.msra.mxu0 %v2574
    %2578 = vmatprep.subr.bf16.mxu0 0
    %2579 = vmatpush1.bf16.xpose.msra.mxu0 0
    %2580 = vmatprep.subr.bf16.mxu0 0
    %2581 = vmatpush1.bf16.xpose.msra.mxu0 0
    %2582 = vmatprep.subr.bf16.mxu0 0
    %2583 = vmatpush1.bf16.xpose.msra.mxu0 0
    %2584 = vmatprep.subr.bf16.mxu0 0
    %2585 = vmatpush1.bf16.xpose.msra.mxu0 0
    %2586 = vmatprep.subr.bf16.mxu0 0
    %2587 = vmatpush1.bf16.xpose.msra.mxu0 0
    %2588 = vmatprep.subr.bf16.mxu0 0
    %2589 = vmatpush1.bf16.xpose.msra.mxu0 0
    %2590 = vmatprep.subr.bf16.mxu0 0
    %2591 = vmatpush1.bf16.xpose.msra.mxu0 0
    %2592 = vmatprep.subr.bf16.mxu0 0
    %2593 = vmatpush1.bf16.xpose.msra.mxu0 0
    %2594 = vmatprep.subr.bf16.mxu0 0
    %2595 = vmatpush1.bf16.xpose.msra.mxu0 0
    %2596 = vmatprep.subr.bf16.mxu0 0
    %2597 = vmatpush1.bf16.xpose.msra.mxu0 0
    %2598 = vmatprep.subr.bf16.mxu0 0
    %2599 = vmatpush1.bf16.xpose.msra.mxu0 0
    %2600 = vmatprep.subr.bf16.mxu0 0
    %2601 = vmatpush1.bf16.xpose.msra.mxu0 0
    %2602 = vmatprep.subr.bf16.mxu0 0
    %2603 = vmatpush1.bf16.xpose.msra.mxu0 0
    %2604 = vmatprep.subr.bf16.mxu0 0
    %2605 = vmatpush1.bf16.xpose.msra.mxu0 0
    %2606 = vmatprep.subr.bf16.mxu0 0
    %2607 = vmatpush1.bf16.xpose.msra.mxu0 0
    %2608 = vmatprep.mubr.bf16.mxu0 0
    %2609 = vmatmul.mubr.bf16.gmra.mrb[0].mxu0 %v2571
    %v2610 = vpop.f32.mrb[0].mxu0
    %v2611 = vadd.f32 0.0, %v2610
    %v2612 = vpop.f32.mrb[0].mxu0
    %v2613 = vpop.f32.mrb[0].mxu0
    %v2614 = vpop.f32.mrb[0].mxu0
    %2615 = vdwg.mxu0
    %v2617 = vsel %vm2247, %v1031, 0
    %v2620 = vsel %vm2247, %v1635, 0
    %2622 = vmatprep.subr.bf16.mxu0 0
    %2623 = vmatpush1.bf16.xpose.msra.mxu0 %v2620
    %2624 = vmatprep.subr.bf16.mxu0 0
    %2625 = vmatpush1.bf16.xpose.msra.mxu0 0
    %2626 = vmatprep.subr.bf16.mxu0 0
    %2627 = vmatpush1.bf16.xpose.msra.mxu0 0
    %2628 = vmatprep.subr.bf16.mxu0 0
    %2629 = vmatpush1.bf16.xpose.msra.mxu0 0
    %2630 = vmatprep.subr.bf16.mxu0 0
    %2631 = vmatpush1.bf16.xpose.msra.mxu0 0
    %2632 = vmatprep.subr.bf16.mxu0 0
    %2633 = vmatpush1.bf16.xpose.msra.mxu0 0
    %2634 = vmatprep.subr.bf16.mxu0 0
    %2635 = vmatpush1.bf16.xpose.msra.mxu0 0
    %2636 = vmatprep.subr.bf16.mxu0 0
    %2637 = vmatpush1.bf16.xpose.msra.mxu0 0
    %2638 = vmatprep.subr.bf16.mxu0 0
    %2639 = vmatpush1.bf16.xpose.msra.mxu0 0
    %2640 = vmatprep.subr.bf16.mxu0 0
    %2641 = vmatpush1.bf16.xpose.msra.mxu0 0
    %2642 = vmatprep.subr.bf16.mxu0 0
    %2643 = vmatpush1.bf16.xpose.msra.mxu0 0
    %2644 = vmatprep.subr.bf16.mxu0 0
    %2645 = vmatpush1.bf16.xpose.msra.mxu0 0
    %2646 = vmatprep.subr.bf16.mxu0 0
    %2647 = vmatpush1.bf16.xpose.msra.mxu0 0
    %2648 = vmatprep.subr.bf16.mxu0 0
    %2649 = vmatpush1.bf16.xpose.msra.mxu0 0
    %2650 = vmatprep.subr.bf16.mxu0 0
    %2651 = vmatpush1.bf16.xpose.msra.mxu0 0
    %2652 = vmatprep.subr.bf16.mxu0 0
    %2653 = vmatpush1.bf16.xpose.msra.mxu0 0
    %2654 = vmatprep.mubr.bf16.mxu0 0
    %2655 = vmatmul.mubr.bf16.gmra.mrb[0].mxu0 %v2617
    %v2656 = vpop.f32.mrb[0].mxu0
    %v2657 = vadd.f32 0.0, %v2656
    %v2658 = vpop.f32.mrb[0].mxu0
    %v2659 = vpop.f32.mrb[0].mxu0
    %v2660 = vpop.f32.mrb[0].mxu0
    %2661 = vdwg.mxu0
    %v2663 = vsel %vm2247, %v1032, 0
    %v2666 = vsel %vm2247, %v1636, 0
    %2668 = vmatprep.subr.bf16.mxu0 0
    %2669 = vmatpush1.bf16.xpose.msra.mxu0 %v2666
    %2670 = vmatprep.subr.bf16.mxu0 0
    %2671 = vmatpush1.bf16.xpose.msra.mxu0 0
    %2672 = vmatprep.subr.bf16.mxu0 0
    %2673 = vmatpush1.bf16.xpose.msra.mxu0 0
    %2674 = vmatprep.subr.bf16.mxu0 0
    %2675 = vmatpush1.bf16.xpose.msra.mxu0 0
    %2676 = vmatprep.subr.bf16.mxu0 0
    %2677 = vmatpush1.bf16.xpose.msra.mxu0 0
    %2678 = vmatprep.subr.bf16.mxu0 0
    %2679 = vmatpush1.bf16.xpose.msra.mxu0 0
    %2680 = vmatprep.subr.bf16.mxu0 0
    %2681 = vmatpush1.bf16.xpose.msra.mxu0 0
    %2682 = vmatprep.subr.bf16.mxu0 0
    %2683 = vmatpush1.bf16.xpose.msra.mxu0 0
    %2684 = vmatprep.subr.bf16.mxu0 0
    %2685 = vmatpush1.bf16.xpose.msra.mxu0 0
    %2686 = vmatprep.subr.bf16.mxu0 0
    %2687 = vmatpush1.bf16.xpose.msra.mxu0 0
    %2688 = vmatprep.subr.bf16.mxu0 0
    %2689 = vmatpush1.bf16.xpose.msra.mxu0 0
    %2690 = vmatprep.subr.bf16.mxu0 0
    %2691 = vmatpush1.bf16.xpose.msra.mxu0 0
    %2692 = vmatprep.subr.bf16.mxu0 0
    %2693 = vmatpush1.bf16.xpose.msra.mxu0 0
    %2694 = vmatprep.subr.bf16.mxu0 0
    %2695 = vmatpush1.bf16.xpose.msra.mxu0 0
    %2696 = vmatprep.subr.bf16.mxu0 0
    %2697 = vmatpush1.bf16.xpose.msra.mxu0 0
    %2698 = vmatprep.subr.bf16.mxu0 0
    %2699 = vmatpush1.bf16.xpose.msra.mxu0 0
    %2700 = vmatprep.mubr.bf16.mxu0 0
    %2701 = vmatmul.mubr.bf16.gmra.mrb[0].mxu0 %v2663
    %v2702 = vpop.f32.mrb[0].mxu0
    %v2703 = vadd.f32 0.0, %v2702
    %v2704 = vpop.f32.mrb[0].mxu0
    %v2705 = vpop.f32.mrb[0].mxu0
    %v2706 = vpop.f32.mrb[0].mxu0
    %2707 = vdwg.mxu0
    %v2709 = vsel %vm2247, %v1033, 0
    %v2712 = vsel %vm2247, %v1637, 0
    %2714 = vmatprep.subr.bf16.mxu0 0
    %2715 = vmatpush1.bf16.xpose.msra.mxu0 %v2712
    %2716 = vmatprep.subr.bf16.mxu0 0
    %2717 = vmatpush1.bf16.xpose.msra.mxu0 0
    %2718 = vmatprep.subr.bf16.mxu0 0
    %2719 = vmatpush1.bf16.xpose.msra.mxu0 0
    %2720 = vmatprep.subr.bf16.mxu0 0
    %2721 = vmatpush1.bf16.xpose.msra.mxu0 0
    %2722 = vmatprep.subr.bf16.mxu0 0
    %2723 = vmatpush1.bf16.xpose.msra.mxu0 0
    %2724 = vmatprep.subr.bf16.mxu0 0
    %2725 = vmatpush1.bf16.xpose.msra.mxu0 0
    %2726 = vmatprep.subr.bf16.mxu0 0
    %2727 = vmatpush1.bf16.xpose.msra.mxu0 0
    %2728 = vmatprep.subr.bf16.mxu0 0
    %2729 = vmatpush1.bf16.xpose.msra.mxu0 0
    %2730 = vmatprep.subr.bf16.mxu0 0
    %2731 = vmatpush1.bf16.xpose.msra.mxu0 0
    %2732 = vmatprep.subr.bf16.mxu0 0
    %2733 = vmatpush1.bf16.xpose.msra.mxu0 0
    %2734 = vmatprep.subr.bf16.mxu0 0
    %2735 = vmatpush1.bf16.xpose.msra.mxu0 0
    %2736 = vmatprep.subr.bf16.mxu0 0
    %2737 = vmatpush1.bf16.xpose.msra.mxu0 0
    %2738 = vmatprep.subr.bf16.mxu0 0
    %2739 = vmatpush1.bf16.xpose.msra.mxu0 0
    %2740 = vmatprep.subr.bf16.mxu0 0
    %2741 = vmatpush1.bf16.xpose.msra.mxu0 0
    %2742 = vmatprep.subr.bf16.mxu0 0
    %2743 = vmatpush1.bf16.xpose.msra.mxu0 0
    %2744 = vmatprep.subr.bf16.mxu0 0
    %2745 = vmatpush1.bf16.xpose.msra.mxu0 0
    %2746 = vmatprep.mubr.bf16.mxu0 0
    %2747 = vmatmul.mubr.bf16.gmra.mrb[0].mxu0 %v2709
    %v2748 = vpop.f32.mrb[0].mxu0
    %v2749 = vadd.f32 0.0, %v2748
    %v2750 = vpop.f32.mrb[0].mxu0
    %v2751 = vpop.f32.mrb[0].mxu0
    %v2752 = vpop.f32.mrb[0].mxu0
    %2753 = vdwg.mxu0
    %v2755 = vsel %vm2247, %v1034, 0
    %v2758 = vsel %vm2247, %v1638, 0
    %2760 = vmatprep.subr.bf16.mxu0 0
    %2761 = vmatpush1.bf16.xpose.msra.mxu0 %v2758
    %2762 = vmatprep.subr.bf16.mxu0 0
    %2763 = vmatpush1.bf16.xpose.msra.mxu0 0
    %2764 = vmatprep.subr.bf16.mxu0 0
    %2765 = vmatpush1.bf16.xpose.msra.mxu0 0
    %2766 = vmatprep.subr.bf16.mxu0 0
    %2767 = vmatpush1.bf16.xpose.msra.mxu0 0
    %2768 = vmatprep.subr.bf16.mxu0 0
    %2769 = vmatpush1.bf16.xpose.msra.mxu0 0
    %2770 = vmatprep.subr.bf16.mxu0 0
    %2771 = vmatpush1.bf16.xpose.msra.mxu0 0
    %2772 = vmatprep.subr.bf16.mxu0 0
    %2773 = vmatpush1.bf16.xpose.msra.mxu0 0
    %2774 = vmatprep.subr.bf16.mxu0 0
    %2775 = vmatpush1.bf16.xpose.msra.mxu0 0
    %2776 = vmatprep.subr.bf16.mxu0 0
    %2777 = vmatpush1.bf16.xpose.msra.mxu0 0
    %2778 = vmatprep.subr.bf16.mxu0 0
    %2779 = vmatpush1.bf16.xpose.msra.mxu0 0
    %2780 = vmatprep.subr.bf16.mxu0 0
    %2781 = vmatpush1.bf16.xpose.msra.mxu0 0
    %2782 = vmatprep.subr.bf16.mxu0 0
    %2783 = vmatpush1.bf16.xpose.msra.mxu0 0
    %2784 = vmatprep.subr.bf16.mxu0 0
    %2785 = vmatpush1.bf16.xpose.msra.mxu0 0
    %2786 = vmatprep.subr.bf16.mxu0 0
    %2787 = vmatpush1.bf16.xpose.msra.mxu0 0
    %2788 = vmatprep.subr.bf16.mxu0 0
    %2789 = vmatpush1.bf16.xpose.msra.mxu0 0
    %2790 = vmatprep.subr.bf16.mxu0 0
    %2791 = vmatpush1.bf16.xpose.msra.mxu0 0
    %2792 = vmatprep.mubr.bf16.mxu0 0
    %2793 = vmatmul.mubr.bf16.gmra.mrb[0].mxu0 %v2755
    %v2794 = vpop.f32.mrb[0].mxu0
    %v2795 = vadd.f32 0.0, %v2794
    %v2796 = vpop.f32.mrb[0].mxu0
    %v2797 = vpop.f32.mrb[0].mxu0
    %v2798 = vpop.f32.mrb[0].mxu0
    %2799 = vdwg.mxu0
    %v2801 = vsel %vm2247, %v1035, 0
    %v2804 = vsel %vm2247, %v1639, 0
    %2806 = vmatprep.subr.bf16.mxu0 0
    %2807 = vmatpush1.bf16.xpose.msra.mxu0 %v2804
    %2808 = vmatprep.subr.bf16.mxu0 0
    %2809 = vmatpush1.bf16.xpose.msra.mxu0 0
    %2810 = vmatprep.subr.bf16.mxu0 0
    %2811 = vmatpush1.bf16.xpose.msra.mxu0 0
    %2812 = vmatprep.subr.bf16.mxu0 0
    %2813 = vmatpush1.bf16.xpose.msra.mxu0 0
    %2814 = vmatprep.subr.bf16.mxu0 0
    %2815 = vmatpush1.bf16.xpose.msra.mxu0 0
    %2816 = vmatprep.subr.bf16.mxu0 0
    %2817 = vmatpush1.bf16.xpose.msra.mxu0 0
    %2818 = vmatprep.subr.bf16.mxu0 0
    %2819 = vmatpush1.bf16.xpose.msra.mxu0 0
    %2820 = vmatprep.subr.bf16.mxu0 0
    %2821 = vmatpush1.bf16.xpose.msra.mxu0 0
    %2822 = vmatprep.subr.bf16.mxu0 0
    %2823 = vmatpush1.bf16.xpose.msra.mxu0 0
    %2824 = vmatprep.subr.bf16.mxu0 0
    %2825 = vmatpush1.bf16.xpose.msra.mxu0 0
    %2826 = vmatprep.subr.bf16.mxu0 0
    %2827 = vmatpush1.bf16.xpose.msra.mxu0 0
    %2828 = vmatprep.subr.bf16.mxu0 0
    %2829 = vmatpush1.bf16.xpose.msra.mxu0 0
    %2830 = vmatprep.subr.bf16.mxu0 0
    %2831 = vmatpush1.bf16.xpose.msra.mxu0 0
    %2832 = vmatprep.subr.bf16.mxu0 0
    %2833 = vmatpush1.bf16.xpose.msra.mxu0 0
    %2834 = vmatprep.subr.bf16.mxu0 0
    %2835 = vmatpush1.bf16.xpose.msra.mxu0 0
    %2836 = vmatprep.subr.bf16.mxu0 0
    %2837 = vmatpush1.bf16.xpose.msra.mxu0 0
    %2838 = vmatprep.mubr.bf16.mxu0 0
    %2839 = vmatmul.mubr.bf16.gmra.mrb[0].mxu0 %v2801
    %v2840 = vpop.f32.mrb[0].mxu0
    %v2841 = vadd.f32 0.0, %v2840
    %v2842 = vpop.f32.mrb[0].mxu0
    %v2843 = vpop.f32.mrb[0].mxu0
    %v2844 = vpop.f32.mrb[0].mxu0
    %2845 = vdwg.mxu0
    %v2847 = vsel %vm2247, %v1036, 0
    %v2850 = vsel %vm2247, %v1640, 0
    %2852 = vmatprep.subr.bf16.mxu0 0
    %2853 = vmatpush1.bf16.xpose.msra.mxu0 %v2850
    %2854 = vmatprep.subr.bf16.mxu0 0
    %2855 = vmatpush1.bf16.xpose.msra.mxu0 0
    %2856 = vmatprep.subr.bf16.mxu0 0
    %2857 = vmatpush1.bf16.xpose.msra.mxu0 0
    %2858 = vmatprep.subr.bf16.mxu0 0
    %2859 = vmatpush1.bf16.xpose.msra.mxu0 0
    %2860 = vmatprep.subr.bf16.mxu0 0
    %2861 = vmatpush1.bf16.xpose.msra.mxu0 0
    %2862 = vmatprep.subr.bf16.mxu0 0
    %2863 = vmatpush1.bf16.xpose.msra.mxu0 0
    %2864 = vmatprep.subr.bf16.mxu0 0
    %2865 = vmatpush1.bf16.xpose.msra.mxu0 0
    %2866 = vmatprep.subr.bf16.mxu0 0
    %2867 = vmatpush1.bf16.xpose.msra.mxu0 0
    %2868 = vmatprep.subr.bf16.mxu0 0
    %2869 = vmatpush1.bf16.xpose.msra.mxu0 0
    %2870 = vmatprep.subr.bf16.mxu0 0
    %2871 = vmatpush1.bf16.xpose.msra.mxu0 0
    %2872 = vmatprep.subr.bf16.mxu0 0
    %2873 = vmatpush1.bf16.xpose.msra.mxu0 0
    %2874 = vmatprep.subr.bf16.mxu0 0
    %2875 = vmatpush1.bf16.xpose.msra.mxu0 0
    %2876 = vmatprep.subr.bf16.mxu0 0
    %2877 = vmatpush1.bf16.xpose.msra.mxu0 0
    %2878 = vmatprep.subr.bf16.mxu0 0
    %2879 = vmatpush1.bf16.xpose.msra.mxu0 0
    %2880 = vmatprep.subr.bf16.mxu0 0
    %2881 = vmatpush1.bf16.xpose.msra.mxu0 0
    %2882 = vmatprep.subr.bf16.mxu0 0
    %2883 = vmatpush1.bf16.xpose.msra.mxu0 0
    %2884 = vmatprep.mubr.bf16.mxu0 0
    %2885 = vmatmul.mubr.bf16.gmra.mrb[0].mxu0 %v2847
    %v2886 = vpop.f32.mrb[0].mxu0
    %v2887 = vadd.f32 0.0, %v2886
    %v2888 = vpop.f32.mrb[0].mxu0
    %v2889 = vpop.f32.mrb[0].mxu0
    %v2890 = vpop.f32.mrb[0].mxu0
    %2891 = vdwg.mxu0
    %v2893 = vsel %vm2247, %v1037, 0
    %v2896 = vsel %vm2247, %v1641, 0
    %2898 = vmatprep.subr.bf16.mxu0 0
    %2899 = vmatpush1.bf16.xpose.msra.mxu0 %v2896
    %2900 = vmatprep.subr.bf16.mxu0 0
    %2901 = vmatpush1.bf16.xpose.msra.mxu0 0
    %2902 = vmatprep.subr.bf16.mxu0 0
    %2903 = vmatpush1.bf16.xpose.msra.mxu0 0
    %2904 = vmatprep.subr.bf16.mxu0 0
    %2905 = vmatpush1.bf16.xpose.msra.mxu0 0
    %2906 = vmatprep.subr.bf16.mxu0 0
    %2907 = vmatpush1.bf16.xpose.msra.mxu0 0
    %2908 = vmatprep.subr.bf16.mxu0 0
    %2909 = vmatpush1.bf16.xpose.msra.mxu0 0
    %2910 = vmatprep.subr.bf16.mxu0 0
    %2911 = vmatpush1.bf16.xpose.msra.mxu0 0
    %2912 = vmatprep.subr.bf16.mxu0 0
    %2913 = vmatpush1.bf16.xpose.msra.mxu0 0
    %2914 = vmatprep.subr.bf16.mxu0 0
    %2915 = vmatpush1.bf16.xpose.msra.mxu0 0
    %2916 = vmatprep.subr.bf16.mxu0 0
    %2917 = vmatpush1.bf16.xpose.msra.mxu0 0
    %2918 = vmatprep.subr.bf16.mxu0 0
    %2919 = vmatpush1.bf16.xpose.msra.mxu0 0
    %2920 = vmatprep.subr.bf16.mxu0 0
    %2921 = vmatpush1.bf16.xpose.msra.mxu0 0
    %2922 = vmatprep.subr.bf16.mxu0 0
    %2923 = vmatpush1.bf16.xpose.msra.mxu0 0
    %2924 = vmatprep.subr.bf16.mxu0 0
    %2925 = vmatpush1.bf16.xpose.msra.mxu0 0
    %2926 = vmatprep.subr.bf16.mxu0 0
    %2927 = vmatpush1.bf16.xpose.msra.mxu0 0
    %2928 = vmatprep.subr.bf16.mxu0 0
    %2929 = vmatpush1.bf16.xpose.msra.mxu0 0
    %2930 = vmatprep.mubr.bf16.mxu0 0
    %2931 = vmatmul.mubr.bf16.gmra.mrb[0].mxu0 %v2893
    %v2932 = vpop.f32.mrb[0].mxu0
    %v2933 = vadd.f32 0.0, %v2932
    %v2934 = vpop.f32.mrb[0].mxu0
    %v2935 = vpop.f32.mrb[0].mxu0
    %v2936 = vpop.f32.mrb[0].mxu0
    %2937 = vdwg.mxu0
    %v2939 = vsel %vm2247, %v1038, 0
    %v2942 = vsel %vm2247, %v1642, 0
    %2944 = vmatprep.subr.bf16.mxu0 0
    %2945 = vmatpush1.bf16.xpose.msra.mxu0 %v2942
    %2946 = vmatprep.subr.bf16.mxu0 0
    %2947 = vmatpush1.bf16.xpose.msra.mxu0 0
    %2948 = vmatprep.subr.bf16.mxu0 0
    %2949 = vmatpush1.bf16.xpose.msra.mxu0 0
    %2950 = vmatprep.subr.bf16.mxu0 0
    %2951 = vmatpush1.bf16.xpose.msra.mxu0 0
    %2952 = vmatprep.subr.bf16.mxu0 0
    %2953 = vmatpush1.bf16.xpose.msra.mxu0 0
    %2954 = vmatprep.subr.bf16.mxu0 0
    %2955 = vmatpush1.bf16.xpose.msra.mxu0 0
    %2956 = vmatprep.subr.bf16.mxu0 0
    %2957 = vmatpush1.bf16.xpose.msra.mxu0 0
    %2958 = vmatprep.subr.bf16.mxu0 0
    %2959 = vmatpush1.bf16.xpose.msra.mxu0 0
    %2960 = vmatprep.subr.bf16.mxu0 0
    %2961 = vmatpush1.bf16.xpose.msra.mxu0 0
    %2962 = vmatprep.subr.bf16.mxu0 0
    %2963 = vmatpush1.bf16.xpose.msra.mxu0 0
    %2964 = vmatprep.subr.bf16.mxu0 0
    %2965 = vmatpush1.bf16.xpose.msra.mxu0 0
    %2966 = vmatprep.subr.bf16.mxu0 0
    %2967 = vmatpush1.bf16.xpose.msra.mxu0 0
    %2968 = vmatprep.subr.bf16.mxu0 0
    %2969 = vmatpush1.bf16.xpose.msra.mxu0 0
    %2970 = vmatprep.subr.bf16.mxu0 0
    %2971 = vmatpush1.bf16.xpose.msra.mxu0 0
    %2972 = vmatprep.subr.bf16.mxu0 0
    %2973 = vmatpush1.bf16.xpose.msra.mxu0 0
    %2974 = vmatprep.subr.bf16.mxu0 0
    %2975 = vmatpush1.bf16.xpose.msra.mxu0 0
    %2976 = vmatprep.mubr.bf16.mxu0 0
    %2977 = vmatmul.mubr.bf16.gmra.mrb[0].mxu0 %v2939
    %v2978 = vpop.f32.mrb[0].mxu0
    %v2979 = vadd.f32 0.0, %v2978
    %v2980 = vpop.f32.mrb[0].mxu0
    %v2981 = vpop.f32.mrb[0].mxu0
    %v2982 = vpop.f32.mrb[0].mxu0
    %2983 = vdwg.mxu0
    %v2984 = vmul.f32 %v2289, 0.25
    %v2985 = vmul.f32 %v2335, 0.25
    %v2986 = vmul.f32 %v2381, 0.25
    %v2987 = vmul.f32 %v2427, 0.25
    %v2988 = vmul.f32 %v2473, 0.25
    %v2989 = vmul.f32 %v2519, 0.25
    %v2990 = vmul.f32 %v2565, 0.25
    %v2991 = vmul.f32 %v2611, 0.25
    %v2992 = vmul.f32 %v2657, 0.25
    %v2993 = vmul.f32 %v2703, 0.25
    %v2994 = vmul.f32 %v2749, 0.25
    %v2995 = vmul.f32 %v2795, 0.25
    %v2996 = vmul.f32 %v2841, 0.25
    %v2997 = vmul.f32 %v2887, 0.25
    %v2998 = vmul.f32 %v2933, 0.25
    %v2999 = vmul.f32 %v2979, 0.25
    %vm3000 = vcmask 64512
    %v3001 = vsel %vm3000, %v2984, -inf
    %3002 = vmax.xlane.f32.xlu0 %v3001
    %v3003 = vpop.xlane.xlu0 %3002
    %v3004 = vsel %vm3000, %v2985, -inf
    %3005 = vmax.xlane.f32.xlu0 %v3004
    %v3006 = vpop.xlane.xlu0 %3005
    %v3007 = vsel %vm3000, %v2986, -inf
    %3008 = vmax.xlane.f32.xlu0 %v3007
    %v3009 = vpop.xlane.xlu0 %3008
    %v3010 = vsel %vm3000, %v2987, -inf
    %3011 = vmax.xlane.f32.xlu0 %v3010
    %v3012 = vpop.xlane.xlu0 %3011
    %v3013 = vsel %vm3000, %v2988, -inf
    %3014 = vmax.xlane.f32.xlu0 %v3013
    %v3015 = vpop.xlane.xlu0 %3014
    %v3016 = vsel %vm3000, %v2989, -inf
    %3017 = vmax.xlane.f32.xlu0 %v3016
    %v3018 = vpop.xlane.xlu0 %3017
    %v3019 = vsel %vm3000, %v2990, -inf
    %3020 = vmax.xlane.f32.xlu0 %v3019
    %v3021 = vpop.xlane.xlu0 %3020
    %v3022 = vsel %vm3000, %v2991, -inf
    %3023 = vmax.xlane.f32.xlu0 %v3022
    %v3024 = vpop.xlane.xlu0 %3023
    %v3025 = vsel %vm3000, %v2992, -inf
    %3026 = vmax.xlane.f32.xlu0 %v3025
    %v3027 = vpop.xlane.xlu0 %3026
    %v3028 = vsel %vm3000, %v2993, -inf
    %3029 = vmax.xlane.f32.xlu0 %v3028
    %v3030 = vpop.xlane.xlu0 %3029
    %v3031 = vsel %vm3000, %v2994, -inf
    %3032 = vmax.xlane.f32.xlu0 %v3031
    %v3033 = vpop.xlane.xlu0 %3032
    %v3034 = vsel %vm3000, %v2995, -inf
    %3035 = vmax.xlane.f32.xlu0 %v3034
    %v3036 = vpop.xlane.xlu0 %3035
    %v3037 = vsel %vm3000, %v2996, -inf
    %3038 = vmax.xlane.f32.xlu0 %v3037
    %v3039 = vpop.xlane.xlu0 %3038
    %v3040 = vsel %vm3000, %v2997, -inf
    %3041 = vmax.xlane.f32.xlu0 %v3040
    %v3042 = vpop.xlane.xlu0 %3041
    %v3043 = vsel %vm3000, %v2998, -inf
    %3044 = vmax.xlane.f32.xlu0 %v3043
    %v3045 = vpop.xlane.xlu0 %3044
    %v3046 = vsel %vm3000, %v2999, -inf
    %3047 = vmax.xlane.f32.xlu0 %v3046
    %v3048 = vpop.xlane.xlu0 %3047
    %v3049 = vsub.f32 %v2984, %v3003
    %v3050 = vsub.f32 %v2985, %v3006
    %v3051 = vsub.f32 %v2986, %v3009
    %v3052 = vsub.f32 %v2987, %v3012
    %v3053 = vsub.f32 %v2988, %v3015
    %v3054 = vsub.f32 %v2989, %v3018
    %v3055 = vsub.f32 %v2990, %v3021
    %v3056 = vsub.f32 %v2991, %v3024
    %v3057 = vsub.f32 %v2992, %v3027
    %v3058 = vsub.f32 %v2993, %v3030
    %v3059 = vsub.f32 %v2994, %v3033
    %v3060 = vsub.f32 %v2995, %v3036
    %v3061 = vsub.f32 %v2996, %v3039
    %v3062 = vsub.f32 %v2997, %v3042
    %v3063 = vsub.f32 %v2998, %v3045
    %v3064 = vsub.f32 %v2999, %v3048
    %v3065 = vmul.f32 %v3049, 1.442695
    %v3066 = vpow.pop %v3065
    %v3067 = vmul.f32 %v3050, 1.442695
    %v3068 = vpow.pop %v3067
    %v3069 = vmul.f32 %v3051, 1.442695
    %v3070 = vpow.pop %v3069
    %v3071 = vmul.f32 %v3052, 1.442695
    %v3072 = vpow.pop %v3071
    %v3073 = vmul.f32 %v3053, 1.442695
    %v3074 = vpow.pop %v3073
    %v3075 = vmul.f32 %v3054, 1.442695
    %v3076 = vpow.pop %v3075
    %v3077 = vmul.f32 %v3055, 1.442695
    %v3078 = vpow.pop %v3077
    %v3079 = vmul.f32 %v3056, 1.442695
    %v3080 = vpow.pop %v3079
    %v3081 = vmul.f32 %v3057, 1.442695
    %v3082 = vpow.pop %v3081
    %v3083 = vmul.f32 %v3058, 1.442695
    %v3084 = vpow.pop %v3083
    %v3085 = vmul.f32 %v3059, 1.442695
    %v3086 = vpow.pop %v3085
    %v3087 = vmul.f32 %v3060, 1.442695
    %v3088 = vpow.pop %v3087
    %v3089 = vmul.f32 %v3061, 1.442695
    %v3090 = vpow.pop %v3089
    %v3091 = vmul.f32 %v3062, 1.442695
    %v3092 = vpow.pop %v3091
    %v3093 = vmul.f32 %v3063, 1.442695
    %v3094 = vpow.pop %v3093
    %v3095 = vmul.f32 %v3064, 1.442695
    %v3096 = vpow.pop %v3095
    %v3097 = vsel %vm3000, %v3066, 0.0
    %3098 = vadd.xlane.f32.xlu0 %v3097
    %v3099 = vpop.xlane.xlu0 %3098
    %v3100 = vsel %vm3000, %v3068, 0.0
    %3101 = vadd.xlane.f32.xlu0 %v3100
    %v3102 = vpop.xlane.xlu0 %3101
    %v3103 = vsel %vm3000, %v3070, 0.0
    %3104 = vadd.xlane.f32.xlu0 %v3103
    %v3105 = vpop.xlane.xlu0 %3104
    %v3106 = vsel %vm3000, %v3072, 0.0
    %3107 = vadd.xlane.f32.xlu0 %v3106
    %v3108 = vpop.xlane.xlu0 %3107
    %v3109 = vsel %vm3000, %v3074, 0.0
    %3110 = vadd.xlane.f32.xlu0 %v3109
    %v3111 = vpop.xlane.xlu0 %3110
    %v3112 = vsel %vm3000, %v3076, 0.0
    %3113 = vadd.xlane.f32.xlu0 %v3112
    %v3114 = vpop.xlane.xlu0 %3113
    %v3115 = vsel %vm3000, %v3078, 0.0
    %3116 = vadd.xlane.f32.xlu0 %v3115
    %v3117 = vpop.xlane.xlu0 %3116
    %v3118 = vsel %vm3000, %v3080, 0.0
    %3119 = vadd.xlane.f32.xlu0 %v3118
    %v3120 = vpop.xlane.xlu0 %3119
    %v3121 = vsel %vm3000, %v3082, 0.0
    %3122 = vadd.xlane.f32.xlu0 %v3121
    %v3123 = vpop.xlane.xlu0 %3122
    %v3124 = vsel %vm3000, %v3084, 0.0
    %3125 = vadd.xlane.f32.xlu0 %v3124
    %v3126 = vpop.xlane.xlu0 %3125
    %v3127 = vsel %vm3000, %v3086, 0.0
    %3128 = vadd.xlane.f32.xlu0 %v3127
    %v3129 = vpop.xlane.xlu0 %3128
    %v3130 = vsel %vm3000, %v3088, 0.0
    %3131 = vadd.xlane.f32.xlu0 %v3130
    %v3132 = vpop.xlane.xlu0 %3131
    %v3133 = vsel %vm3000, %v3090, 0.0
    %3134 = vadd.xlane.f32.xlu0 %v3133
    %v3135 = vpop.xlane.xlu0 %3134
    %v3136 = vsel %vm3000, %v3092, 0.0
    %3137 = vadd.xlane.f32.xlu0 %v3136
    %v3138 = vpop.xlane.xlu0 %3137
    %v3139 = vsel %vm3000, %v3094, 0.0
    %3140 = vadd.xlane.f32.xlu0 %v3139
    %v3141 = vpop.xlane.xlu0 %3140
    %v3142 = vsel %vm3000, %v3096, 0.0
    %3143 = vadd.xlane.f32.xlu0 %v3142
    %v3144 = vpop.xlane.xlu0 %3143
    %v3145 = vrcp.pop %v3099
    %v3146 = vrcp.pop %v3102
    %v3147 = vrcp.pop %v3105
    %v3148 = vrcp.pop %v3108
    %v3149 = vrcp.pop %v3111
    %v3150 = vrcp.pop %v3114
    %v3151 = vrcp.pop %v3117
    %v3152 = vrcp.pop %v3120
    %v3153 = vrcp.pop %v3123
    %v3154 = vrcp.pop %v3126
    %v3155 = vrcp.pop %v3129
    %v3156 = vrcp.pop %v3132
    %v3157 = vrcp.pop %v3135
    %v3158 = vrcp.pop %v3138
    %v3159 = vrcp.pop %v3141
    %v3160 = vrcp.pop %v3144
    %v3161 = vmul.f32 %v3066, %v3145
    %v3162 = vmul.f32 %v3068, %v3146
    %v3163 = vmul.f32 %v3070, %v3147
    %v3164 = vmul.f32 %v3072, %v3148
    %v3165 = vmul.f32 %v3074, %v3149
    %v3166 = vmul.f32 %v3076, %v3150
    %v3167 = vmul.f32 %v3078, %v3151
    %v3168 = vmul.f32 %v3080, %v3152
    %v3169 = vmul.f32 %v3082, %v3153
    %v3170 = vmul.f32 %v3084, %v3154
    %v3171 = vmul.f32 %v3086, %v3155
    %v3172 = vmul.f32 %v3088, %v3156
    %v3173 = vmul.f32 %v3090, %v3157
    %v3174 = vmul.f32 %v3092, %v3158
    %v3175 = vmul.f32 %v3094, %v3159
    %v3176 = vmul.f32 %v3096, %v3160
    %v3177 = vpack.c.bf16 %v3161, %v3161
    %v3178 = vpack.c.bf16 %v3162, %v3162
    %v3179 = vpack.c.bf16 %v3163, %v3163
    %v3180 = vpack.c.bf16 %v3164, %v3164
    %v3181 = vpack.c.bf16 %v3165, %v3165
    %v3182 = vpack.c.bf16 %v3166, %v3166
    %v3183 = vpack.c.bf16 %v3167, %v3167
    %v3184 = vpack.c.bf16 %v3168, %v3168
    %v3185 = vpack.c.bf16 %v3169, %v3169
    %v3186 = vpack.c.bf16 %v3170, %v3170
    %v3187 = vpack.c.bf16 %v3171, %v3171
    %v3188 = vpack.c.bf16 %v3172, %v3172
    %v3189 = vpack.c.bf16 %v3173, %v3173
    %v3190 = vpack.c.bf16 %v3174, %v3174
    %v3191 = vpack.c.bf16 %v3175, %v3175
    %v3192 = vpack.c.bf16 %v3176, %v3176
    %v3194 = vsel %vm3000, %v3177, 0
    %vm3196 = vcmask 1043456
    %v3198 = vsel %vm3196, %v2231, 0
    %3200 = vmatprep.subr.bf16.mxu0 0
    %3201 = vmatpush1.bf16.msra.mxu0 %v3198
    %3202 = vmatprep.subr.bf16.mxu0 0
    %3203 = vmatpush1.bf16.msra.mxu0 0
    %3204 = vmatprep.subr.bf16.mxu0 0
    %3205 = vmatpush1.bf16.msra.mxu0 0
    %3206 = vmatprep.subr.bf16.mxu0 0
    %3207 = vmatpush1.bf16.msra.mxu0 0
    %3208 = vmatprep.subr.bf16.mxu0 0
    %3209 = vmatpush1.bf16.msra.mxu0 0
    %3210 = vmatprep.subr.bf16.mxu0 0
    %3211 = vmatpush1.bf16.msra.mxu0 0
    %3212 = vmatprep.subr.bf16.mxu0 0
    %3213 = vmatpush1.bf16.msra.mxu0 0
    %3214 = vmatprep.subr.bf16.mxu0 0
    %3215 = vmatpush1.bf16.msra.mxu0 0
    %3216 = vmatprep.subr.bf16.mxu0 0
    %3217 = vmatpush1.bf16.msra.mxu0 0
    %3218 = vmatprep.subr.bf16.mxu0 0
    %3219 = vmatpush1.bf16.msra.mxu0 0
    %3220 = vmatprep.subr.bf16.mxu0 0
    %3221 = vmatpush1.bf16.msra.mxu0 0
    %3222 = vmatprep.subr.bf16.mxu0 0
    %3223 = vmatpush1.bf16.msra.mxu0 0
    %3224 = vmatprep.subr.bf16.mxu0 0
    %3225 = vmatpush1.bf16.msra.mxu0 0
    %3226 = vmatprep.subr.bf16.mxu0 0
    %3227 = vmatpush1.bf16.msra.mxu0 0
    %3228 = vmatprep.subr.bf16.mxu0 0
    %3229 = vmatpush1.bf16.msra.mxu0 0
    %3230 = vmatprep.subr.bf16.mxu0 0
    %3231 = vmatpush1.bf16.msra.mxu0 0
    %3232 = vmatprep.mubr.bf16.mxu0 0
    %3233 = vmatmul.mubr.bf16.gmra.mrb[0].mxu0 %v3194
    %v3234 = vpop.f32.mrb[0].mxu0
    %v3235 = vadd.f32 0.0, %v3234
    %v3236 = vpop.f32.mrb[0].mxu0
    %v3237 = vpop.f32.mrb[0].mxu0
    %v3238 = vpop.f32.mrb[0].mxu0
    %3239 = vdwg.mxu0
    %v3241 = vsel %vm3000, %v3178, 0
    %v3244 = vsel %vm3196, %v2232, 0
    %3246 = vmatprep.subr.bf16.mxu0 0
    %3247 = vmatpush1.bf16.msra.mxu0 %v3244
    %3248 = vmatprep.subr.bf16.mxu0 0
    %3249 = vmatpush1.bf16.msra.mxu0 0
    %3250 = vmatprep.subr.bf16.mxu0 0
    %3251 = vmatpush1.bf16.msra.mxu0 0
    %3252 = vmatprep.subr.bf16.mxu0 0
    %3253 = vmatpush1.bf16.msra.mxu0 0
    %3254 = vmatprep.subr.bf16.mxu0 0
    %3255 = vmatpush1.bf16.msra.mxu0 0
    %3256 = vmatprep.subr.bf16.mxu0 0
    %3257 = vmatpush1.bf16.msra.mxu0 0
    %3258 = vmatprep.subr.bf16.mxu0 0
    %3259 = vmatpush1.bf16.msra.mxu0 0
    %3260 = vmatprep.subr.bf16.mxu0 0
    %3261 = vmatpush1.bf16.msra.mxu0 0
    %3262 = vmatprep.subr.bf16.mxu0 0
    %3263 = vmatpush1.bf16.msra.mxu0 0
    %3264 = vmatprep.subr.bf16.mxu0 0
    %3265 = vmatpush1.bf16.msra.mxu0 0
    %3266 = vmatprep.subr.bf16.mxu0 0
    %3267 = vmatpush1.bf16.msra.mxu0 0
    %3268 = vmatprep.subr.bf16.mxu0 0
    %3269 = vmatpush1.bf16.msra.mxu0 0
    %3270 = vmatprep.subr.bf16.mxu0 0
    %3271 = vmatpush1.bf16.msra.mxu0 0
    %3272 = vmatprep.subr.bf16.mxu0 0
    %3273 = vmatpush1.bf16.msra.mxu0 0
    %3274 = vmatprep.subr.bf16.mxu0 0
    %3275 = vmatpush1.bf16.msra.mxu0 0
    %3276 = vmatprep.subr.bf16.mxu0 0
    %3277 = vmatpush1.bf16.msra.mxu0 0
    %3278 = vmatprep.mubr.bf16.mxu0 0
    %3279 = vmatmul.mubr.bf16.gmra.mrb[0].mxu0 %v3241
    %v3280 = vpop.f32.mrb[0].mxu0
    %v3281 = vadd.f32 0.0, %v3280
    %v3282 = vpop.f32.mrb[0].mxu0
    %v3283 = vpop.f32.mrb[0].mxu0
    %v3284 = vpop.f32.mrb[0].mxu0
    %3285 = vdwg.mxu0
    %v3287 = vsel %vm3000, %v3179, 0
    %v3290 = vsel %vm3196, %v2233, 0
    %3292 = vmatprep.subr.bf16.mxu0 0
    %3293 = vmatpush1.bf16.msra.mxu0 %v3290
    %3294 = vmatprep.subr.bf16.mxu0 0
    %3295 = vmatpush1.bf16.msra.mxu0 0
    %3296 = vmatprep.subr.bf16.mxu0 0
    %3297 = vmatpush1.bf16.msra.mxu0 0
    %3298 = vmatprep.subr.bf16.mxu0 0
    %3299 = vmatpush1.bf16.msra.mxu0 0
    %3300 = vmatprep.subr.bf16.mxu0 0
    %3301 = vmatpush1.bf16.msra.mxu0 0
    %3302 = vmatprep.subr.bf16.mxu0 0
    %3303 = vmatpush1.bf16.msra.mxu0 0
    %3304 = vmatprep.subr.bf16.mxu0 0
    %3305 = vmatpush1.bf16.msra.mxu0 0
    %3306 = vmatprep.subr.bf16.mxu0 0
    %3307 = vmatpush1.bf16.msra.mxu0 0
    %3308 = vmatprep.subr.bf16.mxu0 0
    %3309 = vmatpush1.bf16.msra.mxu0 0
    %3310 = vmatprep.subr.bf16.mxu0 0
    %3311 = vmatpush1.bf16.msra.mxu0 0
    %3312 = vmatprep.subr.bf16.mxu0 0
    %3313 = vmatpush1.bf16.msra.mxu0 0
    %3314 = vmatprep.subr.bf16.mxu0 0
    %3315 = vmatpush1.bf16.msra.mxu0 0
    %3316 = vmatprep.subr.bf16.mxu0 0
    %3317 = vmatpush1.bf16.msra.mxu0 0
    %3318 = vmatprep.subr.bf16.mxu0 0
    %3319 = vmatpush1.bf16.msra.mxu0 0
    %3320 = vmatprep.subr.bf16.mxu0 0
    %3321 = vmatpush1.bf16.msra.mxu0 0
    %3322 = vmatprep.subr.bf16.mxu0 0
    %3323 = vmatpush1.bf16.msra.mxu0 0
    %3324 = vmatprep.mubr.bf16.mxu0 0
    %3325 = vmatmul.mubr.bf16.gmra.mrb[0].mxu0 %v3287
    %v3326 = vpop.f32.mrb[0].mxu0
    %v3327 = vadd.f32 0.0, %v3326
    %v3328 = vpop.f32.mrb[0].mxu0
    %v3329 = vpop.f32.mrb[0].mxu0
    %v3330 = vpop.f32.mrb[0].mxu0
    %3331 = vdwg.mxu0
    %v3333 = vsel %vm3000, %v3180, 0
    %v3336 = vsel %vm3196, %v2234, 0
    %3338 = vmatprep.subr.bf16.mxu0 0
    %3339 = vmatpush1.bf16.msra.mxu0 %v3336
    %3340 = vmatprep.subr.bf16.mxu0 0
    %3341 = vmatpush1.bf16.msra.mxu0 0
    %3342 = vmatprep.subr.bf16.mxu0 0
    %3343 = vmatpush1.bf16.msra.mxu0 0
    %3344 = vmatprep.subr.bf16.mxu0 0
    %3345 = vmatpush1.bf16.msra.mxu0 0
    %3346 = vmatprep.subr.bf16.mxu0 0
    %3347 = vmatpush1.bf16.msra.mxu0 0
    %3348 = vmatprep.subr.bf16.mxu0 0
    %3349 = vmatpush1.bf16.msra.mxu0 0
    %3350 = vmatprep.subr.bf16.mxu0 0
    %3351 = vmatpush1.bf16.msra.mxu0 0
    %3352 = vmatprep.subr.bf16.mxu0 0
    %3353 = vmatpush1.bf16.msra.mxu0 0
    %3354 = vmatprep.subr.bf16.mxu0 0
    %3355 = vmatpush1.bf16.msra.mxu0 0
    %3356 = vmatprep.subr.bf16.mxu0 0
    %3357 = vmatpush1.bf16.msra.mxu0 0
    %3358 = vmatprep.subr.bf16.mxu0 0
    %3359 = vmatpush1.bf16.msra.mxu0 0
    %3360 = vmatprep.subr.bf16.mxu0 0
    %3361 = vmatpush1.bf16.msra.mxu0 0
    %3362 = vmatprep.subr.bf16.mxu0 0
    %3363 = vmatpush1.bf16.msra.mxu0 0
    %3364 = vmatprep.subr.bf16.mxu0 0
    %3365 = vmatpush1.bf16.msra.mxu0 0
    %3366 = vmatprep.subr.bf16.mxu0 0
    %3367 = vmatpush1.bf16.msra.mxu0 0
    %3368 = vmatprep.subr.bf16.mxu0 0
    %3369 = vmatpush1.bf16.msra.mxu0 0
    %3370 = vmatprep.mubr.bf16.mxu0 0
    %3371 = vmatmul.mubr.bf16.gmra.mrb[0].mxu0 %v3333
    %v3372 = vpop.f32.mrb[0].mxu0
    %v3373 = vadd.f32 0.0, %v3372
    %v3374 = vpop.f32.mrb[0].mxu0
    %v3375 = vpop.f32.mrb[0].mxu0
    %v3376 = vpop.f32.mrb[0].mxu0
    %3377 = vdwg.mxu0
    %v3379 = vsel %vm3000, %v3181, 0
    %v3382 = vsel %vm3196, %v2235, 0
    %3384 = vmatprep.subr.bf16.mxu0 0
    %3385 = vmatpush1.bf16.msra.mxu0 %v3382
    %3386 = vmatprep.subr.bf16.mxu0 0
    %3387 = vmatpush1.bf16.msra.mxu0 0
    %3388 = vmatprep.subr.bf16.mxu0 0
    %3389 = vmatpush1.bf16.msra.mxu0 0
    %3390 = vmatprep.subr.bf16.mxu0 0
    %3391 = vmatpush1.bf16.msra.mxu0 0
    %3392 = vmatprep.subr.bf16.mxu0 0
    %3393 = vmatpush1.bf16.msra.mxu0 0
    %3394 = vmatprep.subr.bf16.mxu0 0
    %3395 = vmatpush1.bf16.msra.mxu0 0
    %3396 = vmatprep.subr.bf16.mxu0 0
    %3397 = vmatpush1.bf16.msra.mxu0 0
    %3398 = vmatprep.subr.bf16.mxu0 0
    %3399 = vmatpush1.bf16.msra.mxu0 0
    %3400 = vmatprep.subr.bf16.mxu0 0
    %3401 = vmatpush1.bf16.msra.mxu0 0
    %3402 = vmatprep.subr.bf16.mxu0 0
    %3403 = vmatpush1.bf16.msra.mxu0 0
    %3404 = vmatprep.subr.bf16.mxu0 0
    %3405 = vmatpush1.bf16.msra.mxu0 0
    %3406 = vmatprep.subr.bf16.mxu0 0
    %3407 = vmatpush1.bf16.msra.mxu0 0
    %3408 = vmatprep.subr.bf16.mxu0 0
    %3409 = vmatpush1.bf16.msra.mxu0 0
    %3410 = vmatprep.subr.bf16.mxu0 0
    %3411 = vmatpush1.bf16.msra.mxu0 0
    %3412 = vmatprep.subr.bf16.mxu0 0
    %3413 = vmatpush1.bf16.msra.mxu0 0
    %3414 = vmatprep.subr.bf16.mxu0 0
    %3415 = vmatpush1.bf16.msra.mxu0 0
    %3416 = vmatprep.mubr.bf16.mxu0 0
    %3417 = vmatmul.mubr.bf16.gmra.mrb[0].mxu0 %v3379
    %v3418 = vpop.f32.mrb[0].mxu0
    %v3419 = vadd.f32 0.0, %v3418
    %v3420 = vpop.f32.mrb[0].mxu0
    %v3421 = vpop.f32.mrb[0].mxu0
    %v3422 = vpop.f32.mrb[0].mxu0
    %3423 = vdwg.mxu0
    %v3425 = vsel %vm3000, %v3182, 0
    %v3428 = vsel %vm3196, %v2236, 0
    %3430 = vmatprep.subr.bf16.mxu0 0
    %3431 = vmatpush1.bf16.msra.mxu0 %v3428
    %3432 = vmatprep.subr.bf16.mxu0 0
    %3433 = vmatpush1.bf16.msra.mxu0 0
    %3434 = vmatprep.subr.bf16.mxu0 0
    %3435 = vmatpush1.bf16.msra.mxu0 0
    %3436 = vmatprep.subr.bf16.mxu0 0
    %3437 = vmatpush1.bf16.msra.mxu0 0
    %3438 = vmatprep.subr.bf16.mxu0 0
    %3439 = vmatpush1.bf16.msra.mxu0 0
    %3440 = vmatprep.subr.bf16.mxu0 0
    %3441 = vmatpush1.bf16.msra.mxu0 0
    %3442 = vmatprep.subr.bf16.mxu0 0
    %3443 = vmatpush1.bf16.msra.mxu0 0
    %3444 = vmatprep.subr.bf16.mxu0 0
    %3445 = vmatpush1.bf16.msra.mxu0 0
    %3446 = vmatprep.subr.bf16.mxu0 0
    %3447 = vmatpush1.bf16.msra.mxu0 0
    %3448 = vmatprep.subr.bf16.mxu0 0
    %3449 = vmatpush1.bf16.msra.mxu0 0
    %3450 = vmatprep.subr.bf16.mxu0 0
    %3451 = vmatpush1.bf16.msra.mxu0 0
    %3452 = vmatprep.subr.bf16.mxu0 0
    %3453 = vmatpush1.bf16.msra.mxu0 0
    %3454 = vmatprep.subr.bf16.mxu0 0
    %3455 = vmatpush1.bf16.msra.mxu0 0
    %3456 = vmatprep.subr.bf16.mxu0 0
    %3457 = vmatpush1.bf16.msra.mxu0 0
    %3458 = vmatprep.subr.bf16.mxu0 0
    %3459 = vmatpush1.bf16.msra.mxu0 0
    %3460 = vmatprep.subr.bf16.mxu0 0
    %3461 = vmatpush1.bf16.msra.mxu0 0
    %3462 = vmatprep.mubr.bf16.mxu0 0
    %3463 = vmatmul.mubr.bf16.gmra.mrb[0].mxu0 %v3425
    %v3464 = vpop.f32.mrb[0].mxu0
    %v3465 = vadd.f32 0.0, %v3464
    %v3466 = vpop.f32.mrb[0].mxu0
    %v3467 = vpop.f32.mrb[0].mxu0
    %v3468 = vpop.f32.mrb[0].mxu0
    %3469 = vdwg.mxu0
    %v3471 = vsel %vm3000, %v3183, 0
    %v3474 = vsel %vm3196, %v2237, 0
    %3476 = vmatprep.subr.bf16.mxu0 0
    %3477 = vmatpush1.bf16.msra.mxu0 %v3474
    %3478 = vmatprep.subr.bf16.mxu0 0
    %3479 = vmatpush1.bf16.msra.mxu0 0
    %3480 = vmatprep.subr.bf16.mxu0 0
    %3481 = vmatpush1.bf16.msra.mxu0 0
    %3482 = vmatprep.subr.bf16.mxu0 0
    %3483 = vmatpush1.bf16.msra.mxu0 0
    %3484 = vmatprep.subr.bf16.mxu0 0
    %3485 = vmatpush1.bf16.msra.mxu0 0
    %3486 = vmatprep.subr.bf16.mxu0 0
    %3487 = vmatpush1.bf16.msra.mxu0 0
    %3488 = vmatprep.subr.bf16.mxu0 0
    %3489 = vmatpush1.bf16.msra.mxu0 0
    %3490 = vmatprep.subr.bf16.mxu0 0
    %3491 = vmatpush1.bf16.msra.mxu0 0
    %3492 = vmatprep.subr.bf16.mxu0 0
    %3493 = vmatpush1.bf16.msra.mxu0 0
    %3494 = vmatprep.subr.bf16.mxu0 0
    %3495 = vmatpush1.bf16.msra.mxu0 0
    %3496 = vmatprep.subr.bf16.mxu0 0
    %3497 = vmatpush1.bf16.msra.mxu0 0
    %3498 = vmatprep.subr.bf16.mxu0 0
    %3499 = vmatpush1.bf16.msra.mxu0 0
    %3500 = vmatprep.subr.bf16.mxu0 0
    %3501 = vmatpush1.bf16.msra.mxu0 0
    %3502 = vmatprep.subr.bf16.mxu0 0
    %3503 = vmatpush1.bf16.msra.mxu0 0
    %3504 = vmatprep.subr.bf16.mxu0 0
    %3505 = vmatpush1.bf16.msra.mxu0 0
    %3506 = vmatprep.subr.bf16.mxu0 0
    %3507 = vmatpush1.bf16.msra.mxu0 0
    %3508 = vmatprep.mubr.bf16.mxu0 0
    %3509 = vmatmul.mubr.bf16.gmra.mrb[0].mxu0 %v3471
    %v3510 = vpop.f32.mrb[0].mxu0
    %v3511 = vadd.f32 0.0, %v3510
    %v3512 = vpop.f32.mrb[0].mxu0
    %v3513 = vpop.f32.mrb[0].mxu0
    %v3514 = vpop.f32.mrb[0].mxu0
    %3515 = vdwg.mxu0
    %v3517 = vsel %vm3000, %v3184, 0
    %v3520 = vsel %vm3196, %v2238, 0
    %3522 = vmatprep.subr.bf16.mxu0 0
    %3523 = vmatpush1.bf16.msra.mxu0 %v3520
    %3524 = vmatprep.subr.bf16.mxu0 0
    %3525 = vmatpush1.bf16.msra.mxu0 0
    %3526 = vmatprep.subr.bf16.mxu0 0
    %3527 = vmatpush1.bf16.msra.mxu0 0
    %3528 = vmatprep.subr.bf16.mxu0 0
    %3529 = vmatpush1.bf16.msra.mxu0 0
    %3530 = vmatprep.subr.bf16.mxu0 0
    %3531 = vmatpush1.bf16.msra.mxu0 0
    %3532 = vmatprep.subr.bf16.mxu0 0
    %3533 = vmatpush1.bf16.msra.mxu0 0
    %3534 = vmatprep.subr.bf16.mxu0 0
    %3535 = vmatpush1.bf16.msra.mxu0 0
    %3536 = vmatprep.subr.bf16.mxu0 0
    %3537 = vmatpush1.bf16.msra.mxu0 0
    %3538 = vmatprep.subr.bf16.mxu0 0
    %3539 = vmatpush1.bf16.msra.mxu0 0
    %3540 = vmatprep.subr.bf16.mxu0 0
    %3541 = vmatpush1.bf16.msra.mxu0 0
    %3542 = vmatprep.subr.bf16.mxu0 0
    %3543 = vmatpush1.bf16.msra.mxu0 0
    %3544 = vmatprep.subr.bf16.mxu0 0
    %3545 = vmatpush1.bf16.msra.mxu0 0
    %3546 = vmatprep.subr.bf16.mxu0 0
    %3547 = vmatpush1.bf16.msra.mxu0 0
    %3548 = vmatprep.subr.bf16.mxu0 0
    %3549 = vmatpush1.bf16.msra.mxu0 0
    %3550 = vmatprep.subr.bf16.mxu0 0
    %3551 = vmatpush1.bf16.msra.mxu0 0
    %3552 = vmatprep.subr.bf16.mxu0 0
    %3553 = vmatpush1.bf16.msra.mxu0 0
    %3554 = vmatprep.mubr.bf16.mxu0 0
    %3555 = vmatmul.mubr.bf16.gmra.mrb[0].mxu0 %v3517
    %v3556 = vpop.f32.mrb[0].mxu0
    %v3557 = vadd.f32 0.0, %v3556
    %v3558 = vpop.f32.mrb[0].mxu0
    %v3559 = vpop.f32.mrb[0].mxu0
    %v3560 = vpop.f32.mrb[0].mxu0
    %3561 = vdwg.mxu0
    %v3563 = vsel %vm3000, %v3185, 0
    %v3566 = vsel %vm3196, %v2239, 0
    %3568 = vmatprep.subr.bf16.mxu0 0
    %3569 = vmatpush1.bf16.msra.mxu0 %v3566
    %3570 = vmatprep.subr.bf16.mxu0 0
    %3571 = vmatpush1.bf16.msra.mxu0 0
    %3572 = vmatprep.subr.bf16.mxu0 0
    %3573 = vmatpush1.bf16.msra.mxu0 0
    %3574 = vmatprep.subr.bf16.mxu0 0
    %3575 = vmatpush1.bf16.msra.mxu0 0
    %3576 = vmatprep.subr.bf16.mxu0 0
    %3577 = vmatpush1.bf16.msra.mxu0 0
    %3578 = vmatprep.subr.bf16.mxu0 0
    %3579 = vmatpush1.bf16.msra.mxu0 0
    %3580 = vmatprep.subr.bf16.mxu0 0
    %3581 = vmatpush1.bf16.msra.mxu0 0
    %3582 = vmatprep.subr.bf16.mxu0 0
    %3583 = vmatpush1.bf16.msra.mxu0 0
    %3584 = vmatprep.subr.bf16.mxu0 0
    %3585 = vmatpush1.bf16.msra.mxu0 0
    %3586 = vmatprep.subr.bf16.mxu0 0
    %3587 = vmatpush1.bf16.msra.mxu0 0
    %3588 = vmatprep.subr.bf16.mxu0 0
    %3589 = vmatpush1.bf16.msra.mxu0 0
    %3590 = vmatprep.subr.bf16.mxu0 0
    %3591 = vmatpush1.bf16.msra.mxu0 0
    %3592 = vmatprep.subr.bf16.mxu0 0
    %3593 = vmatpush1.bf16.msra.mxu0 0
    %3594 = vmatprep.subr.bf16.mxu0 0
    %3595 = vmatpush1.bf16.msra.mxu0 0
    %3596 = vmatprep.subr.bf16.mxu0 0
    %3597 = vmatpush1.bf16.msra.mxu0 0
    %3598 = vmatprep.subr.bf16.mxu0 0
    %3599 = vmatpush1.bf16.msra.mxu0 0
    %3600 = vmatprep.mubr.bf16.mxu0 0
    %3601 = vmatmul.mubr.bf16.gmra.mrb[0].mxu0 %v3563
    %v3602 = vpop.f32.mrb[0].mxu0
    %v3603 = vadd.f32 0.0, %v3602
    %v3604 = vpop.f32.mrb[0].mxu0
    %v3605 = vpop.f32.mrb[0].mxu0
    %v3606 = vpop.f32.mrb[0].mxu0
    %3607 = vdwg.mxu0
    %v3609 = vsel %vm3000, %v3186, 0
    %v3612 = vsel %vm3196, %v2240, 0
    %3614 = vmatprep.subr.bf16.mxu0 0
    %3615 = vmatpush1.bf16.msra.mxu0 %v3612
    %3616 = vmatprep.subr.bf16.mxu0 0
    %3617 = vmatpush1.bf16.msra.mxu0 0
    %3618 = vmatprep.subr.bf16.mxu0 0
    %3619 = vmatpush1.bf16.msra.mxu0 0
    %3620 = vmatprep.subr.bf16.mxu0 0
    %3621 = vmatpush1.bf16.msra.mxu0 0
    %3622 = vmatprep.subr.bf16.mxu0 0
    %3623 = vmatpush1.bf16.msra.mxu0 0
    %3624 = vmatprep.subr.bf16.mxu0 0
    %3625 = vmatpush1.bf16.msra.mxu0 0
    %3626 = vmatprep.subr.bf16.mxu0 0
    %3627 = vmatpush1.bf16.msra.mxu0 0
    %3628 = vmatprep.subr.bf16.mxu0 0
    %3629 = vmatpush1.bf16.msra.mxu0 0
    %3630 = vmatprep.subr.bf16.mxu0 0
    %3631 = vmatpush1.bf16.msra.mxu0 0
    %3632 = vmatprep.subr.bf16.mxu0 0
    %3633 = vmatpush1.bf16.msra.mxu0 0
    %3634 = vmatprep.subr.bf16.mxu0 0
    %3635 = vmatpush1.bf16.msra.mxu0 0
    %3636 = vmatprep.subr.bf16.mxu0 0
    %3637 = vmatpush1.bf16.msra.mxu0 0
    %3638 = vmatprep.subr.bf16.mxu0 0
    %3639 = vmatpush1.bf16.msra.mxu0 0
    %3640 = vmatprep.subr.bf16.mxu0 0
    %3641 = vmatpush1.bf16.msra.mxu0 0
    %3642 = vmatprep.subr.bf16.mxu0 0
    %3643 = vmatpush1.bf16.msra.mxu0 0
    %3644 = vmatprep.subr.bf16.mxu0 0
    %3645 = vmatpush1.bf16.msra.mxu0 0
    %3646 = vmatprep.mubr.bf16.mxu0 0
    %3647 = vmatmul.mubr.bf16.gmra.mrb[0].mxu0 %v3609
    %v3648 = vpop.f32.mrb[0].mxu0
    %v3649 = vadd.f32 0.0, %v3648
    %v3650 = vpop.f32.mrb[0].mxu0
    %v3651 = vpop.f32.mrb[0].mxu0
    %v3652 = vpop.f32.mrb[0].mxu0
    %3653 = vdwg.mxu0
    %v3655 = vsel %vm3000, %v3187, 0
    %v3658 = vsel %vm3196, %v2241, 0
    %3660 = vmatprep.subr.bf16.mxu0 0
    %3661 = vmatpush1.bf16.msra.mxu0 %v3658
    %3662 = vmatprep.subr.bf16.mxu0 0
    %3663 = vmatpush1.bf16.msra.mxu0 0
    %3664 = vmatprep.subr.bf16.mxu0 0
    %3665 = vmatpush1.bf16.msra.mxu0 0
    %3666 = vmatprep.subr.bf16.mxu0 0
    %3667 = vmatpush1.bf16.msra.mxu0 0
    %3668 = vmatprep.subr.bf16.mxu0 0
    %3669 = vmatpush1.bf16.msra.mxu0 0
    %3670 = vmatprep.subr.bf16.mxu0 0
    %3671 = vmatpush1.bf16.msra.mxu0 0
    %3672 = vmatprep.subr.bf16.mxu0 0
    %3673 = vmatpush1.bf16.msra.mxu0 0
    %3674 = vmatprep.subr.bf16.mxu0 0
    %3675 = vmatpush1.bf16.msra.mxu0 0
    %3676 = vmatprep.subr.bf16.mxu0 0
    %3677 = vmatpush1.bf16.msra.mxu0 0
    %3678 = vmatprep.subr.bf16.mxu0 0
    %3679 = vmatpush1.bf16.msra.mxu0 0
    %3680 = vmatprep.subr.bf16.mxu0 0
    %3681 = vmatpush1.bf16.msra.mxu0 0
    %3682 = vmatprep.subr.bf16.mxu0 0
    %3683 = vmatpush1.bf16.msra.mxu0 0
    %3684 = vmatprep.subr.bf16.mxu0 0
    %3685 = vmatpush1.bf16.msra.mxu0 0
    %3686 = vmatprep.subr.bf16.mxu0 0
    %3687 = vmatpush1.bf16.msra.mxu0 0
    %3688 = vmatprep.subr.bf16.mxu0 0
    %3689 = vmatpush1.bf16.msra.mxu0 0
    %3690 = vmatprep.subr.bf16.mxu0 0
    %3691 = vmatpush1.bf16.msra.mxu0 0
    %3692 = vmatprep.mubr.bf16.mxu0 0
    %3693 = vmatmul.mubr.bf16.gmra.mrb[0].mxu0 %v3655
    %v3694 = vpop.f32.mrb[0].mxu0
    %v3695 = vadd.f32 0.0, %v3694
    %v3696 = vpop.f32.mrb[0].mxu0
    %v3697 = vpop.f32.mrb[0].mxu0
    %v3698 = vpop.f32.mrb[0].mxu0
    %3699 = vdwg.mxu0
    %v3701 = vsel %vm3000, %v3188, 0
    %v3704 = vsel %vm3196, %v2242, 0
    %3706 = vmatprep.subr.bf16.mxu0 0
    %3707 = vmatpush1.bf16.msra.mxu0 %v3704
    %3708 = vmatprep.subr.bf16.mxu0 0
    %3709 = vmatpush1.bf16.msra.mxu0 0
    %3710 = vmatprep.subr.bf16.mxu0 0
    %3711 = vmatpush1.bf16.msra.mxu0 0
    %3712 = vmatprep.subr.bf16.mxu0 0
    %3713 = vmatpush1.bf16.msra.mxu0 0
    %3714 = vmatprep.subr.bf16.mxu0 0
    %3715 = vmatpush1.bf16.msra.mxu0 0
    %3716 = vmatprep.subr.bf16.mxu0 0
    %3717 = vmatpush1.bf16.msra.mxu0 0
    %3718 = vmatprep.subr.bf16.mxu0 0
    %3719 = vmatpush1.bf16.msra.mxu0 0
    %3720 = vmatprep.subr.bf16.mxu0 0
    %3721 = vmatpush1.bf16.msra.mxu0 0
    %3722 = vmatprep.subr.bf16.mxu0 0
    %3723 = vmatpush1.bf16.msra.mxu0 0
    %3724 = vmatprep.subr.bf16.mxu0 0
    %3725 = vmatpush1.bf16.msra.mxu0 0
    %3726 = vmatprep.subr.bf16.mxu0 0
    %3727 = vmatpush1.bf16.msra.mxu0 0
    %3728 = vmatprep.subr.bf16.mxu0 0
    %3729 = vmatpush1.bf16.msra.mxu0 0
    %3730 = vmatprep.subr.bf16.mxu0 0
    %3731 = vmatpush1.bf16.msra.mxu0 0
    %3732 = vmatprep.subr.bf16.mxu0 0
    %3733 = vmatpush1.bf16.msra.mxu0 0
    %3734 = vmatprep.subr.bf16.mxu0 0
    %3735 = vmatpush1.bf16.msra.mxu0 0
    %3736 = vmatprep.subr.bf16.mxu0 0
    %3737 = vmatpush1.bf16.msra.mxu0 0
    %3738 = vmatprep.mubr.bf16.mxu0 0
    %3739 = vmatmul.mubr.bf16.gmra.mrb[0].mxu0 %v3701
    %v3740 = vpop.f32.mrb[0].mxu0
    %v3741 = vadd.f32 0.0, %v3740
    %v3742 = vpop.f32.mrb[0].mxu0
    %v3743 = vpop.f32.mrb[0].mxu0
    %v3744 = vpop.f32.mrb[0].mxu0
    %3745 = vdwg.mxu0
    %v3747 = vsel %vm3000, %v3189, 0
    %v3750 = vsel %vm3196, %v2243, 0
    %3752 = vmatprep.subr.bf16.mxu0 0
    %3753 = vmatpush1.bf16.msra.mxu0 %v3750
    %3754 = vmatprep.subr.bf16.mxu0 0
    %3755 = vmatpush1.bf16.msra.mxu0 0
    %3756 = vmatprep.subr.bf16.mxu0 0
    %3757 = vmatpush1.bf16.msra.mxu0 0
    %3758 = vmatprep.subr.bf16.mxu0 0
    %3759 = vmatpush1.bf16.msra.mxu0 0
    %3760 = vmatprep.subr.bf16.mxu0 0
    %3761 = vmatpush1.bf16.msra.mxu0 0
    %3762 = vmatprep.subr.bf16.mxu0 0
    %3763 = vmatpush1.bf16.msra.mxu0 0
    %3764 = vmatprep.subr.bf16.mxu0 0
    %3765 = vmatpush1.bf16.msra.mxu0 0
    %3766 = vmatprep.subr.bf16.mxu0 0
    %3767 = vmatpush1.bf16.msra.mxu0 0
    %3768 = vmatprep.subr.bf16.mxu0 0
    %3769 = vmatpush1.bf16.msra.mxu0 0
    %3770 = vmatprep.subr.bf16.mxu0 0
    %3771 = vmatpush1.bf16.msra.mxu0 0
    %3772 = vmatprep.subr.bf16.mxu0 0
    %3773 = vmatpush1.bf16.msra.mxu0 0
    %3774 = vmatprep.subr.bf16.mxu0 0
    %3775 = vmatpush1.bf16.msra.mxu0 0
    %3776 = vmatprep.subr.bf16.mxu0 0
    %3777 = vmatpush1.bf16.msra.mxu0 0
    %3778 = vmatprep.subr.bf16.mxu0 0
    %3779 = vmatpush1.bf16.msra.mxu0 0
    %3780 = vmatprep.subr.bf16.mxu0 0
    %3781 = vmatpush1.bf16.msra.mxu0 0
    %3782 = vmatprep.subr.bf16.mxu0 0
    %3783 = vmatpush1.bf16.msra.mxu0 0
    %3784 = vmatprep.mubr.bf16.mxu0 0
    %3785 = vmatmul.mubr.bf16.gmra.mrb[0].mxu0 %v3747
    %v3786 = vpop.f32.mrb[0].mxu0
    %v3787 = vadd.f32 0.0, %v3786
    %v3788 = vpop.f32.mrb[0].mxu0
    %v3789 = vpop.f32.mrb[0].mxu0
    %v3790 = vpop.f32.mrb[0].mxu0
    %3791 = vdwg.mxu0
    %v3793 = vsel %vm3000, %v3190, 0
    %v3796 = vsel %vm3196, %v2244, 0
    %3798 = vmatprep.subr.bf16.mxu0 0
    %3799 = vmatpush1.bf16.msra.mxu0 %v3796
    %3800 = vmatprep.subr.bf16.mxu0 0
    %3801 = vmatpush1.bf16.msra.mxu0 0
    %3802 = vmatprep.subr.bf16.mxu0 0
    %3803 = vmatpush1.bf16.msra.mxu0 0
    %3804 = vmatprep.subr.bf16.mxu0 0
    %3805 = vmatpush1.bf16.msra.mxu0 0
    %3806 = vmatprep.subr.bf16.mxu0 0
    %3807 = vmatpush1.bf16.msra.mxu0 0
    %3808 = vmatprep.subr.bf16.mxu0 0
    %3809 = vmatpush1.bf16.msra.mxu0 0
    %3810 = vmatprep.subr.bf16.mxu0 0
    %3811 = vmatpush1.bf16.msra.mxu0 0
    %3812 = vmatprep.subr.bf16.mxu0 0
    %3813 = vmatpush1.bf16.msra.mxu0 0
    %3814 = vmatprep.subr.bf16.mxu0 0
    %3815 = vmatpush1.bf16.msra.mxu0 0
    %3816 = vmatprep.subr.bf16.mxu0 0
    %3817 = vmatpush1.bf16.msra.mxu0 0
    %3818 = vmatprep.subr.bf16.mxu0 0
    %3819 = vmatpush1.bf16.msra.mxu0 0
    %3820 = vmatprep.subr.bf16.mxu0 0
    %3821 = vmatpush1.bf16.msra.mxu0 0
    %3822 = vmatprep.subr.bf16.mxu0 0
    %3823 = vmatpush1.bf16.msra.mxu0 0
    %3824 = vmatprep.subr.bf16.mxu0 0
    %3825 = vmatpush1.bf16.msra.mxu0 0
    %3826 = vmatprep.subr.bf16.mxu0 0
    %3827 = vmatpush1.bf16.msra.mxu0 0
    %3828 = vmatprep.subr.bf16.mxu0 0
    %3829 = vmatpush1.bf16.msra.mxu0 0
    %3830 = vmatprep.mubr.bf16.mxu0 0
    %3831 = vmatmul.mubr.bf16.gmra.mrb[0].mxu0 %v3793
    %v3832 = vpop.f32.mrb[0].mxu0
    %v3833 = vadd.f32 0.0, %v3832
    %v3834 = vpop.f32.mrb[0].mxu0
    %v3835 = vpop.f32.mrb[0].mxu0
    %v3836 = vpop.f32.mrb[0].mxu0
    %3837 = vdwg.mxu0
    %v3839 = vsel %vm3000, %v3191, 0
    %v3842 = vsel %vm3196, %v2245, 0
    %3844 = vmatprep.subr.bf16.mxu0 0
    %3845 = vmatpush1.bf16.msra.mxu0 %v3842
    %3846 = vmatprep.subr.bf16.mxu0 0
    %3847 = vmatpush1.bf16.msra.mxu0 0
    %3848 = vmatprep.subr.bf16.mxu0 0
    %3849 = vmatpush1.bf16.msra.mxu0 0
    %3850 = vmatprep.subr.bf16.mxu0 0
    %3851 = vmatpush1.bf16.msra.mxu0 0
    %3852 = vmatprep.subr.bf16.mxu0 0
    %3853 = vmatpush1.bf16.msra.mxu0 0
    %3854 = vmatprep.subr.bf16.mxu0 0
    %3855 = vmatpush1.bf16.msra.mxu0 0
    %3856 = vmatprep.subr.bf16.mxu0 0
    %3857 = vmatpush1.bf16.msra.mxu0 0
    %3858 = vmatprep.subr.bf16.mxu0 0
    %3859 = vmatpush1.bf16.msra.mxu0 0
    %3860 = vmatprep.subr.bf16.mxu0 0
    %3861 = vmatpush1.bf16.msra.mxu0 0
    %3862 = vmatprep.subr.bf16.mxu0 0
    %3863 = vmatpush1.bf16.msra.mxu0 0
    %3864 = vmatprep.subr.bf16.mxu0 0
    %3865 = vmatpush1.bf16.msra.mxu0 0
    %3866 = vmatprep.subr.bf16.mxu0 0
    %3867 = vmatpush1.bf16.msra.mxu0 0
    %3868 = vmatprep.subr.bf16.mxu0 0
    %3869 = vmatpush1.bf16.msra.mxu0 0
    %3870 = vmatprep.subr.bf16.mxu0 0
    %3871 = vmatpush1.bf16.msra.mxu0 0
    %3872 = vmatprep.subr.bf16.mxu0 0
    %3873 = vmatpush1.bf16.msra.mxu0 0
    %3874 = vmatprep.subr.bf16.mxu0 0
    %3875 = vmatpush1.bf16.msra.mxu0 0
    %3876 = vmatprep.mubr.bf16.mxu0 0
    %3877 = vmatmul.mubr.bf16.gmra.mrb[0].mxu0 %v3839
    %v3878 = vpop.f32.mrb[0].mxu0
    %v3879 = vadd.f32 0.0, %v3878
    %v3880 = vpop.f32.mrb[0].mxu0
    %v3881 = vpop.f32.mrb[0].mxu0
    %v3882 = vpop.f32.mrb[0].mxu0
    %3883 = vdwg.mxu0
    %v3885 = vsel %vm3000, %v3192, 0
    %v3888 = vsel %vm3196, %v2246, 0
    %3890 = vmatprep.subr.bf16.mxu0 0
    %3891 = vmatpush1.bf16.msra.mxu0 %v3888
    %3892 = vmatprep.subr.bf16.mxu0 0
    %3893 = vmatpush1.bf16.msra.mxu0 0
    %3894 = vmatprep.subr.bf16.mxu0 0
    %3895 = vmatpush1.bf16.msra.mxu0 0
    %3896 = vmatprep.subr.bf16.mxu0 0
    %3897 = vmatpush1.bf16.msra.mxu0 0
    %3898 = vmatprep.subr.bf16.mxu0 0
    %3899 = vmatpush1.bf16.msra.mxu0 0
    %3900 = vmatprep.subr.bf16.mxu0 0
    %3901 = vmatpush1.bf16.msra.mxu0 0
    %3902 = vmatprep.subr.bf16.mxu0 0
    %3903 = vmatpush1.bf16.msra.mxu0 0
    %3904 = vmatprep.subr.bf16.mxu0 0
    %3905 = vmatpush1.bf16.msra.mxu0 0
    %3906 = vmatprep.subr.bf16.mxu0 0
    %3907 = vmatpush1.bf16.msra.mxu0 0
    %3908 = vmatprep.subr.bf16.mxu0 0
    %3909 = vmatpush1.bf16.msra.mxu0 0
    %3910 = vmatprep.subr.bf16.mxu0 0
    %3911 = vmatpush1.bf16.msra.mxu0 0
    %3912 = vmatprep.subr.bf16.mxu0 0
    %3913 = vmatpush1.bf16.msra.mxu0 0
    %3914 = vmatprep.subr.bf16.mxu0 0
    %3915 = vmatpush1.bf16.msra.mxu0 0
    %3916 = vmatprep.subr.bf16.mxu0 0
    %3917 = vmatpush1.bf16.msra.mxu0 0
    %3918 = vmatprep.subr.bf16.mxu0 0
    %3919 = vmatpush1.bf16.msra.mxu0 0
    %3920 = vmatprep.subr.bf16.mxu0 0
    %3921 = vmatpush1.bf16.msra.mxu0 0
    %3922 = vmatprep.mubr.bf16.mxu0 0
    %3923 = vmatmul.mubr.bf16.gmra.mrb[0].mxu0 %v3885
    %v3924 = vpop.f32.mrb[0].mxu0
    %v3925 = vadd.f32 0.0, %v3924
    %v3926 = vpop.f32.mrb[0].mxu0
    %v3927 = vpop.f32.mrb[0].mxu0
    %v3928 = vpop.f32.mrb[0].mxu0
    %3929 = vdwg.mxu0
    %v3930 = vcombine.low %v3235, %v3327
    %v3931 = vcombine.high %v3235, %v3327
    %v3933 = vunpack.c.l.s4 1983009808
    %v3934 = vunpack.c.0.s8 %v3933
    %v3935 = vlaneseq
    %v3936 = vshrl.u32 %v3935, 7
    %v3937 = vsub.s32 %v3934, %v3936
    %v3938 = vrot.slane %v3930, %v3937
    %v3940 = vunpack.c.l.s4 1983009808
    %v3941 = vunpack.c.0.s8 %v3940
    %v3942 = vlaneseq
    %v3943 = vshrl.u32 %v3942, 7
    %v3944 = vsub.s32 %v3941, %v3943
    %v3945 = vrot.slane %v3931, %v3944
    %v3946 = vcombine.low %v3281, %v3373
    %v3947 = vcombine.high %v3281, %v3373
    %v3949 = vunpack.c.l.s4 1983009808
    %v3950 = vunpack.c.0.s8 %v3949
    %v3951 = vlaneseq
    %v3952 = vshrl.u32 %v3951, 7
    %v3953 = vsub.s32 %v3950, %v3952
    %v3954 = vrot.slane %v3946, %v3953
    %v3956 = vunpack.c.l.s4 1983009808
    %v3957 = vunpack.c.0.s8 %v3956
    %v3958 = vlaneseq
    %v3959 = vshrl.u32 %v3958, 7
    %v3960 = vsub.s32 %v3957, %v3959
    %v3961 = vrot.slane %v3947, %v3960
    %v3962 = vcombine.low %v3419, %v3511
    %v3963 = vcombine.high %v3419, %v3511
    %v3965 = vunpack.c.l.s4 1983009808
    %v3966 = vunpack.c.0.s8 %v3965
    %v3967 = vlaneseq
    %v3968 = vshrl.u32 %v3967, 7
    %v3969 = vsub.s32 %v3966, %v3968
    %v3970 = vrot.slane %v3962, %v3969
    %v3972 = vunpack.c.l.s4 1983009808
    %v3973 = vunpack.c.0.s8 %v3972
    %v3974 = vlaneseq
    %v3975 = vshrl.u32 %v3974, 7
    %v3976 = vsub.s32 %v3973, %v3975
    %v3977 = vrot.slane %v3963, %v3976
    %v3978 = vcombine.low %v3465, %v3557
    %v3979 = vcombine.high %v3465, %v3557
    %v3981 = vunpack.c.l.s4 1983009808
    %v3982 = vunpack.c.0.s8 %v3981
    %v3983 = vlaneseq
    %v3984 = vshrl.u32 %v3983, 7
    %v3985 = vsub.s32 %v3982, %v3984
    %v3986 = vrot.slane %v3978, %v3985
    %v3988 = vunpack.c.l.s4 1983009808
    %v3989 = vunpack.c.0.s8 %v3988
    %v3990 = vlaneseq
    %v3991 = vshrl.u32 %v3990, 7
    %v3992 = vsub.s32 %v3989, %v3991
    %v3993 = vrot.slane %v3979, %v3992
    %v3994 = vcombine.low %v3938, %v3954
    %v3995 = vcombine.high %v3938, %v3954
    %v3997 = vunpack.c.l.s4 1934713408
    %v3998 = vunpack.c.0.s8 %v3997
    %v3999 = vlaneseq
    %v4000 = vshrl.u32 %v3999, 7
    %v4001 = vsub.s32 %v3998, %v4000
    %v4002 = vrot.slane %v3994, %v4001
    %v4004 = vunpack.c.l.s4 1934713408
    %v4005 = vunpack.c.0.s8 %v4004
    %v4006 = vlaneseq
    %v4007 = vshrl.u32 %v4006, 7
    %v4008 = vsub.s32 %v4005, %v4007
    %v4009 = vrot.slane %v3995, %v4008
    %v4010 = vcombine.low %v3945, %v3961
    %v4011 = vcombine.high %v3945, %v3961
    %v4013 = vunpack.c.l.s4 1934713408
    %v4014 = vunpack.c.0.s8 %v4013
    %v4015 = vlaneseq
    %v4016 = vshrl.u32 %v4015, 7
    %v4017 = vsub.s32 %v4014, %v4016
    %v4018 = vrot.slane %v4010, %v4017
    %v4020 = vunpack.c.l.s4 1934713408
    %v4021 = vunpack.c.0.s8 %v4020
    %v4022 = vlaneseq
    %v4023 = vshrl.u32 %v4022, 7
    %v4024 = vsub.s32 %v4021, %v4023
    %v4025 = vrot.slane %v4011, %v4024
    %v4026 = vcombine.low %v3970, %v3986
    %v4027 = vcombine.high %v3970, %v3986
    %v4029 = vunpack.c.l.s4 1934713408
    %v4030 = vunpack.c.0.s8 %v4029
    %v4031 = vlaneseq
    %v4032 = vshrl.u32 %v4031, 7
    %v4033 = vsub.s32 %v4030, %v4032
    %v4034 = vrot.slane %v4026, %v4033
    %v4036 = vunpack.c.l.s4 1934713408
    %v4037 = vunpack.c.0.s8 %v4036
    %v4038 = vlaneseq
    %v4039 = vshrl.u32 %v4038, 7
    %v4040 = vsub.s32 %v4037, %v4039
    %v4041 = vrot.slane %v4027, %v4040
    %v4042 = vcombine.low %v3977, %v3993
    %v4043 = vcombine.high %v3977, %v3993
    %v4045 = vunpack.c.l.s4 1934713408
    %v4046 = vunpack.c.0.s8 %v4045
    %v4047 = vlaneseq
    %v4048 = vshrl.u32 %v4047, 7
    %v4049 = vsub.s32 %v4046, %v4048
    %v4050 = vrot.slane %v4042, %v4049
    %v4052 = vunpack.c.l.s4 1934713408
    %v4053 = vunpack.c.0.s8 %v4052
    %v4054 = vlaneseq
    %v4055 = vshrl.u32 %v4054, 7
    %v4056 = vsub.s32 %v4053, %v4055
    %v4057 = vrot.slane %v4043, %v4056
    %v4058 = vcombine.low %v4002, %v4034
    %v4059 = vcombine.high %v4002, %v4034
    %v4060 = vcombine.low %v4009, %v4041
    %v4061 = vcombine.high %v4009, %v4041
    %v4062 = vcombine.low %v4018, %v4050
    %v4063 = vcombine.high %v4018, %v4050
    %v4064 = vcombine.low %v4025, %v4057
    %v4065 = vcombine.high %v4025, %v4057
    %v4066 = vcombine.low %v3603, %v3695
    %v4067 = vcombine.high %v3603, %v3695
    %v4069 = vunpack.c.l.s4 1983009808
    %v4070 = vunpack.c.0.s8 %v4069
    %v4071 = vlaneseq
    %v4072 = vshrl.u32 %v4071, 7
    %v4073 = vsub.s32 %v4070, %v4072
    %v4074 = vrot.slane %v4066, %v4073
    %v4076 = vunpack.c.l.s4 1983009808
    %v4077 = vunpack.c.0.s8 %v4076
    %v4078 = vlaneseq
    %v4079 = vshrl.u32 %v4078, 7
    %v4080 = vsub.s32 %v4077, %v4079
    %v4081 = vrot.slane %v4067, %v4080
    %v4082 = vcombine.low %v3649, %v3741
    %v4083 = vcombine.high %v3649, %v3741
    %v4085 = vunpack.c.l.s4 1983009808
    %v4086 = vunpack.c.0.s8 %v4085
    %v4087 = vlaneseq
    %v4088 = vshrl.u32 %v4087, 7
    %v4089 = vsub.s32 %v4086, %v4088
    %v4090 = vrot.slane %v4082, %v4089
    %v4092 = vunpack.c.l.s4 1983009808
    %v4093 = vunpack.c.0.s8 %v4092
    %v4094 = vlaneseq
    %v4095 = vshrl.u32 %v4094, 7
    %v4096 = vsub.s32 %v4093, %v4095
    %v4097 = vrot.slane %v4083, %v4096
    %v4098 = vcombine.low %v3787, %v3879
    %v4099 = vcombine.high %v3787, %v3879
    %v4101 = vunpack.c.l.s4 1983009808
    %v4102 = vunpack.c.0.s8 %v4101
    %v4103 = vlaneseq
    %v4104 = vshrl.u32 %v4103, 7
    %v4105 = vsub.s32 %v4102, %v4104
    %v4106 = vrot.slane %v4098, %v4105
    %v4108 = vunpack.c.l.s4 1983009808
    %v4109 = vunpack.c.0.s8 %v4108
    %v4110 = vlaneseq
    %v4111 = vshrl.u32 %v4110, 7
    %v4112 = vsub.s32 %v4109, %v4111
    %v4113 = vrot.slane %v4099, %v4112
    %v4114 = vcombine.low %v3833, %v3925
    %v4115 = vcombine.high %v3833, %v3925
    %v4117 = vunpack.c.l.s4 1983009808
    %v4118 = vunpack.c.0.s8 %v4117
    %v4119 = vlaneseq
    %v4120 = vshrl.u32 %v4119, 7
    %v4121 = vsub.s32 %v4118, %v4120
    %v4122 = vrot.slane %v4114, %v4121
    %v4124 = vunpack.c.l.s4 1983009808
    %v4125 = vunpack.c.0.s8 %v4124
    %v4126 = vlaneseq
    %v4127 = vshrl.u32 %v4126, 7
    %v4128 = vsub.s32 %v4125, %v4127
    %v4129 = vrot.slane %v4115, %v4128
    %v4130 = vcombine.low %v4074, %v4090
    %v4131 = vcombine.high %v4074, %v4090
    %v4133 = vunpack.c.l.s4 1934713408
    %v4134 = vunpack.c.0.s8 %v4133
    %v4135 = vlaneseq
    %v4136 = vshrl.u32 %v4135, 7
    %v4137 = vsub.s32 %v4134, %v4136
    %v4138 = vrot.slane %v4130, %v4137
    %v4140 = vunpack.c.l.s4 1934713408
    %v4141 = vunpack.c.0.s8 %v4140
    %v4142 = vlaneseq
    %v4143 = vshrl.u32 %v4142, 7
    %v4144 = vsub.s32 %v4141, %v4143
    %v4145 = vrot.slane %v4131, %v4144
    %v4146 = vcombine.low %v4081, %v4097
    %v4147 = vcombine.high %v4081, %v4097
    %v4149 = vunpack.c.l.s4 1934713408
    %v4150 = vunpack.c.0.s8 %v4149
    %v4151 = vlaneseq
    %v4152 = vshrl.u32 %v4151, 7
    %v4153 = vsub.s32 %v4150, %v4152
    %v4154 = vrot.slane %v4146, %v4153
    %v4156 = vunpack.c.l.s4 1934713408
    %v4157 = vunpack.c.0.s8 %v4156
    %v4158 = vlaneseq
    %v4159 = vshrl.u32 %v4158, 7
    %v4160 = vsub.s32 %v4157, %v4159
    %v4161 = vrot.slane %v4147, %v4160
    %v4162 = vcombine.low %v4106, %v4122
    %v4163 = vcombine.high %v4106, %v4122
    %v4165 = vunpack.c.l.s4 1934713408
    %v4166 = vunpack.c.0.s8 %v4165
    %v4167 = vlaneseq
    %v4168 = vshrl.u32 %v4167, 7
    %v4169 = vsub.s32 %v4166, %v4168
    %v4170 = vrot.slane %v4162, %v4169
    %v4172 = vunpack.c.l.s4 1934713408
    %v4173 = vunpack.c.0.s8 %v4172
    %v4174 = vlaneseq
    %v4175 = vshrl.u32 %v4174, 7
    %v4176 = vsub.s32 %v4173, %v4175
    %v4177 = vrot.slane %v4163, %v4176
    %v4178 = vcombine.low %v4113, %v4129
    %v4179 = vcombine.high %v4113, %v4129
    %v4181 = vunpack.c.l.s4 1934713408
    %v4182 = vunpack.c.0.s8 %v4181
    %v4183 = vlaneseq
    %v4184 = vshrl.u32 %v4183, 7
    %v4185 = vsub.s32 %v4182, %v4184
    %v4186 = vrot.slane %v4178, %v4185
    %v4188 = vunpack.c.l.s4 1934713408
    %v4189 = vunpack.c.0.s8 %v4188
    %v4190 = vlaneseq
    %v4191 = vshrl.u32 %v4190, 7
    %v4192 = vsub.s32 %v4189, %v4191
    %v4193 = vrot.slane %v4179, %v4192
    %v4194 = vcombine.low %v4138, %v4170
    %v4195 = vcombine.high %v4138, %v4170
    %v4196 = vcombine.low %v4145, %v4177
    %v4197 = vcombine.high %v4145, %v4177
    %v4198 = vcombine.low %v4154, %v4186
    %v4199 = vcombine.high %v4154, %v4186
    %v4200 = vcombine.low %v4161, %v4193
    %v4201 = vcombine.high %v4161, %v4193
    %v4202 = vcombine.low %v4058, %v4060
    %v4203 = vcombine.high %v4058, %v4060
    %v4205 = vunpack.c.l.s4 1983009808
    %v4206 = vunpack.c.0.s8 %v4205
    %v4207 = vlaneseq
    %v4208 = vshrl.u32 %v4207, 7
    %v4209 = vsub.s32 %v4206, %v4208
    %v4210 = vrot.slane %v4202, %v4209
    %v4212 = vunpack.c.l.s4 1983009808
    %v4213 = vunpack.c.0.s8 %v4212
    %v4214 = vlaneseq
    %v4215 = vshrl.u32 %v4214, 7
    %v4216 = vsub.s32 %v4213, %v4215
    %v4217 = vrot.slane %v4203, %v4216
    %v4218 = vcombine.low %v4059, %v4061
    %v4219 = vcombine.high %v4059, %v4061
    %v4221 = vunpack.c.l.s4 1983009808
    %v4222 = vunpack.c.0.s8 %v4221
    %v4223 = vlaneseq
    %v4224 = vshrl.u32 %v4223, 7
    %v4225 = vsub.s32 %v4222, %v4224
    %v4226 = vrot.slane %v4218, %v4225
    %v4228 = vunpack.c.l.s4 1983009808
    %v4229 = vunpack.c.0.s8 %v4228
    %v4230 = vlaneseq
    %v4231 = vshrl.u32 %v4230, 7
    %v4232 = vsub.s32 %v4229, %v4231
    %v4233 = vrot.slane %v4219, %v4232
    %v4234 = vcombine.low %v4062, %v4064
    %v4235 = vcombine.high %v4062, %v4064
    %v4237 = vunpack.c.l.s4 1983009808
    %v4238 = vunpack.c.0.s8 %v4237
    %v4239 = vlaneseq
    %v4240 = vshrl.u32 %v4239, 7
    %v4241 = vsub.s32 %v4238, %v4240
    %v4242 = vrot.slane %v4234, %v4241
    %v4244 = vunpack.c.l.s4 1983009808
    %v4245 = vunpack.c.0.s8 %v4244
    %v4246 = vlaneseq
    %v4247 = vshrl.u32 %v4246, 7
    %v4248 = vsub.s32 %v4245, %v4247
    %v4249 = vrot.slane %v4235, %v4248
    %v4250 = vcombine.low %v4063, %v4065
    %v4251 = vcombine.high %v4063, %v4065
    %v4253 = vunpack.c.l.s4 1983009808
    %v4254 = vunpack.c.0.s8 %v4253
    %v4255 = vlaneseq
    %v4256 = vshrl.u32 %v4255, 7
    %v4257 = vsub.s32 %v4254, %v4256
    %v4258 = vrot.slane %v4250, %v4257
    %v4260 = vunpack.c.l.s4 1983009808
    %v4261 = vunpack.c.0.s8 %v4260
    %v4262 = vlaneseq
    %v4263 = vshrl.u32 %v4262, 7
    %v4264 = vsub.s32 %v4261, %v4263
    %v4265 = vrot.slane %v4251, %v4264
    %v4266 = vcombine.low %v4210, %v4226
    %v4267 = vcombine.high %v4210, %v4226
    %v4269 = vunpack.c.l.s4 1934713408
    %v4270 = vunpack.c.0.s8 %v4269
    %v4271 = vlaneseq
    %v4272 = vshrl.u32 %v4271, 7
    %v4273 = vsub.s32 %v4270, %v4272
    %v4274 = vrot.slane %v4266, %v4273
    %v4276 = vunpack.c.l.s4 1934713408
    %v4277 = vunpack.c.0.s8 %v4276
    %v4278 = vlaneseq
    %v4279 = vshrl.u32 %v4278, 7
    %v4280 = vsub.s32 %v4277, %v4279
    %v4281 = vrot.slane %v4267, %v4280
    %v4282 = vcombine.low %v4217, %v4233
    %v4283 = vcombine.high %v4217, %v4233
    %v4285 = vunpack.c.l.s4 1934713408
    %v4286 = vunpack.c.0.s8 %v4285
    %v4287 = vlaneseq
    %v4288 = vshrl.u32 %v4287, 7
    %v4289 = vsub.s32 %v4286, %v4288
    %v4290 = vrot.slane %v4282, %v4289
    %v4292 = vunpack.c.l.s4 1934713408
    %v4293 = vunpack.c.0.s8 %v4292
    %v4294 = vlaneseq
    %v4295 = vshrl.u32 %v4294, 7
    %v4296 = vsub.s32 %v4293, %v4295
    %v4297 = vrot.slane %v4283, %v4296
    %v4298 = vcombine.low %v4242, %v4258
    %v4299 = vcombine.high %v4242, %v4258
    %v4301 = vunpack.c.l.s4 1934713408
    %v4302 = vunpack.c.0.s8 %v4301
    %v4303 = vlaneseq
    %v4304 = vshrl.u32 %v4303, 7
    %v4305 = vsub.s32 %v4302, %v4304
    %v4306 = vrot.slane %v4298, %v4305
    %v4308 = vunpack.c.l.s4 1934713408
    %v4309 = vunpack.c.0.s8 %v4308
    %v4310 = vlaneseq
    %v4311 = vshrl.u32 %v4310, 7
    %v4312 = vsub.s32 %v4309, %v4311
    %v4313 = vrot.slane %v4299, %v4312
    %v4314 = vcombine.low %v4249, %v4265
    %v4315 = vcombine.high %v4249, %v4265
    %v4317 = vunpack.c.l.s4 1934713408
    %v4318 = vunpack.c.0.s8 %v4317
    %v4319 = vlaneseq
    %v4320 = vshrl.u32 %v4319, 7
    %v4321 = vsub.s32 %v4318, %v4320
    %v4322 = vrot.slane %v4314, %v4321
    %v4324 = vunpack.c.l.s4 1934713408
    %v4325 = vunpack.c.0.s8 %v4324
    %v4326 = vlaneseq
    %v4327 = vshrl.u32 %v4326, 7
    %v4328 = vsub.s32 %v4325, %v4327
    %v4329 = vrot.slane %v4315, %v4328
    %v4330 = vcombine.low %v4274, %v4306
    %v4331 = vcombine.high %v4274, %v4306
    %v4332 = vcombine.low %v4281, %v4313
    %v4333 = vcombine.high %v4281, %v4313
    %v4334 = vcombine.low %v4290, %v4322
    %v4335 = vcombine.high %v4290, %v4322
    %v4336 = vcombine.low %v4297, %v4329
    %v4337 = vcombine.high %v4297, %v4329
    %v4338 = vcombine.low %v4194, %v4196
    %v4339 = vcombine.high %v4194, %v4196
    %v4341 = vunpack.c.l.s4 1983009808
    %v4342 = vunpack.c.0.s8 %v4341
    %v4343 = vlaneseq
    %v4344 = vshrl.u32 %v4343, 7
    %v4345 = vsub.s32 %v4342, %v4344
    %v4346 = vrot.slane %v4338, %v4345
    %v4348 = vunpack.c.l.s4 1983009808
    %v4349 = vunpack.c.0.s8 %v4348
    %v4350 = vlaneseq
    %v4351 = vshrl.u32 %v4350, 7
    %v4352 = vsub.s32 %v4349, %v4351
    %v4353 = vrot.slane %v4339, %v4352
    %v4354 = vcombine.low %v4195, %v4197
    %v4355 = vcombine.high %v4195, %v4197
    %v4357 = vunpack.c.l.s4 1983009808
    %v4358 = vunpack.c.0.s8 %v4357
    %v4359 = vlaneseq
    %v4360 = vshrl.u32 %v4359, 7
    %v4361 = vsub.s32 %v4358, %v4360
    %v4362 = vrot.slane %v4354, %v4361
    %v4364 = vunpack.c.l.s4 1983009808
    %v4365 = vunpack.c.0.s8 %v4364
    %v4366 = vlaneseq
    %v4367 = vshrl.u32 %v4366, 7
    %v4368 = vsub.s32 %v4365, %v4367
    %v4369 = vrot.slane %v4355, %v4368
    %v4370 = vcombine.low %v4198, %v4200
    %v4371 = vcombine.high %v4198, %v4200
    %v4373 = vunpack.c.l.s4 1983009808
    %v4374 = vunpack.c.0.s8 %v4373
    %v4375 = vlaneseq
    %v4376 = vshrl.u32 %v4375, 7
    %v4377 = vsub.s32 %v4374, %v4376
    %v4378 = vrot.slane %v4370, %v4377
    %v4380 = vunpack.c.l.s4 1983009808
    %v4381 = vunpack.c.0.s8 %v4380
    %v4382 = vlaneseq
    %v4383 = vshrl.u32 %v4382, 7
    %v4384 = vsub.s32 %v4381, %v4383
    %v4385 = vrot.slane %v4371, %v4384
    %v4386 = vcombine.low %v4199, %v4201
    %v4387 = vcombine.high %v4199, %v4201
    %v4389 = vunpack.c.l.s4 1983009808
    %v4390 = vunpack.c.0.s8 %v4389
    %v4391 = vlaneseq
    %v4392 = vshrl.u32 %v4391, 7
    %v4393 = vsub.s32 %v4390, %v4392
    %v4394 = vrot.slane %v4386, %v4393
    %v4396 = vunpack.c.l.s4 1983009808
    %v4397 = vunpack.c.0.s8 %v4396
    %v4398 = vlaneseq
    %v4399 = vshrl.u32 %v4398, 7
    %v4400 = vsub.s32 %v4397, %v4399
    %v4401 = vrot.slane %v4387, %v4400
    %v4402 = vcombine.low %v4346, %v4362
    %v4403 = vcombine.high %v4346, %v4362
    %v4405 = vunpack.c.l.s4 1934713408
    %v4406 = vunpack.c.0.s8 %v4405
    %v4407 = vlaneseq
    %v4408 = vshrl.u32 %v4407, 7
    %v4409 = vsub.s32 %v4406, %v4408
    %v4410 = vrot.slane %v4402, %v4409
    %v4412 = vunpack.c.l.s4 1934713408
    %v4413 = vunpack.c.0.s8 %v4412
    %v4414 = vlaneseq
    %v4415 = vshrl.u32 %v4414, 7
    %v4416 = vsub.s32 %v4413, %v4415
    %v4417 = vrot.slane %v4403, %v4416
    %v4418 = vcombine.low %v4353, %v4369
    %v4419 = vcombine.high %v4353, %v4369
    %v4421 = vunpack.c.l.s4 1934713408
    %v4422 = vunpack.c.0.s8 %v4421
    %v4423 = vlaneseq
    %v4424 = vshrl.u32 %v4423, 7
    %v4425 = vsub.s32 %v4422, %v4424
    %v4426 = vrot.slane %v4418, %v4425
    %v4428 = vunpack.c.l.s4 1934713408
    %v4429 = vunpack.c.0.s8 %v4428
    %v4430 = vlaneseq
    %v4431 = vshrl.u32 %v4430, 7
    %v4432 = vsub.s32 %v4429, %v4431
    %v4433 = vrot.slane %v4419, %v4432
    %v4434 = vcombine.low %v4378, %v4394
    %v4435 = vcombine.high %v4378, %v4394
    %v4437 = vunpack.c.l.s4 1934713408
    %v4438 = vunpack.c.0.s8 %v4437
    %v4439 = vlaneseq
    %v4440 = vshrl.u32 %v4439, 7
    %v4441 = vsub.s32 %v4438, %v4440
    %v4442 = vrot.slane %v4434, %v4441
    %v4444 = vunpack.c.l.s4 1934713408
    %v4445 = vunpack.c.0.s8 %v4444
    %v4446 = vlaneseq
    %v4447 = vshrl.u32 %v4446, 7
    %v4448 = vsub.s32 %v4445, %v4447
    %v4449 = vrot.slane %v4435, %v4448
    %v4450 = vcombine.low %v4385, %v4401
    %v4451 = vcombine.high %v4385, %v4401
    %v4453 = vunpack.c.l.s4 1934713408
    %v4454 = vunpack.c.0.s8 %v4453
    %v4455 = vlaneseq
    %v4456 = vshrl.u32 %v4455, 7
    %v4457 = vsub.s32 %v4454, %v4456
    %v4458 = vrot.slane %v4450, %v4457
    %v4460 = vunpack.c.l.s4 1934713408
    %v4461 = vunpack.c.0.s8 %v4460
    %v4462 = vlaneseq
    %v4463 = vshrl.u32 %v4462, 7
    %v4464 = vsub.s32 %v4461, %v4463
    %v4465 = vrot.slane %v4451, %v4464
    %v4466 = vcombine.low %v4410, %v4442
    %v4467 = vcombine.high %v4410, %v4442
    %v4468 = vcombine.low %v4417, %v4449
    %v4469 = vcombine.high %v4417, %v4449
    %v4470 = vcombine.low %v4426, %v4458
    %v4471 = vcombine.high %v4426, %v4458
    %v4472 = vcombine.low %v4433, %v4465
    %v4473 = vcombine.high %v4433, %v4465
    %4476 = vrot.lane.b32.xlu0 %v4331, 16
    %v4477 = vpop.permute.xlu0 %4476
    %4478 = vrot.lane.b32.xlu0 %v4467, 16
    %v4479 = vpop.permute.xlu0 %4478
    %4484 = vrot.lane.b32.xlu0 %v4332, 32
    %v4485 = vpop.permute.xlu0 %4484
    %4486 = vrot.lane.b32.xlu0 %v4468, 32
    %v4487 = vpop.permute.xlu0 %4486
    %4492 = vrot.lane.b32.xlu0 %v4333, 48
    %v4493 = vpop.permute.xlu0 %4492
    %4494 = vrot.lane.b32.xlu0 %v4469, 48
    %v4495 = vpop.permute.xlu0 %4494
    %4500 = vrot.lane.b32.xlu0 %v4334, 64
    %v4501 = vpop.permute.xlu0 %4500
    %4502 = vrot.lane.b32.xlu0 %v4470, 64
    %v4503 = vpop.permute.xlu0 %4502
    %4508 = vrot.lane.b32.xlu0 %v4335, 80
    %v4509 = vpop.permute.xlu0 %4508
    %4510 = vrot.lane.b32.xlu0 %v4471, 80
    %v4511 = vpop.permute.xlu0 %4510
    %4516 = vrot.lane.b32.xlu0 %v4336, 96
    %v4517 = vpop.permute.xlu0 %4516
    %4518 = vrot.lane.b32.xlu0 %v4472, 96
    %v4519 = vpop.permute.xlu0 %4518
    %4524 = vrot.lane.b32.xlu0 %v4337, 112
    %v4525 = vpop.permute.xlu0 %4524
    %4526 = vrot.lane.b32.xlu0 %v4473, 112
    %v4527 = vpop.permute.xlu0 %4526
    %v4530 = vsel %vm2247, %v4330, %v4477
    %v4531 = vsel %vm2247, %v4466, %v4479
    %vm4532 = vcmask 261120
    %v4533 = vsel %vm4532, %v4530, %v4485
    %v4534 = vsel %vm4532, %v4531, %v4487
    %vm4535 = vcmask 392192
    %v4536 = vsel %vm4535, %v4533, %v4493
    %v4537 = vsel %vm4535, %v4534, %v4495
    %vm4538 = vcmask 523264
    %v4539 = vsel %vm4538, %v4536, %v4501
    %v4540 = vsel %vm4538, %v4537, %v4503
    %vm4541 = vcmask 654336
    %v4542 = vsel %vm4541, %v4539, %v4509
    %v4543 = vsel %vm4541, %v4540, %v4511
    %vm4544 = vcmask 785408
    %v4545 = vsel %vm4544, %v4542, %v4517
    %v4546 = vsel %vm4544, %v4543, %v4519
    %vm4547 = vcmask 916480
    %v4548 = vsel %vm4547, %v4545, %v4525
    %v4549 = vsel %vm4547, %v4546, %v4527
    %v4550 = vpack.c.bf16 %v4549, %v4548
    %v4551 = vld [vmem:[#allocation9] sm:$0xf]
    %v4552 = vld [vmem:[#allocation9 + $0x4] sm:$0xf]
    %v4553 = vld [vmem:[#allocation9 + $0x8] sm:$0xf]
    %v4554 = vld [vmem:[#allocation9 + $0xc] sm:$0xf]
    %v4555 = vld [vmem:[#allocation9 + $0x10] sm:$0xf]
    %v4556 = vld [vmem:[#allocation9 + $0x14] sm:$0xf]
    %v4557 = vld [vmem:[#allocation9 + $0x18] sm:$0xf]
    %v4558 = vld [vmem:[#allocation9 + $0x1c] sm:$0xf]
    %v4559 = vld [vmem:[#allocation9 + $0x20] sm:$0xf]
    %v4560 = vld [vmem:[#allocation9 + $0x24] sm:$0xf]
    %v4561 = vld [vmem:[#allocation9 + $0x28] sm:$0xf]
    %v4562 = vld [vmem:[#allocation9 + $0x2c] sm:$0xf]
    %v4563 = vld [vmem:[#allocation9 + $0x30] sm:$0xf]
    %v4564 = vld [vmem:[#allocation9 + $0x34] sm:$0xf]
    %v4565 = vld [vmem:[#allocation9 + $0x38] sm:$0xf]
    %v4566 = vld [vmem:[#allocation9 + $0x3c] sm:$0xf]
    %v4567 = vld [vmem:[%s6] sm:$0x1]
    %v4569 = vlaneseq
    %v4570 = vshrl.u32 %v4569, 7
    %v4571 = vsub.s32 0, %v4570
    %v4572 = vrot.slane %v4567, %v4571
    %v4590 = vunpack.c.l.b16 %v4551
    %v4591 = vunpack.c.l.b16 %v4552
    %v4592 = vunpack.c.l.b16 %v4553
    %v4593 = vunpack.c.l.b16 %v4554
    %v4594 = vunpack.c.l.b16 %v4555
    %v4595 = vunpack.c.l.b16 %v4556
    %v4596 = vunpack.c.l.b16 %v4557
    %v4597 = vunpack.c.l.b16 %v4558
    %v4598 = vunpack.c.l.b16 %v4559
    %v4599 = vunpack.c.l.b16 %v4560
    %v4600 = vunpack.c.l.b16 %v4561
    %v4601 = vunpack.c.l.b16 %v4562
    %v4602 = vunpack.c.l.b16 %v4563
    %v4603 = vunpack.c.l.b16 %v4564
    %v4604 = vunpack.c.l.b16 %v4565
    %v4605 = vunpack.c.l.b16 %v4566
    %v4606 = vpack.c.b16 %v4591, %v4590
    %v4607 = vpack.c.b16 %v4593, %v4592
    %v4608 = vpack.c.b16 %v4595, %v4594
    %v4609 = vpack.c.b16 %v4597, %v4596
    %v4610 = vpack.c.b16 %v4599, %v4598
    %v4611 = vpack.c.b16 %v4601, %v4600
    %v4612 = vpack.c.b16 %v4603, %v4602
    %v4613 = vpack.c.b16 %v4605, %v4604
    %4622 = vmatprep.subr.bf16.mxu0 0
    %4623 = vmatpush1.bf16.msra.mxu0 %v4606
    %4624 = vmatprep.subr.bf16.mxu0 0
    %4625 = vmatpush1.bf16.msra.mxu0 %v4607
    %4626 = vmatprep.subr.bf16.mxu0 0
    %4627 = vmatpush1.bf16.msra.mxu0 %v4608
    %4628 = vmatprep.subr.bf16.mxu0 0
    %4629 = vmatpush1.bf16.msra.mxu0 %v4609
    %4630 = vmatprep.subr.bf16.mxu0 0
    %4631 = vmatpush1.bf16.msra.mxu0 %v4610
    %4632 = vmatprep.subr.bf16.mxu0 0
    %4633 = vmatpush1.bf16.msra.mxu0 %v4611
    %4634 = vmatprep.subr.bf16.mxu0 0
    %4635 = vmatpush1.bf16.msra.mxu0 %v4612
    %4636 = vmatprep.subr.bf16.mxu0 0
    %4637 = vmatpush1.bf16.msra.mxu0 %v4613
    %4638 = vmatprep.subr.bf16.mxu0 0
    %4639 = vmatpush1.bf16.msra.mxu0 0
    %4640 = vmatprep.subr.bf16.mxu0 0
    %4641 = vmatpush1.bf16.msra.mxu0 0
    %4642 = vmatprep.subr.bf16.mxu0 0
    %4643 = vmatpush1.bf16.msra.mxu0 0
    %4644 = vmatprep.subr.bf16.mxu0 0
    %4645 = vmatpush1.bf16.msra.mxu0 0
    %4646 = vmatprep.subr.bf16.mxu0 0
    %4647 = vmatpush1.bf16.msra.mxu0 0
    %4648 = vmatprep.subr.bf16.mxu0 0
    %4649 = vmatpush1.bf16.msra.mxu0 0
    %4650 = vmatprep.subr.bf16.mxu0 0
    %4651 = vmatpush1.bf16.msra.mxu0 0
    %4652 = vmatprep.subr.bf16.mxu0 0
    %4653 = vmatpush1.bf16.msra.mxu0 0
    %4654 = vmatprep.mubr.bf16.mxu0 0
    %4655 = vmatmul.mubr.bf16.gmra.mrb[0].mxu0 %v4550
    %v4656 = vpop.f32.mrb[0].mxu0
    %v4657 = vadd.f32 %v4572, %v4656
    %v4658 = vpop.f32.mrb[0].mxu0
    %v4659 = vpop.f32.mrb[0].mxu0
    %v4660 = vadd.f32 %v4572, %v4659
    %v4661 = vpop.f32.mrb[0].mxu0
    %4662 = vdwg.mxu0
    %v4663 = vadd.f32 %v130, %v4657
    %v4664 = vadd.f32 %v131, %v4660
    %v4665 = vld [vmem:[%s7] sm:$0x1]
    %v4666 = vld [vmem:[%s8] sm:$0x1]
    %4667 = vadd.xlane.f32.xlu0 %v4663
    %v4668 = vpop.xlane.xlu0 %4667
    %4669 = vadd.xlane.f32.xlu0 %v4664
    %v4670 = vpop.xlane.xlu0 %4669
    %v4671 = vmul.f32 %v4668, %v138
    %v4672 = vmul.f32 %v4670, %v138
    %v4673 = vsub.f32 %v4663, %v4671
    %v4674 = vsub.f32 %v4664, %v4672
    %v4675 = vmul.f32 %v4673, %v4673
    %v4676 = vmul.f32 %v4674, %v4674
    %4677 = vadd.xlane.f32.xlu0 %v4675
    %v4678 = vpop.xlane.xlu0 %4677
    %4679 = vadd.xlane.f32.xlu0 %v4676
    %v4680 = vpop.xlane.xlu0 %4679
    %v4681 = vmul.f32 %v4678, %v138
    %v4682 = vmul.f32 %v4680, %v138
    %v4683 = vadd.f32 %v4681, 1e-05
    %v4684 = vadd.f32 %v4682, 1e-05
    %v4685 = vrsqrt.pop %v4683
    %v4686 = vrsqrt.pop %v4684
    %v4687 = vmul.f32 %v4673, %v4685
    %v4688 = vmul.f32 %v4674, %v4686
    %v4690 = vlaneseq
    %v4691 = vshrl.u32 %v4690, 7
    %v4692 = vsub.s32 0, %v4691
    %v4693 = vrot.slane %v4665, %v4692
    %v4695 = vmul.f32 %v4687, %v4693
    %v4696 = vmul.f32 %v4688, %v4693
    %v4698 = vlaneseq
    %v4699 = vshrl.u32 %v4698, 7
    %v4700 = vsub.s32 0, %v4699
    %v4701 = vrot.slane %v4666, %v4700
    %v4703 = vadd.f32 %v4695, %v4701
    %v4704 = vadd.f32 %v4696, %v4701
    %v4705 = vpack.c.bf16 %v4704, %v4703
    %v4706 = vld [vmem:[#allocation11] sm:$0xff]
    %v4707 = vld [vmem:[#allocation11 + $0x8] sm:$0xff]
    %v4708 = vld [vmem:[#allocation11 + $0x10] sm:$0xff]
    %v4709 = vld [vmem:[#allocation11 + $0x18] sm:$0xff]
    %v4710 = vld [vmem:[#allocation11 + $0x20] sm:$0xff]
    %v4711 = vld [vmem:[#allocation11 + $0x28] sm:$0xff]
    %v4712 = vld [vmem:[#allocation11 + $0x30] sm:$0xff]
    %v4713 = vld [vmem:[#allocation11 + $0x38] sm:$0xff]
    %v4714 = vld [vmem:[#allocation11 + $0x40] sm:$0xff]
    %v4715 = vld [vmem:[#allocation11 + $0x48] sm:$0xff]
    %v4716 = vld [vmem:[#allocation11 + $0x50] sm:$0xff]
    %v4717 = vld [vmem:[#allocation11 + $0x58] sm:$0xff]
    %v4718 = vld [vmem:[#allocation11 + $0x60] sm:$0xff]
    %v4719 = vld [vmem:[#allocation11 + $0x68] sm:$0xff]
    %v4720 = vld [vmem:[#allocation11 + $0x70] sm:$0xff]
    %v4721 = vld [vmem:[#allocation11 + $0x78] sm:$0xff]
    %v4722 = vld [vmem:[#allocation11 + $0x80] sm:$0xff]
    %v4723 = vld [vmem:[#allocation11 + $0x88] sm:$0xff]
    %v4724 = vld [vmem:[#allocation11 + $0x90] sm:$0xff]
    %v4725 = vld [vmem:[#allocation11 + $0x98] sm:$0xff]
    %v4726 = vld [vmem:[#allocation11 + $0xa0] sm:$0xff]
    %v4727 = vld [vmem:[#allocation11 + $0xa8] sm:$0xff]
    %v4728 = vld [vmem:[#allocation11 + $0xb0] sm:$0xff]
    %v4729 = vld [vmem:[#allocation11 + $0xb8] sm:$0xff]
    %v4730 = vld [vmem:[#allocation11 + $0xc0] sm:$0xff]
    %v4731 = vld [vmem:[#allocation11 + $0xc8] sm:$0xff]
    %v4732 = vld [vmem:[#allocation11 + $0xd0] sm:$0xff]
    %v4733 = vld [vmem:[#allocation11 + $0xd8] sm:$0xff]
    %v4734 = vld [vmem:[#allocation11 + $0xe0] sm:$0xff]
    %v4735 = vld [vmem:[#allocation11 + $0xe8] sm:$0xff]
    %v4736 = vld [vmem:[#allocation11 + $0xf0] sm:$0xff]
    %v4737 = vld [vmem:[#allocation11 + $0xf8] sm:$0xff]
    %v4738 = vld [vmem:[%s10] sm:$0xf]
    %v4740 = vlaneseq
    %v4741 = vshrl.u32 %v4740, 7
    %v4742 = vsub.s32 0, %v4741
    %v4743 = vrot.slane %v4738, %v4742
    %v4744 = vlaneseq
    %v4745 = vshrl.u32 %v4744, 7
    %v4746 = vsub.s32 1, %v4745
    %v4747 = vrot.slane %v4738, %v4746
    %v4748 = vlaneseq
    %v4749 = vshrl.u32 %v4748, 7
    %v4750 = vsub.s32 2, %v4749
    %v4751 = vrot.slane %v4738, %v4750
    %v4752 = vlaneseq
    %v4753 = vshrl.u32 %v4752, 7
    %v4754 = vsub.s32 3, %v4753
    %v4755 = vrot.slane %v4738, %v4754
    %v4792 = vunpack.c.l.b16 %v4706
    %v4793 = vunpack.c.h.b16 %v4706
    %v4794 = vunpack.c.l.b16 %v4707
    %v4795 = vunpack.c.h.b16 %v4707
    %v4796 = vunpack.c.l.b16 %v4708
    %v4797 = vunpack.c.h.b16 %v4708
    %v4798 = vunpack.c.l.b16 %v4709
    %v4799 = vunpack.c.h.b16 %v4709
    %v4800 = vunpack.c.l.b16 %v4710
    %v4801 = vunpack.c.h.b16 %v4710
    %v4802 = vunpack.c.l.b16 %v4711
    %v4803 = vunpack.c.h.b16 %v4711
    %v4804 = vunpack.c.l.b16 %v4712
    %v4805 = vunpack.c.h.b16 %v4712
    %v4806 = vunpack.c.l.b16 %v4713
    %v4807 = vunpack.c.h.b16 %v4713
    %v4808 = vunpack.c.l.b16 %v4714
    %v4809 = vunpack.c.h.b16 %v4714
    %v4810 = vunpack.c.l.b16 %v4715
    %v4811 = vunpack.c.h.b16 %v4715
    %v4812 = vunpack.c.l.b16 %v4716
    %v4813 = vunpack.c.h.b16 %v4716
    %v4814 = vunpack.c.l.b16 %v4717
    %v4815 = vunpack.c.h.b16 %v4717
    %v4816 = vunpack.c.l.b16 %v4718
    %v4817 = vunpack.c.h.b16 %v4718
    %v4818 = vunpack.c.l.b16 %v4719
    %v4819 = vunpack.c.h.b16 %v4719
    %v4820 = vunpack.c.l.b16 %v4720
    %v4821 = vunpack.c.h.b16 %v4720
    %v4822 = vunpack.c.l.b16 %v4721
    %v4823 = vunpack.c.h.b16 %v4721
    %v4824 = vunpack.c.l.b16 %v4722
    %v4825 = vunpack.c.h.b16 %v4722
    %v4826 = vunpack.c.l.b16 %v4723
    %v4827 = vunpack.c.h.b16 %v4723
    %v4828 = vunpack.c.l.b16 %v4724
    %v4829 = vunpack.c.h.b16 %v4724
    %v4830 = vunpack.c.l.b16 %v4725
    %v4831 = vunpack.c.h.b16 %v4725
    %v4832 = vunpack.c.l.b16 %v4726
    %v4833 = vunpack.c.h.b16 %v4726
    %v4834 = vunpack.c.l.b16 %v4727
    %v4835 = vunpack.c.h.b16 %v4727
    %v4836 = vunpack.c.l.b16 %v4728
    %v4837 = vunpack.c.h.b16 %v4728
    %v4838 = vunpack.c.l.b16 %v4729
    %v4839 = vunpack.c.h.b16 %v4729
    %v4840 = vunpack.c.l.b16 %v4730
    %v4841 = vunpack.c.h.b16 %v4730
    %v4842 = vunpack.c.l.b16 %v4731
    %v4843 = vunpack.c.h.b16 %v4731
    %v4844 = vunpack.c.l.b16 %v4732
    %v4845 = vunpack.c.h.b16 %v4732
    %v4846 = vunpack.c.l.b16 %v4733
    %v4847 = vunpack.c.h.b16 %v4733
    %v4848 = vunpack.c.l.b16 %v4734
    %v4849 = vunpack.c.h.b16 %v4734
    %v4850 = vunpack.c.l.b16 %v4735
    %v4851 = vunpack.c.h.b16 %v4735
    %v4852 = vunpack.c.l.b16 %v4736
    %v4853 = vunpack.c.h.b16 %v4736
    %v4854 = vunpack.c.l.b16 %v4737
    %v4855 = vunpack.c.h.b16 %v4737
    %v4856 = vpack.c.b16 %v4796, %v4792
    %v4857 = vpack.c.b16 %v4797, %v4793
    %v4858 = vpack.c.b16 %v4798, %v4794
    %v4859 = vpack.c.b16 %v4799, %v4795
    %v4860 = vpack.c.b16 %v4804, %v4800
    %v4861 = vpack.c.b16 %v4805, %v4801
    %v4862 = vpack.c.b16 %v4806, %v4802
    %v4863 = vpack.c.b16 %v4807, %v4803
    %v4864 = vpack.c.b16 %v4812, %v4808
    %v4865 = vpack.c.b16 %v4813, %v4809
    %v4866 = vpack.c.b16 %v4814, %v4810
    %v4867 = vpack.c.b16 %v4815, %v4811
    %v4868 = vpack.c.b16 %v4820, %v4816
    %v4869 = vpack.c.b16 %v4821, %v4817
    %v4870 = vpack.c.b16 %v4822, %v4818
    %v4871 = vpack.c.b16 %v4823, %v4819
    %v4872 = vpack.c.b16 %v4828, %v4824
    %v4873 = vpack.c.b16 %v4829, %v4825
    %v4874 = vpack.c.b16 %v4830, %v4826
    %v4875 = vpack.c.b16 %v4831, %v4827
    %v4876 = vpack.c.b16 %v4836, %v4832
    %v4877 = vpack.c.b16 %v4837, %v4833
    %v4878 = vpack.c.b16 %v4838, %v4834
    %v4879 = vpack.c.b16 %v4839, %v4835
    %v4880 = vpack.c.b16 %v4844, %v4840
    %v4881 = vpack.c.b16 %v4845, %v4841
    %v4882 = vpack.c.b16 %v4846, %v4842
    %v4883 = vpack.c.b16 %v4847, %v4843
    %v4884 = vpack.c.b16 %v4852, %v4848
    %v4885 = vpack.c.b16 %v4853, %v4849
    %v4886 = vpack.c.b16 %v4854, %v4850
    %v4887 = vpack.c.b16 %v4855, %v4851
    %4920 = vmatprep.subr.bf16.mxu0 %v4857
    %4921 = vmatpush1.bf16.msra.mxu0 %v4856
    %4922 = vmatprep.subr.bf16.mxu0 %v4861
    %4923 = vmatpush1.bf16.msra.mxu0 %v4860
    %4924 = vmatprep.subr.bf16.mxu0 %v4865
    %4925 = vmatpush1.bf16.msra.mxu0 %v4864
    %4926 = vmatprep.subr.bf16.mxu0 %v4869
    %4927 = vmatpush1.bf16.msra.mxu0 %v4868
    %4928 = vmatprep.subr.bf16.mxu0 %v4873
    %4929 = vmatpush1.bf16.msra.mxu0 %v4872
    %4930 = vmatprep.subr.bf16.mxu0 %v4877
    %4931 = vmatpush1.bf16.msra.mxu0 %v4876
    %4932 = vmatprep.subr.bf16.mxu0 %v4881
    %4933 = vmatpush1.bf16.msra.mxu0 %v4880
    %4934 = vmatprep.subr.bf16.mxu0 %v4885
    %4935 = vmatpush1.bf16.msra.mxu0 %v4884
    %4936 = vmatprep.subr.bf16.mxu0 0
    %4937 = vmatpush1.bf16.msra.mxu0 0
    %4938 = vmatprep.subr.bf16.mxu0 0
    %4939 = vmatpush1.bf16.msra.mxu0 0
    %4940 = vmatprep.subr.bf16.mxu0 0
    %4941 = vmatpush1.bf16.msra.mxu0 0
    %4942 = vmatprep.subr.bf16.mxu0 0
    %4943 = vmatpush1.bf16.msra.mxu0 0
    %4944 = vmatprep.subr.bf16.mxu0 0
    %4945 = vmatpush1.bf16.msra.mxu0 0
    %4946 = vmatprep.subr.bf16.mxu0 0
    %4947 = vmatpush1.bf16.msra.mxu0 0
    %4948 = vmatprep.subr.bf16.mxu0 0
    %4949 = vmatpush1.bf16.msra.mxu0 0
    %4950 = vmatprep.subr.bf16.mxu0 0
    %4951 = vmatpush1.bf16.msra.mxu0 0
    %4952 = vmatprep.mubr.bf16.mxu0 0
    %4953 = vmatmul.mubr.bf16.gmra.mrb[0].mxu0 %v4705
    %v4954 = vpop.f32.mrb[0].mxu0
    %v4955 = vadd.f32 %v4743, %v4954
    %v4956 = vpop.f32.mrb[0].mxu0
    %v4957 = vadd.f32 %v4747, %v4956
    %v4958 = vpop.f32.mrb[0].mxu0
    %v4959 = vadd.f32 %v4743, %v4958
    %v4960 = vpop.f32.mrb[0].mxu0
    %v4961 = vadd.f32 %v4747, %v4960
    %4962 = vdwg.mxu0
    %4963 = vmatprep.subr.bf16.mxu0 %v4859
    %4964 = vmatpush1.bf16.msra.mxu0 %v4858
    %4965 = vmatprep.subr.bf16.mxu0 %v4863
    %4966 = vmatpush1.bf16.msra.mxu0 %v4862
    %4967 = vmatprep.subr.bf16.mxu0 %v4867
    %4968 = vmatpush1.bf16.msra.mxu0 %v4866
    %4969 = vmatprep.subr.bf16.mxu0 %v4871
    %4970 = vmatpush1.bf16.msra.mxu0 %v4870
    %4971 = vmatprep.subr.bf16.mxu0 %v4875
    %4972 = vmatpush1.bf16.msra.mxu0 %v4874
    %4973 = vmatprep.subr.bf16.mxu0 %v4879
    %4974 = vmatpush1.bf16.msra.mxu0 %v4878
    %4975 = vmatprep.subr.bf16.mxu0 %v4883
    %4976 = vmatpush1.bf16.msra.mxu0 %v4882
    %4977 = vmatprep.subr.bf16.mxu0 %v4887
    %4978 = vmatpush1.bf16.msra.mxu0 %v4886
    %4979 = vmatprep.subr.bf16.mxu0 0
    %4980 = vmatpush1.bf16.msra.mxu0 0
    %4981 = vmatprep.subr.bf16.mxu0 0
    %4982 = vmatpush1.bf16.msra.mxu0 0
    %4983 = vmatprep.subr.bf16.mxu0 0
    %4984 = vmatpush1.bf16.msra.mxu0 0
    %4985 = vmatprep.subr.bf16.mxu0 0
    %4986 = vmatpush1.bf16.msra.mxu0 0
    %4987 = vmatprep.subr.bf16.mxu0 0
    %4988 = vmatpush1.bf16.msra.mxu0 0
    %4989 = vmatprep.subr.bf16.mxu0 0
    %4990 = vmatpush1.bf16.msra.mxu0 0
    %4991 = vmatprep.subr.bf16.mxu0 0
    %4992 = vmatpush1.bf16.msra.mxu0 0
    %4993 = vmatprep.subr.bf16.mxu0 0
    %4994 = vmatpush1.bf16.msra.mxu0 0
    %4995 = vmatprep.mubr.bf16.mxu0 0
    %4996 = vmatmul.mubr.bf16.gmra.mrb[0].mxu0 %v4705
    %v4997 = vpop.f32.mrb[0].mxu0
    %v4998 = vadd.f32 %v4751, %v4997
    %v4999 = vpop.f32.mrb[0].mxu0
    %v5000 = vadd.f32 %v4755, %v4999
    %v5001 = vpop.f32.mrb[0].mxu0
    %v5002 = vadd.f32 %v4751, %v5001
    %v5003 = vpop.f32.mrb[0].mxu0
    %v5004 = vadd.f32 %v4755, %v5003
    %5005 = vdwg.mxu0
    %v5006 = vmul.f32 %v4955, %v4955
    %v5007 = vmul.f32 %v4957, %v4957
    %v5008 = vmul.f32 %v4998, %v4998
    %v5009 = vmul.f32 %v5000, %v5000
    %v5010 = vmul.f32 %v4959, %v4959
    %v5011 = vmul.f32 %v4961, %v4961
    %v5012 = vmul.f32 %v5002, %v5002
    %v5013 = vmul.f32 %v5004, %v5004
    %v5014 = vmul.f32 %v4955, %v5006
    %v5015 = vmul.f32 %v4957, %v5007
    %v5016 = vmul.f32 %v4998, %v5008
    %v5017 = vmul.f32 %v5000, %v5009
    %v5018 = vmul.f32 %v4959, %v5010
    %v5019 = vmul.f32 %v4961, %v5011
    %v5020 = vmul.f32 %v5002, %v5012
    %v5021 = vmul.f32 %v5004, %v5013
    %v5022 = vmul.f32 %v5014, 0.044715
    %v5023 = vmul.f32 %v5015, 0.044715
    %v5024 = vmul.f32 %v5016, 0.044715
    %v5025 = vmul.f32 %v5017, 0.044715
    %v5026 = vmul.f32 %v5018, 0.044715
    %v5027 = vmul.f32 %v5019, 0.044715
    %v5028 = vmul.f32 %v5020, 0.044715
    %v5029 = vmul.f32 %v5021, 0.044715
    %v5030 = vadd.f32 %v4955, %v5022
    %v5031 = vadd.f32 %v4957, %v5023
    %v5032 = vadd.f32 %v4998, %v5024
    %v5033 = vadd.f32 %v5000, %v5025
    %v5034 = vadd.f32 %v4959, %v5026
    %v5035 = vadd.f32 %v4961, %v5027
    %v5036 = vadd.f32 %v5002, %v5028
    %v5037 = vadd.f32 %v5004, %v5029
    %v5038 = vmul.f32 %v5030, 0.7978846
    %v5039 = vmul.f32 %v5031, 0.7978846
    %v5040 = vmul.f32 %v5032, 0.7978846
    %v5041 = vmul.f32 %v5033, 0.7978846
    %v5042 = vmul.f32 %v5034, 0.7978846
    %v5043 = vmul.f32 %v5035, 0.7978846
    %v5044 = vmul.f32 %v5036, 0.7978846
    %v5045 = vmul.f32 %v5037, 0.7978846
    %v5046 = vtanh.pop %v5038
    %v5047 = vtanh.pop %v5039
    %v5048 = vtanh.pop %v5040
    %v5049 = vtanh.pop %v5041
    %v5050 = vtanh.pop %v5042
    %v5051 = vtanh.pop %v5043
    %v5052 = vtanh.pop %v5044
    %v5053 = vtanh.pop %v5045
    %v5054 = vadd.f32 %v5046, 1.0
    %v5055 = vadd.f32 %v5047, 1.0
    %v5056 = vadd.f32 %v5048, 1.0
    %v5057 = vadd.f32 %v5049, 1.0
    %v5058 = vadd.f32 %v5050, 1.0
    %v5059 = vadd.f32 %v5051, 1.0
    %v5060 = vadd.f32 %v5052, 1.0
    %v5061 = vadd.f32 %v5053, 1.0
    %v5062 = vmul.f32 %v5054, 0.5
    %v5063 = vmul.f32 %v5055, 0.5
    %v5064 = vmul.f32 %v5056, 0.5
    %v5065 = vmul.f32 %v5057, 0.5
    %v5066 = vmul.f32 %v5058, 0.5
    %v5067 = vmul.f32 %v5059, 0.5
    %v5068 = vmul.f32 %v5060, 0.5
    %v5069 = vmul.f32 %v5061, 0.5
    %v5070 = vmul.f32 %v4955, %v5062
    %v5071 = vmul.f32 %v4957, %v5063
    %v5072 = vmul.f32 %v4998, %v5064
    %v5073 = vmul.f32 %v5000, %v5065
    %v5074 = vmul.f32 %v4959, %v5066
    %v5075 = vmul.f32 %v4961, %v5067
    %v5076 = vmul.f32 %v5002, %v5068
    %v5077 = vmul.f32 %v5004, %v5069
    %v5078 = vpack.c.bf16 %v5074, %v5070
    %v5079 = vpack.c.bf16 %v5075, %v5071
    %v5080 = vpack.c.bf16 %v5076, %v5072
    %v5081 = vpack.c.bf16 %v5077, %v5073
    %v5082 = vld [vmem:[#allocation12] sm:$0xf]
    %v5083 = vld [vmem:[#allocation12 + $0x4] sm:$0xf]
    %v5084 = vld [vmem:[#allocation12 + $0x8] sm:$0xf]
    %v5085 = vld [vmem:[#allocation12 + $0xc] sm:$0xf]
    %v5086 = vld [vmem:[#allocation12 + $0x10] sm:$0xf]
    %v5087 = vld [vmem:[#allocation12 + $0x14] sm:$0xf]
    %v5088 = vld [vmem:[#allocation12 + $0x18] sm:$0xf]
    %v5089 = vld [vmem:[#allocation12 + $0x1c] sm:$0xf]
    %v5090 = vld [vmem:[#allocation12 + $0x20] sm:$0xf]
    %v5091 = vld [vmem:[#allocation12 + $0x24] sm:$0xf]
    %v5092 = vld [vmem:[#allocation12 + $0x28] sm:$0xf]
    %v5093 = vld [vmem:[#allocation12 + $0x2c] sm:$0xf]
    %v5094 = vld [vmem:[#allocation12 + $0x30] sm:$0xf]
    %v5095 = vld [vmem:[#allocation12 + $0x34] sm:$0xf]
    %v5096 = vld [vmem:[#allocation12 + $0x38] sm:$0xf]
    %v5097 = vld [vmem:[#allocation12 + $0x3c] sm:$0xf]
    %v5098 = vld [vmem:[#allocation12 + $0x40] sm:$0xf]
    %v5099 = vld [vmem:[#allocation12 + $0x44] sm:$0xf]
    %v5100 = vld [vmem:[#allocation12 + $0x48] sm:$0xf]
    %v5101 = vld [vmem:[#allocation12 + $0x4c] sm:$0xf]
    %v5102 = vld [vmem:[#allocation12 + $0x50] sm:$0xf]
    %v5103 = vld [vmem:[#allocation12 + $0x54] sm:$0xf]
    %v5104 = vld [vmem:[#allocation12 + $0x58] sm:$0xf]
    %v5105 = vld [vmem:[#allocation12 + $0x5c] sm:$0xf]
    %v5106 = vld [vmem:[#allocation12 + $0x60] sm:$0xf]
    %v5107 = vld [vmem:[#allocation12 + $0x64] sm:$0xf]
    %v5108 = vld [vmem:[#allocation12 + $0x68] sm:$0xf]
    %v5109 = vld [vmem:[#allocation12 + $0x6c] sm:$0xf]
    %v5110 = vld [vmem:[#allocation12 + $0x70] sm:$0xf]
    %v5111 = vld [vmem:[#allocation12 + $0x74] sm:$0xf]
    %v5112 = vld [vmem:[#allocation12 + $0x78] sm:$0xf]
    %v5113 = vld [vmem:[#allocation12 + $0x7c] sm:$0xf]
    %v5114 = vld [vmem:[#allocation12 + $0x80] sm:$0xf]
    %v5115 = vld [vmem:[#allocation12 + $0x84] sm:$0xf]
    %v5116 = vld [vmem:[#allocation12 + $0x88] sm:$0xf]
    %v5117 = vld [vmem:[#allocation12 + $0x8c] sm:$0xf]
    %v5118 = vld [vmem:[#allocation12 + $0x90] sm:$0xf]
    %v5119 = vld [vmem:[#allocation12 + $0x94] sm:$0xf]
    %v5120 = vld [vmem:[#allocation12 + $0x98] sm:$0xf]
    %v5121 = vld [vmem:[#allocation12 + $0x9c] sm:$0xf]
    %v5122 = vld [vmem:[#allocation12 + $0xa0] sm:$0xf]
    %v5123 = vld [vmem:[#allocation12 + $0xa4] sm:$0xf]
    %v5124 = vld [vmem:[#allocation12 + $0xa8] sm:$0xf]
    %v5125 = vld [vmem:[#allocation12 + $0xac] sm:$0xf]
    %v5126 = vld [vmem:[#allocation12 + $0xb0] sm:$0xf]
    %v5127 = vld [vmem:[#allocation12 + $0xb4] sm:$0xf]
    %v5128 = vld [vmem:[#allocation12 + $0xb8] sm:$0xf]
    %v5129 = vld [vmem:[#allocation12 + $0xbc] sm:$0xf]
    %v5130 = vld [vmem:[#allocation12 + $0xc0] sm:$0xf]
    %v5131 = vld [vmem:[#allocation12 + $0xc4] sm:$0xf]
    %v5132 = vld [vmem:[#allocation12 + $0xc8] sm:$0xf]
    %v5133 = vld [vmem:[#allocation12 + $0xcc] sm:$0xf]
    %v5134 = vld [vmem:[#allocation12 + $0xd0] sm:$0xf]
    %v5135 = vld [vmem:[#allocation12 + $0xd4] sm:$0xf]
    %v5136 = vld [vmem:[#allocation12 + $0xd8] sm:$0xf]
    %v5137 = vld [vmem:[#allocation12 + $0xdc] sm:$0xf]
    %v5138 = vld [vmem:[#allocation12 + $0xe0] sm:$0xf]
    %v5139 = vld [vmem:[#allocation12 + $0xe4] sm:$0xf]
    %v5140 = vld [vmem:[#allocation12 + $0xe8] sm:$0xf]
    %v5141 = vld [vmem:[#allocation12 + $0xec] sm:$0xf]
    %v5142 = vld [vmem:[#allocation12 + $0xf0] sm:$0xf]
    %v5143 = vld [vmem:[#allocation12 + $0xf4] sm:$0xf]
    %v5144 = vld [vmem:[#allocation12 + $0xf8] sm:$0xf]
    %v5145 = vld [vmem:[#allocation12 + $0xfc] sm:$0xf]
    %v5146 = vld [vmem:[%s12] sm:$0x1]
    %v5148 = vlaneseq
    %v5149 = vshrl.u32 %v5148, 7
    %v5150 = vsub.s32 0, %v5149
    %v5151 = vrot.slane %v5146, %v5150
    %v5217 = vunpack.c.l.b16 %v5082
    %v5218 = vunpack.c.l.b16 %v5083
    %v5219 = vunpack.c.l.b16 %v5084
    %v5220 = vunpack.c.l.b16 %v5085
    %v5221 = vunpack.c.l.b16 %v5086
    %v5222 = vunpack.c.l.b16 %v5087
    %v5223 = vunpack.c.l.b16 %v5088
    %v5224 = vunpack.c.l.b16 %v5089
    %v5225 = vunpack.c.l.b16 %v5090
    %v5226 = vunpack.c.l.b16 %v5091
    %v5227 = vunpack.c.l.b16 %v5092
    %v5228 = vunpack.c.l.b16 %v5093
    %v5229 = vunpack.c.l.b16 %v5094
    %v5230 = vunpack.c.l.b16 %v5095
    %v5231 = vunpack.c.l.b16 %v5096
    %v5232 = vunpack.c.l.b16 %v5097
    %v5233 = vunpack.c.l.b16 %v5098
    %v5234 = vunpack.c.l.b16 %v5099
    %v5235 = vunpack.c.l.b16 %v5100
    %v5236 = vunpack.c.l.b16 %v5101
    %v5237 = vunpack.c.l.b16 %v5102
    %v5238 = vunpack.c.l.b16 %v5103
    %v5239 = vunpack.c.l.b16 %v5104
    %v5240 = vunpack.c.l.b16 %v5105
    %v5241 = vunpack.c.l.b16 %v5106
    %v5242 = vunpack.c.l.b16 %v5107
    %v5243 = vunpack.c.l.b16 %v5108
    %v5244 = vunpack.c.l.b16 %v5109
    %v5245 = vunpack.c.l.b16 %v5110
    %v5246 = vunpack.c.l.b16 %v5111
    %v5247 = vunpack.c.l.b16 %v5112
    %v5248 = vunpack.c.l.b16 %v5113
    %v5249 = vunpack.c.l.b16 %v5114
    %v5250 = vunpack.c.l.b16 %v5115
    %v5251 = vunpack.c.l.b16 %v5116
    %v5252 = vunpack.c.l.b16 %v5117
    %v5253 = vunpack.c.l.b16 %v5118
    %v5254 = vunpack.c.l.b16 %v5119
    %v5255 = vunpack.c.l.b16 %v5120
    %v5256 = vunpack.c.l.b16 %v5121
    %v5257 = vunpack.c.l.b16 %v5122
    %v5258 = vunpack.c.l.b16 %v5123
    %v5259 = vunpack.c.l.b16 %v5124
    %v5260 = vunpack.c.l.b16 %v5125
    %v5261 = vunpack.c.l.b16 %v5126
    %v5262 = vunpack.c.l.b16 %v5127
    %v5263 = vunpack.c.l.b16 %v5128
    %v5264 = vunpack.c.l.b16 %v5129
    %v5265 = vunpack.c.l.b16 %v5130
    %v5266 = vunpack.c.l.b16 %v5131
    %v5267 = vunpack.c.l.b16 %v5132
    %v5268 = vunpack.c.l.b16 %v5133
    %v5269 = vunpack.c.l.b16 %v5134
    %v5270 = vunpack.c.l.b16 %v5135
    %v5271 = vunpack.c.l.b16 %v5136
    %v5272 = vunpack.c.l.b16 %v5137
    %v5273 = vunpack.c.l.b16 %v5138
    %v5274 = vunpack.c.l.b16 %v5139
    %v5275 = vunpack.c.l.b16 %v5140
    %v5276 = vunpack.c.l.b16 %v5141
    %v5277 = vunpack.c.l.b16 %v5142
    %v5278 = vunpack.c.l.b16 %v5143
    %v5279 = vunpack.c.l.b16 %v5144
    %v5280 = vunpack.c.l.b16 %v5145
    %v5281 = vpack.c.b16 %v5218, %v5217
    %v5282 = vpack.c.b16 %v5220, %v5219
    %v5283 = vpack.c.b16 %v5222, %v5221
    %v5284 = vpack.c.b16 %v5224, %v5223
    %v5285 = vpack.c.b16 %v5226, %v5225
    %v5286 = vpack.c.b16 %v5228, %v5227
    %v5287 = vpack.c.b16 %v5230, %v5229
    %v5288 = vpack.c.b16 %v5232, %v5231
    %v5289 = vpack.c.b16 %v5234, %v5233
    %v5290 = vpack.c.b16 %v5236, %v5235
    %v5291 = vpack.c.b16 %v5238, %v5237
    %v5292 = vpack.c.b16 %v5240, %v5239
    %v5293 = vpack.c.b16 %v5242, %v5241
    %v5294 = vpack.c.b16 %v5244, %v5243
    %v5295 = vpack.c.b16 %v5246, %v5245
    %v5296 = vpack.c.b16 %v5248, %v5247
    %v5297 = vpack.c.b16 %v5250, %v5249
    %v5298 = vpack.c.b16 %v5252, %v5251
    %v5299 = vpack.c.b16 %v5254, %v5253
    %v5300 = vpack.c.b16 %v5256, %v5255
    %v5301 = vpack.c.b16 %v5258, %v5257
    %v5302 = vpack.c.b16 %v5260, %v5259
    %v5303 = vpack.c.b16 %v5262, %v5261
    %v5304 = vpack.c.b16 %v5264, %v5263
    %v5305 = vpack.c.b16 %v5266, %v5265
    %v5306 = vpack.c.b16 %v5268, %v5267
    %v5307 = vpack.c.b16 %v5270, %v5269
    %v5308 = vpack.c.b16 %v5272, %v5271
    %v5309 = vpack.c.b16 %v5274, %v5273
    %v5310 = vpack.c.b16 %v5276, %v5275
    %v5311 = vpack.c.b16 %v5278, %v5277
    %v5312 = vpack.c.b16 %v5280, %v5279
    %5345 = vmatprep.subr.bf16.mxu0 0
    %5346 = vmatpush1.bf16.msra.mxu0 %v5281
    %5347 = vmatprep.subr.bf16.mxu0 0
    %5348 = vmatpush1.bf16.msra.mxu0 %v5282
    %5349 = vmatprep.subr.bf16.mxu0 0
    %5350 = vmatpush1.bf16.msra.mxu0 %v5283
    %5351 = vmatprep.subr.bf16.mxu0 0
    %5352 = vmatpush1.bf16.msra.mxu0 %v5284
    %5353 = vmatprep.subr.bf16.mxu0 0
    %5354 = vmatpush1.bf16.msra.mxu0 %v5285
    %5355 = vmatprep.subr.bf16.mxu0 0
    %5356 = vmatpush1.bf16.msra.mxu0 %v5286
    %5357 = vmatprep.subr.bf16.mxu0 0
    %5358 = vmatpush1.bf16.msra.mxu0 %v5287
    %5359 = vmatprep.subr.bf16.mxu0 0
    %5360 = vmatpush1.bf16.msra.mxu0 %v5288
    %5361 = vmatprep.subr.bf16.mxu0 0
    %5362 = vmatpush1.bf16.msra.mxu0 %v5289
    %5363 = vmatprep.subr.bf16.mxu0 0
    %5364 = vmatpush1.bf16.msra.mxu0 %v5290
    %5365 = vmatprep.subr.bf16.mxu0 0
    %5366 = vmatpush1.bf16.msra.mxu0 %v5291
    %5367 = vmatprep.subr.bf16.mxu0 0
    %5368 = vmatpush1.bf16.msra.mxu0 %v5292
    %5369 = vmatprep.subr.bf16.mxu0 0
    %5370 = vmatpush1.bf16.msra.mxu0 %v5293
    %5371 = vmatprep.subr.bf16.mxu0 0
    %5372 = vmatpush1.bf16.msra.mxu0 %v5294
    %5373 = vmatprep.subr.bf16.mxu0 0
    %5374 = vmatpush1.bf16.msra.mxu0 %v5295
    %5375 = vmatprep.subr.bf16.mxu0 0
    %5376 = vmatpush1.bf16.msra.mxu0 %v5296
    %5377 = vmatprep.mubr.bf16.mxu0 %v5079
    %5378 = vmatmul.mubr.bf16.gmra.mrb[0].mxu0 %v5078
    %v5379 = vpop.f32.mrb[0].mxu0
    %v5380 = vadd.f32 %v5151, %v5379
    %v5381 = vpop.f32.mrb[0].mxu0
    %v5382 = vpop.f32.mrb[0].mxu0
    %v5383 = vadd.f32 %v5151, %v5382
    %v5384 = vpop.f32.mrb[0].mxu0
    %5385 = vdwg.mxu0
    %5386 = vmatprep.subr.bf16.mxu0 0
    %5387 = vmatpush1.bf16.msra.mxu0 %v5297
    %5388 = vmatprep.subr.bf16.mxu0 0
    %5389 = vmatpush1.bf16.msra.mxu0 %v5298
    %5390 = vmatprep.subr.bf16.mxu0 0
    %5391 = vmatpush1.bf16.msra.mxu0 %v5299
    %5392 = vmatprep.subr.bf16.mxu0 0
    %5393 = vmatpush1.bf16.msra.mxu0 %v5300
    %5394 = vmatprep.subr.bf16.mxu0 0
    %5395 = vmatpush1.bf16.msra.mxu0 %v5301
    %5396 = vmatprep.subr.bf16.mxu0 0
    %5397 = vmatpush1.bf16.msra.mxu0 %v5302
    %5398 = vmatprep.subr.bf16.mxu0 0
    %5399 = vmatpush1.bf16.msra.mxu0 %v5303
    %5400 = vmatprep.subr.bf16.mxu0 0
    %5401 = vmatpush1.bf16.msra.mxu0 %v5304
    %5402 = vmatprep.subr.bf16.mxu0 0
    %5403 = vmatpush1.bf16.msra.mxu0 %v5305
    %5404 = vmatprep.subr.bf16.mxu0 0
    %5405 = vmatpush1.bf16.msra.mxu0 %v5306
    %5406 = vmatprep.subr.bf16.mxu0 0
    %5407 = vmatpush1.bf16.msra.mxu0 %v5307
    %5408 = vmatprep.subr.bf16.mxu0 0
    %5409 = vmatpush1.bf16.msra.mxu0 %v5308
    %5410 = vmatprep.subr.bf16.mxu0 0
    %5411 = vmatpush1.bf16.msra.mxu0 %v5309
    %5412 = vmatprep.subr.bf16.mxu0 0
    %5413 = vmatpush1.bf16.msra.mxu0 %v5310
    %5414 = vmatprep.subr.bf16.mxu0 0
    %5415 = vmatpush1.bf16.msra.mxu0 %v5311
    %5416 = vmatprep.subr.bf16.mxu0 0
    %5417 = vmatpush1.bf16.msra.mxu0 %v5312
    %5418 = vmatprep.mubr.bf16.mxu0 %v5081
    %5419 = vmatmul.mubr.bf16.gmra.mrb[0].mxu0 %v5080
    %v5420 = vpop.f32.mrb[0].mxu0
    %v5421 = vadd.f32 %v5380, %v5420
    %v5422 = vpop.f32.mrb[0].mxu0
    %v5423 = vpop.f32.mrb[0].mxu0
    %v5424 = vadd.f32 %v5383, %v5423
    %v5425 = vpop.f32.mrb[0].mxu0
    %5426 = vdwg.mxu0
    %v5427 = vadd.f32 %v4663, %v5421
    %v5428 = vadd.f32 %v4664, %v5424
    %s5429 = sld [smem:[#allocation2]]
    %v5430 = vstv %s5429
    %vm5431 = vcmp.gt.f32.partialorder %v5427, %v5430
    %vm5432 = vcmp.gt.f32.partialorder %v5428, %v5430
    %s5433 = ssub.f32 0.0, %s5429
    %v5434 = vstv %s5433
    %vm5435 = vcmp.lt.f32.partialorder %v5427, %v5434
    %vm5436 = vcmp.lt.f32.partialorder %v5428, %v5434
    %v5437 = vsel %vm5435, -1.0, 0.0
    %v5438 = vsel %vm5436, -1.0, 0.0
    %v5439 = vsel %vm5431, 1.0, %v5437
    %v5440 = vsel %vm5432, 1.0, %v5438
    %5441 = vst [vmem:[#allocation14] sm:$0xff] %v5439
    %5442 = vst [vmem:[#allocation14 + $0x8] sm:$0xff] %v5440
    // Predicated region
    $region82: #{tpu_custom_call.1} parent=1 // pred_check
      _
    $region83: #{tpu_custom_call.1} parent=1 // pred_check_branch
      %5444 = sbr.rel (0) target = $region85
    $region84: #{tpu_custom_call.1} parent=1 // pred_region
      %s5446 = ssub.s32 256, 256
      %5447 = vsyncadd [#allocation5], %s5446
      %s5448 = sshll.u32 [#allocation14], 4
      %s5449 = int_to_ptr.vmem [resolvable:$true] %s5448
      %5454 = dma.vmem_to_hbm [thread:$0]  %s5449, 256, %s14, [#allocation5], 128, 128, 8
    $region85: #{tpu_custom_call.1} parent=1 // pred_fallthru
      _
    // Predicated region
    $region86: #{tpu_custom_call.1} parent=1 // pred_check
      _
    $region87: #{tpu_custom_call.1} parent=1 // pred_check_branch
      %5456 = sbr.rel (0) target = $region89
    $region88: #{tpu_custom_call.1} parent=1 // pred_region
      %5457 = dma.done [#allocation5], 256
    $region89: #{tpu_custom_call.1} parent=1 // pred_fallthru
      _
    %5458 = vsyncpa [#allocation4], 1
    %5459 = vsyncpa [#allocation7], 1
    %5460 = vsyncpa [#allocation10], 1
    %5461 = vsyncpa [#allocation13], 1
    %5462 = vsyncpa [#allocation5], 1

</llo_original>
